<compile_context>
chip_gen: v7x
topology: tpu7x:2x2x1
jax: 0.10.0
libtpu: 0.0.40
codegen_flags: <defaults>
</compile_context>

<pallas_src>
import functools

import jax
import jax.numpy as jnp
from jax import lax
from jax.experimental import pallas as pl
from jax.experimental.pallas import tpu as pltpu


def _asyconv_kernel(xpad_ref, w_ref, b_ref, out_ref):
    # xpad_ref : (1, H+2, W+2, Cin)     zero-padded input for this batch elem
    # w_ref    : (9, Cin, Cout_p)       fused weights (BN-scaled, branches
    #                                   merged), row index = kh*3 + kw
    # b_ref    : (1, Cout_p)            fused bias (b_sq + b_ver + b_hor)
    # out_ref  : (1, H, W, Cout_p)
    H, W, cp = out_ref.shape[1], out_ref.shape[2], out_ref.shape[3]
    cin = xpad_ref.shape[3]

    xp = xpad_ref[0]  # (H+2, W+2, Cin)

    acc = jnp.zeros((H * W, cp), jnp.float32)
    # Single fused 3x3 conv: 9 shifted-window matmuls into one accumulator.
    for kh in range(3):
        for kw in range(3):
            patch = xp[kh:kh + H, kw:kw + W, :].reshape(H * W, cin)
            acc = acc + jnp.dot(patch, w_ref[kh * 3 + kw],
                                preferred_element_type=jnp.float32)

    acc = acc + b_ref[...]  # (1, Cout_p) broadcasts over H*W rows
    out_ref[0] = acc.reshape(H, W, cp).astype(out_ref.dtype)


@functools.partial(jax.jit, static_argnames=())
def asyconv_forward_nchw(x_nchw, w_sq, w_ver, w_hor, affine):
    """asyConv forward.

    x_nchw : (N, Cin, H, W)      PyTorch layout
    w_sq   : (Cout, Cin, 3, 3)   PyTorch OIHW
    w_ver  : (Cout, Cin, 3, 1)
    w_hor  : (Cout, Cin, 1, 3)
    affine : (6, Cout)           folded-BN scale/bias rows (sq, ver, hor)
    returns (N, Cout, H, W)
    """
    N, cin, H, W = x_nchw.shape
    cout = w_sq.shape[0]
    cout_p = ((cout + 127) // 128) * 128  # lane-dense output channels

    # NCHW -> NHWC and shared zero padding of (1,1) on H and W (glue).
    x = jnp.transpose(x_nchw, (0, 2, 3, 1))
    xpad = jnp.pad(x, ((0, 0), (1, 1), (1, 1), (0, 0)))

    # OIHW -> HWIO-ish layouts (glue).
    wsq = jnp.transpose(w_sq, (2, 3, 1, 0)).astype(jnp.float32)        # (3,3,Cin,Cout)
    wv = jnp.transpose(w_ver[:, :, :, 0], (2, 1, 0)).astype(jnp.float32)  # (3,Cin,Cout)
    wh = jnp.transpose(w_hor[:, :, 0, :], (2, 1, 0)).astype(jnp.float32)  # (3,Cin,Cout)

    s_sq, b_sq = affine[0], affine[1]
    s_v, b_v = affine[2], affine[3]
    s_h, b_h = affine[4], affine[5]

    # Fold the inference-mode BN scales into the weights and merge the
    # vertical (3x1, column tap kw=1) and horizontal (1x3, row tap kh=1)
    # branches into the square 3x3 weight bank.  BN is linear, so this is
    # exact up to fp32 rounding.
    wf = wsq * s_sq[None, None, None, :]
    wf = wf.at[:, 1].add(wv * s_v[None, None, :])
    wf = wf.at[1, :].add(wh * s_h[None, None, :])
    bias = (b_sq + b_v + b_h)[None, :].astype(jnp.float32)             # (1, Cout)

    # Pad output channels up to a multiple of 128 (lane-dense MXU output and
    # unmasked stores); extra channels are sliced off below.
    wf = jnp.pad(wf.reshape(9, cin, cout),
                 ((0, 0), (0, 0), (0, cout_p - cout)))                 # (9,Cin,Cout_p)
    bias = jnp.pad(bias, ((0, 0), (0, cout_p - cout)))                 # (1, Cout_p)

    out = pl.pallas_call(
        _asyconv_kernel,
        out_shape=jax.ShapeDtypeStruct((N, H, W, cout_p), jnp.float32),
        grid_spec=pltpu.PrefetchScalarGridSpec(
            num_scalar_prefetch=0,
            grid=(N,),
            in_specs=[
                pl.BlockSpec((1, H + 2, W + 2, cin), lambda n: (n, 0, 0, 0)),
                pl.BlockSpec((9, cin, cout_p), lambda n: (0, 0, 0)),
                pl.BlockSpec((1, cout_p), lambda n: (0, 0)),
            ],
            out_specs=pl.BlockSpec((1, H, W, cout_p), lambda n: (n, 0, 0, 0)),
        ),
        compiler_params=pltpu.CompilerParams(
            dimension_semantics=("parallel",),
            vmem_limit_bytes=64 * 1024 * 1024),
    )(xpad, wf, bias)

    out = out[..., :cout]                                   # drop lane padding
    return jnp.transpose(out, (0, 3, 1, 2)).astype(x_nchw.dtype)  # NCHW


def _reference_nchw(x_nchw, w_sq, w_ver, w_hor, affine):
    """Pure-JAX reference (lax conv, unfused three-branch form), NCHW."""
    dn = ("NCHW", "OIHW", "NCHW")

    def conv(x, w, pad):
        return lax.conv_general_dilated(
            x, w, window_strides=(1, 1), padding=pad, dimension_numbers=dn,
            preferred_element_type=jnp.float32)

    sq = conv(x_nchw, w_sq, ((1, 1), (1, 1)))
    vr = conv(x_nchw, w_ver, ((1, 1), (0, 0)))
    hr = conv(x_nchw, w_hor, ((0, 0), (1, 1)))

    def bn(y, scale, bias):
        return y * scale[None, :, None, None] + bias[None, :, None, None]

    return (bn(sq, affine[0], affine[1])
            + bn(vr, affine[2], affine[3])
            + bn(hr, affine[4], affine[5])).astype(x_nchw.dtype)


if __name__ == "__main__":
    # Module config: asyConv(in_channels=4, out_channels=8, kernel_size=3,
    #                        stride=1, padding=1)  ->  center offset = 0,
    # so crop layers are Identity and ver/hor paddings are (1,0)/(0,1).
    N, Cin, H, W = 2, 4, 16, 16
    Cout = 8
    eps = 1e-5

    key = jax.random.PRNGKey(0)
    ks = jax.random.split(key, 16)

    x = jax.random.normal(ks[0], (N, Cin, H, W), jnp.float32)

    w_sq = jax.random.normal(ks[1], (Cout, Cin, 3, 3), jnp.float32) * 0.1
    w_ver = jax.random.normal(ks[2], (Cout, Cin, 3, 1), jnp.float32) * 0.1
    w_hor = jax.random.normal(ks[3], (Cout, Cin, 1, 3), jnp.float32) * 0.1

    def bn_params(kg, kb, km, kv):
        gamma = jax.random.uniform(kg, (Cout,), jnp.float32, 0.5, 1.5)
        beta = jax.random.normal(kb, (Cout,), jnp.float32) * 0.1
        mean = jax.random.normal(km, (Cout,), jnp.float32) * 0.1
        var = jax.random.uniform(kv, (Cout,), jnp.float32, 0.5, 1.5)
        scale = gamma / jnp.sqrt(var + eps)
        bias = beta - mean * scale
        return scale, bias

    sq_s, sq_b = bn_params(ks[4], ks[5], ks[6], ks[7])
    v_s, v_b = bn_params(ks[8], ks[9], ks[10], ks[11])
    h_s, h_b = bn_params(ks[12], ks[13], ks[14], ks[15])

    # Folded inference-mode BatchNorm parameters, one row per scale/bias.
    affine = jnp.stack([sq_s, sq_b, v_s, v_b, h_s, h_b], axis=0)  # (6, Cout)

    out = asyconv_forward_nchw(x, w_sq, w_ver, w_hor, affine)
    out = jax.block_until_ready(out)

    ref = _reference_nchw(x, w_sq, w_ver, w_hor, affine)
    assert out.shape == (N, Cout, H, W)
    assert jnp.allclose(out, ref, rtol=1e-4, atol=1e-4), (
        float(jnp.max(jnp.abs(out - ref))))

    print("KERNEL_OK")
</pallas_src>

<mosaic_0001>
module attributes {stable_mosaic.version = 11 : i64} {
  func.func @_asyconv_kernel(%arg0: i32, %arg1: memref<1x18x18x4xf32, #tpu.memory_space<vmem>>, %arg2: memref<9x4x128xf32, #tpu.memory_space<vmem>>, %arg3: memref<1x128xf32, #tpu.memory_space<vmem>>, %arg4: memref<1x16x16x128xf32, #tpu.memory_space<vmem>>) attributes {dimension_semantics = [#tpu.dimension_semantics<parallel>], iteration_bounds = array<i64: 2>, scalar_prefetch = 0 : i64, scratch_operands = 0 : i64, tpu.core_type = #tpu.core_type<tc>, window_params = [{transform_indices = @transform_0, window_bounds = array<i64: 1, 18, 18, 4>}, {pipeline_mode = #tpu.pipeline_mode<synchronous>, transform_indices = @transform_1, window_bounds = array<i64: 9, 4, 128>}, {pipeline_mode = #tpu.pipeline_mode<synchronous>, transform_indices = @transform_2, window_bounds = array<i64: 1, 128>}, {transform_indices = @transform_3, window_bounds = array<i64: 1, 16, 16, 128>}]} {
    %c0 = arith.constant 0 : index
    %c0_0 = arith.constant 0 : index
    %c0_1 = arith.constant 0 : index
    %c0_2 = arith.constant 0 : index
    %0 = vector.load %arg1[%c0, %c0_0, %c0_1, %c0_2] : memref<1x18x18x4xf32, #tpu.memory_space<vmem>>, vector<1x18x18x4xf32>
    %1 = vector.shape_cast %0 : vector<1x18x18x4xf32> to vector<18x18x4xf32>
    %cst = arith.constant 0.000000e+00 : f32
    %2 = vector.broadcast %cst : f32 to vector<256x128xf32>
    %3 = vector.extract_strided_slice %1 {offsets = [0, 0, 0], sizes = [16, 16, 4], strides = [1, 1, 1]} : vector<18x18x4xf32> to vector<16x16x4xf32>
    %4 = vector.shape_cast %3 : vector<16x16x4xf32> to vector<256x4xf32>
    %c0_3 = arith.constant 0 : index
    %c0_4 = arith.constant 0 : index
    %c0_5 = arith.constant 0 : index
    %5 = vector.load %arg2[%c0_3, %c0_4, %c0_5] : memref<9x4x128xf32, #tpu.memory_space<vmem>>, vector<1x4x128xf32>
    %6 = vector.shape_cast %5 : vector<1x4x128xf32> to vector<4x128xf32>
    %cst_6 = arith.constant dense<0.000000e+00> : vector<256x128xf32>
    %7 = tpu.matmul %4, %6, %cst_6 {dimension_numbers = #tpu.dot_dimension_numbers<[1], [0], [0], [1], [0, 0, 1, 1], [], []>} : vector<256x4xf32>, vector<4x128xf32>, vector<256x128xf32> -> vector<256x128xf32>
    %8 = arith.addf %2, %7 : vector<256x128xf32>
    %9 = vector.extract_strided_slice %1 {offsets = [0, 1, 0], sizes = [16, 16, 4], strides = [1, 1, 1]} : vector<18x18x4xf32> to vector<16x16x4xf32>
    %10 = vector.shape_cast %9 : vector<16x16x4xf32> to vector<256x4xf32>
    %c1 = arith.constant 1 : index
    %c0_7 = arith.constant 0 : index
    %c0_8 = arith.constant 0 : index
    %11 = vector.load %arg2[%c1, %c0_7, %c0_8] : memref<9x4x128xf32, #tpu.memory_space<vmem>>, vector<1x4x128xf32>
    %12 = vector.shape_cast %11 : vector<1x4x128xf32> to vector<4x128xf32>
    %cst_9 = arith.constant dense<0.000000e+00> : vector<256x128xf32>
    %13 = tpu.matmul %10, %12, %cst_9 {dimension_numbers = #tpu.dot_dimension_numbers<[1], [0], [0], [1], [0, 0, 1, 1], [], []>} : vector<256x4xf32>, vector<4x128xf32>, vector<256x128xf32> -> vector<256x128xf32>
    %14 = arith.addf %8, %13 : vector<256x128xf32>
    %15 = vector.extract_strided_slice %1 {offsets = [0, 2, 0], sizes = [16, 16, 4], strides = [1, 1, 1]} : vector<18x18x4xf32> to vector<16x16x4xf32>
    %16 = vector.shape_cast %15 : vector<16x16x4xf32> to vector<256x4xf32>
    %c2 = arith.constant 2 : index
    %c0_10 = arith.constant 0 : index
    %c0_11 = arith.constant 0 : index
    %17 = vector.load %arg2[%c2, %c0_10, %c0_11] : memref<9x4x128xf32, #tpu.memory_space<vmem>>, vector<1x4x128xf32>
    %18 = vector.shape_cast %17 : vector<1x4x128xf32> to vector<4x128xf32>
    %cst_12 = arith.constant dense<0.000000e+00> : vector<256x128xf32>
    %19 = tpu.matmul %16, %18, %cst_12 {dimension_numbers = #tpu.dot_dimension_numbers<[1], [0], [0], [1], [0, 0, 1, 1], [], []>} : vector<256x4xf32>, vector<4x128xf32>, vector<256x128xf32> -> vector<256x128xf32>
    %20 = arith.addf %14, %19 : vector<256x128xf32>
    %21 = vector.extract_strided_slice %1 {offsets = [1, 0, 0], sizes = [16, 16, 4], strides = [1, 1, 1]} : vector<18x18x4xf32> to vector<16x16x4xf32>
    %22 = vector.shape_cast %21 : vector<16x16x4xf32> to vector<256x4xf32>
    %c3 = arith.constant 3 : index
    %c0_13 = arith.constant 0 : index
    %c0_14 = arith.constant 0 : index
    %23 = vector.load %arg2[%c3, %c0_13, %c0_14] : memref<9x4x128xf32, #tpu.memory_space<vmem>>, vector<1x4x128xf32>
    %24 = vector.shape_cast %23 : vector<1x4x128xf32> to vector<4x128xf32>
    %cst_15 = arith.constant dense<0.000000e+00> : vector<256x128xf32>
    %25 = tpu.matmul %22, %24, %cst_15 {dimension_numbers = #tpu.dot_dimension_numbers<[1], [0], [0], [1], [0, 0, 1, 1], [], []>} : vector<256x4xf32>, vector<4x128xf32>, vector<256x128xf32> -> vector<256x128xf32>
    %26 = arith.addf %20, %25 : vector<256x128xf32>
    %27 = vector.extract_strided_slice %1 {offsets = [1, 1, 0], sizes = [16, 16, 4], strides = [1, 1, 1]} : vector<18x18x4xf32> to vector<16x16x4xf32>
    %28 = vector.shape_cast %27 : vector<16x16x4xf32> to vector<256x4xf32>
    %c4 = arith.constant 4 : index
    %c0_16 = arith.constant 0 : index
    %c0_17 = arith.constant 0 : index
    %29 = vector.load %arg2[%c4, %c0_16, %c0_17] : memref<9x4x128xf32, #tpu.memory_space<vmem>>, vector<1x4x128xf32>
    %30 = vector.shape_cast %29 : vector<1x4x128xf32> to vector<4x128xf32>
    %cst_18 = arith.constant dense<0.000000e+00> : vector<256x128xf32>
    %31 = tpu.matmul %28, %30, %cst_18 {dimension_numbers = #tpu.dot_dimension_numbers<[1], [0], [0], [1], [0, 0, 1, 1], [], []>} : vector<256x4xf32>, vector<4x128xf32>, vector<256x128xf32> -> vector<256x128xf32>
    %32 = arith.addf %26, %31 : vector<256x128xf32>
    %33 = vector.extract_strided_slice %1 {offsets = [1, 2, 0], sizes = [16, 16, 4], strides = [1, 1, 1]} : vector<18x18x4xf32> to vector<16x16x4xf32>
    %34 = vector.shape_cast %33 : vector<16x16x4xf32> to vector<256x4xf32>
    %c5 = arith.constant 5 : index
    %c0_19 = arith.constant 0 : index
    %c0_20 = arith.constant 0 : index
    %35 = vector.load %arg2[%c5, %c0_19, %c0_20] : memref<9x4x128xf32, #tpu.memory_space<vmem>>, vector<1x4x128xf32>
    %36 = vector.shape_cast %35 : vector<1x4x128xf32> to vector<4x128xf32>
    %cst_21 = arith.constant dense<0.000000e+00> : vector<256x128xf32>
    %37 = tpu.matmul %34, %36, %cst_21 {dimension_numbers = #tpu.dot_dimension_numbers<[1], [0], [0], [1], [0, 0, 1, 1], [], []>} : vector<256x4xf32>, vector<4x128xf32>, vector<256x128xf32> -> vector<256x128xf32>
    %38 = arith.addf %32, %37 : vector<256x128xf32>
    %39 = vector.extract_strided_slice %1 {offsets = [2, 0, 0], sizes = [16, 16, 4], strides = [1, 1, 1]} : vector<18x18x4xf32> to vector<16x16x4xf32>
    %40 = vector.shape_cast %39 : vector<16x16x4xf32> to vector<256x4xf32>
    %c6 = arith.constant 6 : index
    %c0_22 = arith.constant 0 : index
    %c0_23 = arith.constant 0 : index
    %41 = vector.load %arg2[%c6, %c0_22, %c0_23] : memref<9x4x128xf32, #tpu.memory_space<vmem>>, vector<1x4x128xf32>
    %42 = vector.shape_cast %41 : vector<1x4x128xf32> to vector<4x128xf32>
    %cst_24 = arith.constant dense<0.000000e+00> : vector<256x128xf32>
    %43 = tpu.matmul %40, %42, %cst_24 {dimension_numbers = #tpu.dot_dimension_numbers<[1], [0], [0], [1], [0, 0, 1, 1], [], []>} : vector<256x4xf32>, vector<4x128xf32>, vector<256x128xf32> -> vector<256x128xf32>
    %44 = arith.addf %38, %43 : vector<256x128xf32>
    %45 = vector.extract_strided_slice %1 {offsets = [2, 1, 0], sizes = [16, 16, 4], strides = [1, 1, 1]} : vector<18x18x4xf32> to vector<16x16x4xf32>
    %46 = vector.shape_cast %45 : vector<16x16x4xf32> to vector<256x4xf32>
    %c7 = arith.constant 7 : index
    %c0_25 = arith.constant 0 : index
    %c0_26 = arith.constant 0 : index
    %47 = vector.load %arg2[%c7, %c0_25, %c0_26] : memref<9x4x128xf32, #tpu.memory_space<vmem>>, vector<1x4x128xf32>
    %48 = vector.shape_cast %47 : vector<1x4x128xf32> to vector<4x128xf32>
    %cst_27 = arith.constant dense<0.000000e+00> : vector<256x128xf32>
    %49 = tpu.matmul %46, %48, %cst_27 {dimension_numbers = #tpu.dot_dimension_numbers<[1], [0], [0], [1], [0, 0, 1, 1], [], []>} : vector<256x4xf32>, vector<4x128xf32>, vector<256x128xf32> -> vector<256x128xf32>
    %50 = arith.addf %44, %49 : vector<256x128xf32>
    %51 = vector.extract_strided_slice %1 {offsets = [2, 2, 0], sizes = [16, 16, 4], strides = [1, 1, 1]} : vector<18x18x4xf32> to vector<16x16x4xf32>
    %52 = vector.shape_cast %51 : vector<16x16x4xf32> to vector<256x4xf32>
    %c8 = arith.constant 8 : index
    %c0_28 = arith.constant 0 : index
    %c0_29 = arith.constant 0 : index
    %53 = vector.load %arg2[%c8, %c0_28, %c0_29] : memref<9x4x128xf32, #tpu.memory_space<vmem>>, vector<1x4x128xf32>
    %54 = vector.shape_cast %53 : vector<1x4x128xf32> to vector<4x128xf32>
    %cst_30 = arith.constant dense<0.000000e+00> : vector<256x128xf32>
    %55 = tpu.matmul %52, %54, %cst_30 {dimension_numbers = #tpu.dot_dimension_numbers<[1], [0], [0], [1], [0, 0, 1, 1], [], []>} : vector<256x4xf32>, vector<4x128xf32>, vector<256x128xf32> -> vector<256x128xf32>
    %56 = arith.addf %50, %55 : vector<256x128xf32>
    %c0_31 = arith.constant 0 : index
    %c0_32 = arith.constant 0 : index
    %57 = vector.load %arg3[%c0_31, %c0_32] : memref<1x128xf32, #tpu.memory_space<vmem>>, vector<1x128xf32>
    %58 = vector.broadcast %57 : vector<1x128xf32> to vector<256x128xf32>
    %59 = arith.addf %56, %58 : vector<256x128xf32>
    %60 = vector.shape_cast %59 : vector<256x128xf32> to vector<16x16x128xf32>
    %c0_33 = arith.constant 0 : index
    %c0_34 = arith.constant 0 : index
    %c0_35 = arith.constant 0 : index
    %c0_36 = arith.constant 0 : index
    %61 = vector.load %arg4[%c0_33, %c0_34, %c0_35, %c0_36] : memref<1x16x16x128xf32, #tpu.memory_space<vmem>>, vector<1x16x16x128xf32>
    %62 = vector.shape_cast %61 : vector<1x16x16x128xf32> to vector<16x16x128xf32>
    %63 = vector.shape_cast %60 : vector<16x16x128xf32> to vector<1x16x16x128xf32>
    tpu.vector_store %arg4[%c0_33, %c0_34, %c0_35, %c0_36], %63 {strides = array<i32>} : memref<1x16x16x128xf32, #tpu.memory_space<vmem>>, vector<1x16x16x128xf32>,
    return
  }
  func.func @transform_0(%arg0: i32) -> (i32, i32, i32, i32) {
    %c0_i32 = arith.constant 0 : i32
    %c0_i32_0 = arith.constant 0 : i32
    %c0_i32_1 = arith.constant 0 : i32
    %c0_i32_2 = arith.constant 0 : i32
    return %arg0, %c0_i32, %c0_i32_0, %c0_i32_1 : i32, i32, i32, i32
  }
  func.func @transform_1(%arg0: i32) -> (i32, i32, i32) {
    %c0_i32 = arith.constant 0 : i32
    %c0_i32_0 = arith.constant 0 : i32
    %c0_i32_1 = arith.constant 0 : i32
    %c0_i32_2 = arith.constant 0 : i32
    return %c0_i32, %c0_i32_0, %c0_i32_1 : i32, i32, i32
  }
  func.func @transform_2(%arg0: i32) -> (i32, i32) {
    %c0_i32 = arith.constant 0 : i32
    %c0_i32_0 = arith.constant 0 : i32
    %c0_i32_1 = arith.constant 0 : i32
    return %c0_i32, %c0_i32_0 : i32, i32
  }
  func.func @transform_3(%arg0: i32) -> (i32, i32, i32, i32) {
    %c0_i32 = arith.constant 0 : i32
    %c0_i32_0 = arith.constant 0 : i32
    %c0_i32_1 = arith.constant 0 : i32
    %c0_i32_2 = arith.constant 0 : i32
    return %arg0, %c0_i32, %c0_i32_0, %c0_i32_1 : i32, i32, i32, i32
  }
}

</mosaic_0001>

<llo_original>
// kernel: asyconv_forward_nchw.1
$region0: #{asyconv_forward_nchw.1}
  #allocation0 [shape = 'u32[]', space=smem, size = 0x4, offset = 0x4, fixed_abs, tag = 'smem constant byte address 0x4 - core index']
  #allocation1 [shape = 'u32[144,128]{1,0:T(1,128)}', space=vmem, size = 0x12000, scoped, tag = 'internal scratch']
  %s0 = inlined_call_operand.hbm [shape: f32[2,18,18,4], index: 0, kind: input, shape index: {}]
  %s1 = inlined_call_operand.hbm [shape: f32[9,4,128], index: 1, kind: input, shape index: {}]
  %s2 = inlined_call_operand.hbm [shape: f32[1,128], index: 2, kind: input, shape index: {}]
  %s3 = inlined_call_operand.hbm [shape: f32[2,16,16,128], index: 3, kind: output, shape index: {}]
  %s4 = sld [smem:[#allocation0]]
  $region57: #{asyconv_forward_nchw.1} parent=0
    _
  %s6 = ssub.s32 1, %s4
  %s7 = scalar_select 0, %s6, %s4
  $region1: #{asyconv_forward_nchw.1} parent=0
    #allocation2 [shape = 'u8[442368]{0}', space=vmem, size = 0x6c000, scoped, tag = 'input window, operand 0']
    #allocation3 [shape = 's32[2]{0}', space=sflag, size = 0x8, scoped, tag = 'scoped memory for asyconv_forward_nchw.1']
    #allocation4 [shape = 's32[2]{0}', space=sflag, size = 0x8, scoped, tag = 'scoped memory for asyconv_forward_nchw.1']
    #allocation5 [shape = 'u8[18432]{0}', space=vmem, size = 0x4800, scoped, tag = 'input window, operand 1, single buffered']
    #allocation6 [shape = 's32[1]{0}', space=sflag, size = 0x4, scoped, tag = 'scoped memory for asyconv_forward_nchw.1']
    #allocation7 [shape = 'u8[512]{0}', space=vmem, size = 0x400, scoped, tag = 'input window, operand 2, single buffered']
    #allocation8 [shape = 'u8[262144]{0}', space=vmem, size = 0x40000, scoped, tag = 'output window, operand 0']
    %8 = vsyncpa [#allocation3], 0
    %s9 = scalar_lea.sflag [#allocation3], 1
    %10 = vsyncpa %s9, 0
    %11 = vsyncpa [#allocation6], 0
    %12 = vsyncpa [#allocation4], 0
    %s13 = scalar_lea.sflag [#allocation4], 1
    %14 = vsyncpa %s13, 0
    loop: start=0, step=1, limit=4
    $region2: #{asyconv_forward_nchw.1} parent=1 // loop_pre_header
      _
    $region3: #{asyconv_forward_nchw.1} parent=1 // loop_header
      %s16 = sphi 0, %s20
      %p17 = scmp.ge.s32.totalorder %s16, 4
      %s26 = sphi 0, %s28
      %s29 = sphi 0, %s26
      %s30 = sphi 0, %s29
      %s46 = sphi 0, %s30
      %s50 = sphi 0, %s50
      %s52 = sphi 0, %s50
      %s53 = sphi 0, %s52
      %s67 = sphi 0, %s53
      %s71 = sphi 0, %s71
      %s73 = sphi 0, %s71
      %s74 = sphi 0, %s73
      %s88 = sphi 0, %s74
      %s94 = sphi 0, %s96
      %s97 = sphi 0, %s94
      %s98 = sphi 0, %s97
      %s114 = sphi 0, %s98
    $region4: #{asyconv_forward_nchw.1} parent=1 // loop_header_branch
      %19 = sbr.rel (%p17) target = $region8
    $region5: #{asyconv_forward_nchw.1} parent=1 // loop_body
      %s21 = ssub.s32 %s16, 1
      %s22 = ssub.s32 %s16, 2
      %s23 = sadd.s32 %s16, 1
      %s24 = ssub.s32 %s16, %s23
      %p25 = scmp.eq.s32.totalorder %s24, 0
      %s27 = sadd.s32 %s26, 1
      %s28 = scalar_select %p25, %s26, %s27
      %p31 = pneg %p25
      %p32 = scmp.eq.s32.totalorder %s16, 1
      %p33 = por %p31, %p32
      %p34 = scmp.ne.s32.totalorder %s26, %s29
      %p35 = scmp.eq.s32.totalorder %s16, 0
      %p36 = por %p34, %p35
      %p37 = scmp.ne.s32.totalorder %s26, %s29
      %p38 = scmp.eq.s32.totalorder %s21, 1
      %p39 = por %p37, %p38
      %p40 = scmp.ne.s32.totalorder %s29, %s30
      %p41 = scmp.eq.s32.totalorder %s21, 0
      %p42 = por %p40, %p41
      %p43 = scmp.ne.s32.totalorder %s29, %s30
      %p44 = scmp.eq.s32.totalorder %s22, 1
      %p45 = por %p43, %p44
      %p47 = scmp.ne.s32.totalorder %s30, %s46
      %p48 = scmp.eq.s32.totalorder %s22, 0
      %p49 = por %p47, %p48
      %s51 = sadd.s32 %s50, 1
      %p54 = scmp.eq.s32.totalorder %s16, 1
      %p55 = scmp.ne.s32.totalorder %s50, %s52
      %p56 = scmp.eq.s32.totalorder %s16, 0
      %p57 = por %p55, %p56
      %p58 = scmp.ne.s32.totalorder %s50, %s52
      %p59 = scmp.eq.s32.totalorder %s21, 1
      %p60 = por %p58, %p59
      %p61 = scmp.ne.s32.totalorder %s52, %s53
      %p62 = scmp.eq.s32.totalorder %s21, 0
      %p63 = por %p61, %p62
      %p64 = scmp.ne.s32.totalorder %s52, %s53
      %p65 = scmp.eq.s32.totalorder %s22, 1
      %p66 = por %p64, %p65
      %p68 = scmp.ne.s32.totalorder %s53, %s67
      %p69 = scmp.eq.s32.totalorder %s22, 0
      %p70 = por %p68, %p69
      %s72 = sadd.s32 %s71, 1
      %p75 = scmp.eq.s32.totalorder %s16, 1
      %p76 = scmp.ne.s32.totalorder %s71, %s73
      %p77 = scmp.eq.s32.totalorder %s16, 0
      %p78 = por %p76, %p77
      %p79 = scmp.ne.s32.totalorder %s71, %s73
      %p80 = scmp.eq.s32.totalorder %s21, 1
      %p81 = por %p79, %p80
      %p82 = scmp.ne.s32.totalorder %s73, %s74
      %p83 = scmp.eq.s32.totalorder %s21, 0
      %p84 = por %p82, %p83
      %p85 = scmp.ne.s32.totalorder %s73, %s74
      %p86 = scmp.eq.s32.totalorder %s22, 1
      %p87 = por %p85, %p86
      %p89 = scmp.ne.s32.totalorder %s74, %s88
      %p90 = scmp.eq.s32.totalorder %s22, 0
      %p91 = por %p89, %p90
      %s92 = ssub.s32 %s16, %s23
      %p93 = scmp.eq.s32.totalorder %s92, 0
      %s95 = sadd.s32 %s94, 1
      %s96 = scalar_select %p93, %s94, %s95
      %p99 = pneg %p93
      %p100 = scmp.eq.s32.totalorder %s16, 1
      %p101 = por %p99, %p100
      %p102 = scmp.ne.s32.totalorder %s94, %s97
      %p103 = scmp.eq.s32.totalorder %s16, 0
      %p104 = por %p102, %p103
      %p105 = scmp.ne.s32.totalorder %s94, %s97
      %p106 = scmp.eq.s32.totalorder %s21, 1
      %p107 = por %p105, %p106
      %p108 = scmp.ne.s32.totalorder %s97, %s98
      %p109 = scmp.eq.s32.totalorder %s21, 0
      %p110 = por %p108, %p109
      %p111 = scmp.ne.s32.totalorder %s97, %s98
      %p112 = scmp.eq.s32.totalorder %s22, 1
      %p113 = por %p111, %p112
      %p115 = scmp.ne.s32.totalorder %s98, %s114
      %p116 = scmp.eq.s32.totalorder %s22, 0
      %p117 = por %p115, %p116
      %p118 = scmp.le.s32.totalorder 1, %s16
      %p119 = scmp.lt.s32.totalorder %s16, 3
      %p120 = pnand %p118, %p119
      %p121 = pneg %p120
      // Predicated region
      $region9: #{asyconv_forward_nchw.1} parent=5 // pred_check
        _
      $region10: #{asyconv_forward_nchw.1} parent=5 // pred_check_branch
        %123 = sbr.rel (%p120) target = $region12
      $region11: #{asyconv_forward_nchw.1} parent=5 // pred_region
        %s124 = ssub.s32 %s16, 1
        // Predicated region
        $region13: #{asyconv_forward_nchw.1} parent=11 // pred_check
          %p125 = pneg %p63
        $region14: #{asyconv_forward_nchw.1} parent=11 // pred_check_branch
          %127 = sbr.rel (%p125) target = $region16
        $region15: #{asyconv_forward_nchw.1} parent=11 // pred_region
          %s129 = ssub.s32 576, 576
          %130 = vsyncadd [#allocation6], %s129
          %s131 = sshll.u32 [#allocation5], 4
          %s132 = int_to_ptr.vmem [resolvable:$true] %s131
          %137 = dma.hbm_to_vmem [thread:$0]  %s1, 576, %s132, [#allocation6], 64, 64, 4
        $region16: #{asyconv_forward_nchw.1} parent=11 // pred_fallthru
          _
        // Predicated region
        $region17: #{asyconv_forward_nchw.1} parent=11 // pred_check
          %p138 = pneg %p84
        $region18: #{asyconv_forward_nchw.1} parent=11 // pred_check_branch
          %140 = sbr.rel (%p138) target = $region20
        $region19: #{asyconv_forward_nchw.1} parent=11 // pred_region
          %s142 = ssub.s32 16, 16
          %143 = vsyncadd [#allocation6], %s142
          %s145 = sshll.u32 [#allocation7], 4
          %s146 = int_to_ptr.vmem [resolvable:$true] %s145
          %148 = dma.hbm_to_vmem [thread:$0]  %s2, 16, %s146, [#allocation6]
        $region20: #{asyconv_forward_nchw.1} parent=11 // pred_fallthru
          _
      $region12: #{asyconv_forward_nchw.1} parent=5 // pred_fallthru
        _
      %p149 = scmp.lt.s32.totalorder %s16, 2
      // Predicated region
      $region21: #{asyconv_forward_nchw.1} parent=5 // pred_check
        %p150 = pneg %p149
      $region22: #{asyconv_forward_nchw.1} parent=5 // pred_check_branch
        %152 = sbr.rel (%p150) target = $region24
      $region23: #{asyconv_forward_nchw.1} parent=5 // pred_region
        // Predicated region
        $region25: #{asyconv_forward_nchw.1} parent=23 // pred_check
          %p153 = pneg %p36
        $region26: #{asyconv_forward_nchw.1} parent=23 // pred_check_branch
          %155 = sbr.rel (%p153) target = $region28
        $region27: #{asyconv_forward_nchw.1} parent=23 // pred_region
          %s156 = sand.u32 %s26, 1
          %s157 = scalar_lea.sflag [#allocation3], %s156
          %s158 = sand.u32 %s26, 1
          %s159 = smul.addr %s158, 432
          %s160 = scalar_lea.vmem [#allocation2], %s159
          %s162 = ssub.s32 6912, 6912
          %163 = vsyncadd %s157, %s162
          %s164 = smul.addr %s16, 54
          %s165 = smul.addr %s164, 128
          %s166 = scalar_lea.hbm %s0, %s165
          %s167 = sshll.u32 %s160, 4
          %s168 = int_to_ptr.vmem [resolvable:$true] %s167
          %173 = dma.hbm_to_vmem [thread:$0]  %s166, 6912, %s168, %s157, 128, 128, 8
        $region28: #{asyconv_forward_nchw.1} parent=23 // pred_fallthru
          _
      $region24: #{asyconv_forward_nchw.1} parent=5 // pred_fallthru
        _
      %p174 = scmp.le.s32.totalorder 1, %s16
      %p175 = scmp.lt.s32.totalorder %s16, 3
      %p176 = pnand %p174, %p175
      %p177 = pneg %p176
      // Predicated region
      $region29: #{asyconv_forward_nchw.1} parent=5 // pred_check
        _
      $region30: #{asyconv_forward_nchw.1} parent=5 // pred_check_branch
        %179 = sbr.rel (%p176) target = $region32
      $region31: #{asyconv_forward_nchw.1} parent=5 // pred_region
        %s180 = ssub.s32 %s16, 1
        %s181 = sand.u32 %s29, 1
        %s182 = scalar_lea.sflag [#allocation3], %s181
        %s183 = sand.u32 %s29, 1
        %s184 = smul.addr %s183, 432
        %s185 = scalar_lea.vmem [#allocation2], %s184
        // Predicated region
        $region33: #{asyconv_forward_nchw.1} parent=31 // pred_check
          %p186 = pneg %p42
        $region34: #{asyconv_forward_nchw.1} parent=31 // pred_check_branch
          %188 = sbr.rel (%p186) target = $region36
        $region35: #{asyconv_forward_nchw.1} parent=31 // pred_region
          %189 = dma.done %s182, 6912
        $region36: #{asyconv_forward_nchw.1} parent=31 // pred_fallthru
          _
        // Predicated region
        $region37: #{asyconv_forward_nchw.1} parent=31 // pred_check
          %p190 = pneg %p63
        $region38: #{asyconv_forward_nchw.1} parent=31 // pred_check_branch
          %192 = sbr.rel (%p190) target = $region40
        $region39: #{asyconv_forward_nchw.1} parent=31 // pred_region
          %193 = dma.done [#allocation6], 576
        $region40: #{asyconv_forward_nchw.1} parent=31 // pred_fallthru
          _
        // Predicated region
        $region41: #{asyconv_forward_nchw.1} parent=31 // pred_check
          %p194 = pneg %p84
        $region42: #{asyconv_forward_nchw.1} parent=31 // pred_check_branch
          %196 = sbr.rel (%p194) target = $region44
        $region43: #{asyconv_forward_nchw.1} parent=31 // pred_region
          %197 = dma.done [#allocation6], 16
        $region44: #{asyconv_forward_nchw.1} parent=31 // pred_fallthru
          _
        %s198 = sand.u32 %s29, 1
        %s199 = scalar_lea.sflag [#allocation3], %s198
        %s200 = sand.u32 %s29, 1
        %s201 = smul.addr %s200, 432
        %s202 = scalar_lea.vmem [#allocation2], %s201
        %p203 = pneg %p42
        %p204 = pneg %p39
        %p205 = pneg %p63
        %p206 = pneg %p60
        %p207 = pneg %p84
        %p208 = pneg %p81
        %p209 = pneg %p110
        %p210 = pneg %p107
        %s211 = sand.u32 %s97, 1
        %s212 = scalar_lea.sflag [#allocation4], %s211
        %s213 = sand.u32 %s97, 1
        %s214 = smul.addr %s213, 256
        %s215 = scalar_lea.vmem [#allocation8], %s214
        %v216 = vld [vmem:[%s185] sm:$0xff]
        %v217 = vld [vmem:[%s185 + $0x8] sm:$0xff]
        %v218 = vld [vmem:[%s185 + $0x10] sm:$0x3]
        %v219 = vld [vmem:[%s185 + $0x18] sm:$0xff]
        %v220 = vld [vmem:[%s185 + $0x20] sm:$0xff]
        %v221 = vld [vmem:[%s185 + $0x28] sm:$0x3]
        %v222 = vld [vmem:[%s185 + $0x30] sm:$0xff]
        %v223 = vld [vmem:[%s185 + $0x38] sm:$0xff]
        %v224 = vld [vmem:[%s185 + $0x40] sm:$0x3]
        %v225 = vld [vmem:[%s185 + $0x48] sm:$0xff]
        %v226 = vld [vmem:[%s185 + $0x50] sm:$0xff]
        %v227 = vld [vmem:[%s185 + $0x58] sm:$0x3]
        %v228 = vld [vmem:[%s185 + $0x60] sm:$0xff]
        %v229 = vld [vmem:[%s185 + $0x68] sm:$0xff]
        %v230 = vld [vmem:[%s185 + $0x70] sm:$0x3]
        %v231 = vld [vmem:[%s185 + $0x78] sm:$0xff]
        %v232 = vld [vmem:[%s185 + $0x80] sm:$0xff]
        %v233 = vld [vmem:[%s185 + $0x88] sm:$0x3]
        %v234 = vld [vmem:[%s185 + $0x90] sm:$0xff]
        %v235 = vld [vmem:[%s185 + $0x98] sm:$0xff]
        %v236 = vld [vmem:[%s185 + $0xa0] sm:$0x3]
        %v237 = vld [vmem:[%s185 + $0xa8] sm:$0xff]
        %v238 = vld [vmem:[%s185 + $0xb0] sm:$0xff]
        %v239 = vld [vmem:[%s185 + $0xb8] sm:$0x3]
        %v240 = vld [vmem:[%s185 + $0xc0] sm:$0xff]
        %v241 = vld [vmem:[%s185 + $0xc8] sm:$0xff]
        %v242 = vld [vmem:[%s185 + $0xd0] sm:$0x3]
        %v243 = vld [vmem:[%s185 + $0xd8] sm:$0xff]
        %v244 = vld [vmem:[%s185 + $0xe0] sm:$0xff]
        %v245 = vld [vmem:[%s185 + $0xe8] sm:$0x3]
        %v246 = vld [vmem:[%s185 + $0xf0] sm:$0xff]
        %v247 = vld [vmem:[%s185 + $0xf8] sm:$0xff]
        %v248 = vld [vmem:[%s185 + $0x100] sm:$0x3]
        %v249 = vld [vmem:[%s185 + $0x108] sm:$0xff]
        %v250 = vld [vmem:[%s185 + $0x110] sm:$0xff]
        %v251 = vld [vmem:[%s185 + $0x118] sm:$0x3]
        %v252 = vld [vmem:[%s185 + $0x120] sm:$0xff]
        %v253 = vld [vmem:[%s185 + $0x128] sm:$0xff]
        %v254 = vld [vmem:[%s185 + $0x130] sm:$0x3]
        %v255 = vld [vmem:[%s185 + $0x138] sm:$0xff]
        %v256 = vld [vmem:[%s185 + $0x140] sm:$0xff]
        %v257 = vld [vmem:[%s185 + $0x148] sm:$0x3]
        %v258 = vld [vmem:[%s185 + $0x150] sm:$0xff]
        %v259 = vld [vmem:[%s185 + $0x158] sm:$0xff]
        %v260 = vld [vmem:[%s185 + $0x160] sm:$0x3]
        %v261 = vld [vmem:[%s185 + $0x168] sm:$0xff]
        %v262 = vld [vmem:[%s185 + $0x170] sm:$0xff]
        %v263 = vld [vmem:[%s185 + $0x178] sm:$0x3]
        %v264 = vld [vmem:[%s185 + $0x180] sm:$0xff]
        %v265 = vld [vmem:[%s185 + $0x188] sm:$0xff]
        %v266 = vld [vmem:[%s185 + $0x190] sm:$0x3]
        %v267 = vld [vmem:[%s185 + $0x198] sm:$0xff]
        %v268 = vld [vmem:[%s185 + $0x1a0] sm:$0xff]
        %v269 = vld [vmem:[%s185 + $0x1a8] sm:$0x3]
        %v270 = vld [vmem:[#allocation5] sm:$0xf]
        %vm319 = vcmask 1046528
        %v320 = vrot.slane %v216, 1
        %v321 = vrot.slane %v217, 1
        %v322 = vsel %vm319, %v320, %v321
        %v323 = vrot.slane %v218, 1
        %v324 = vsel %vm319, %v321, %v323
        %v325 = vrot.slane %v219, 1
        %v326 = vrot.slane %v220, 1
        %v327 = vsel %vm319, %v325, %v326
        %v328 = vrot.slane %v221, 1
        %v329 = vsel %vm319, %v326, %v328
        %v330 = vrot.slane %v222, 1
        %v331 = vrot.slane %v223, 1
        %v332 = vsel %vm319, %v330, %v331
        %v333 = vrot.slane %v224, 1
        %v334 = vsel %vm319, %v331, %v333
        %v335 = vrot.slane %v225, 1
        %v336 = vrot.slane %v226, 1
        %v337 = vsel %vm319, %v335, %v336
        %v338 = vrot.slane %v227, 1
        %v339 = vsel %vm319, %v336, %v338
        %v340 = vrot.slane %v228, 1
        %v341 = vrot.slane %v229, 1
        %v342 = vsel %vm319, %v340, %v341
        %v343 = vrot.slane %v230, 1
        %v344 = vsel %vm319, %v341, %v343
        %v345 = vrot.slane %v231, 1
        %v346 = vrot.slane %v232, 1
        %v347 = vsel %vm319, %v345, %v346
        %v348 = vrot.slane %v233, 1
        %v349 = vsel %vm319, %v346, %v348
        %v350 = vrot.slane %v234, 1
        %v351 = vrot.slane %v235, 1
        %v352 = vsel %vm319, %v350, %v351
        %v353 = vrot.slane %v236, 1
        %v354 = vsel %vm319, %v351, %v353
        %v355 = vrot.slane %v237, 1
        %v356 = vrot.slane %v238, 1
        %v357 = vsel %vm319, %v355, %v356
        %v358 = vrot.slane %v239, 1
        %v359 = vsel %vm319, %v356, %v358
        %v360 = vrot.slane %v240, 1
        %v361 = vrot.slane %v241, 1
        %v362 = vsel %vm319, %v360, %v361
        %v363 = vrot.slane %v242, 1
        %v364 = vsel %vm319, %v361, %v363
        %v365 = vrot.slane %v243, 1
        %v366 = vrot.slane %v244, 1
        %v367 = vsel %vm319, %v365, %v366
        %v368 = vrot.slane %v245, 1
        %v369 = vsel %vm319, %v366, %v368
        %v370 = vrot.slane %v246, 1
        %v371 = vrot.slane %v247, 1
        %v372 = vsel %vm319, %v370, %v371
        %v373 = vrot.slane %v248, 1
        %v374 = vsel %vm319, %v371, %v373
        %v375 = vrot.slane %v249, 1
        %v376 = vrot.slane %v250, 1
        %v377 = vsel %vm319, %v375, %v376
        %v378 = vrot.slane %v251, 1
        %v379 = vsel %vm319, %v376, %v378
        %v380 = vrot.slane %v252, 1
        %v381 = vrot.slane %v253, 1
        %v382 = vsel %vm319, %v380, %v381
        %v383 = vrot.slane %v254, 1
        %v384 = vsel %vm319, %v381, %v383
        %v385 = vrot.slane %v255, 1
        %v386 = vrot.slane %v256, 1
        %v387 = vsel %vm319, %v385, %v386
        %v388 = vrot.slane %v257, 1
        %v389 = vsel %vm319, %v386, %v388
        %v390 = vrot.slane %v258, 1
        %v391 = vrot.slane %v259, 1
        %v392 = vsel %vm319, %v390, %v391
        %v393 = vrot.slane %v260, 1
        %v394 = vsel %vm319, %v391, %v393
        %v395 = vrot.slane %v261, 1
        %v396 = vrot.slane %v262, 1
        %v397 = vsel %vm319, %v395, %v396
        %v398 = vrot.slane %v263, 1
        %v399 = vsel %vm319, %v396, %v398
        %s400 = scalar_lea.vmem [#allocation5], 4
        %v401 = vld [vmem:[%s400] sm:$0xf]
        %vm402 = vcmask 31744
        %v403 = vsel %vm402, %v322, 0
        %v405 = vsel %vm402, %v324, 0
        %v407 = vsel %vm402, %v327, 0
        %v409 = vsel %vm402, %v329, 0
        %v411 = vsel %vm402, %v332, 0
        %v413 = vsel %vm402, %v334, 0
        %v415 = vsel %vm402, %v337, 0
        %v417 = vsel %vm402, %v339, 0
        %v419 = vsel %vm402, %v342, 0
        %v421 = vsel %vm402, %v344, 0
        %v423 = vsel %vm402, %v347, 0
        %v425 = vsel %vm402, %v349, 0
        %v427 = vsel %vm402, %v352, 0
        %v429 = vsel %vm402, %v354, 0
        %v431 = vsel %vm402, %v357, 0
        %v433 = vsel %vm402, %v359, 0
        %v435 = vsel %vm402, %v362, 0
        %v437 = vsel %vm402, %v364, 0
        %v439 = vsel %vm402, %v367, 0
        %v441 = vsel %vm402, %v369, 0
        %v443 = vsel %vm402, %v372, 0
        %v445 = vsel %vm402, %v374, 0
        %v447 = vsel %vm402, %v377, 0
        %v449 = vsel %vm402, %v379, 0
        %v451 = vsel %vm402, %v382, 0
        %v453 = vsel %vm402, %v384, 0
        %v455 = vsel %vm402, %v387, 0
        %v457 = vsel %vm402, %v389, 0
        %v459 = vsel %vm402, %v392, 0
        %v461 = vsel %vm402, %v394, 0
        %v463 = vsel %vm402, %v397, 0
        %v465 = vsel %vm402, %v399, 0
        %vm467 = vcmask 1043456
        %v469 = vsel %vm467, %v401, 0
        %471 = vmatprep.subr.mxu0 0.0
        %472 = vmatpush1.msra.mxu0 %v469
        %473 = vmatprep.subr.mxu0 0.0
        %474 = vmatpush1.msra.mxu0 0.0
        %475 = vmatprep.subr.mxu0 0.0
        %476 = vmatpush1.msra.mxu0 0.0
        %477 = vmatprep.subr.mxu0 0.0
        %478 = vmatpush1.msra.mxu0 0.0
        %479 = vmatprep.subr.mxu0 0.0
        %480 = vmatpush1.msra.mxu0 0.0
        %481 = vmatprep.subr.mxu0 0.0
        %482 = vmatpush1.msra.mxu0 0.0
        %483 = vmatprep.subr.mxu0 0.0
        %484 = vmatpush1.msra.mxu0 0.0
        %485 = vmatprep.subr.mxu0 0.0
        %486 = vmatpush1.msra.mxu0 0.0
        %487 = vmatprep.subr.mxu0 0.0
        %488 = vmatpush1.msra.mxu0 0.0
        %489 = vmatprep.subr.mxu0 0.0
        %490 = vmatpush1.msra.mxu0 0.0
        %491 = vmatprep.subr.mxu0 0.0
        %492 = vmatpush1.msra.mxu0 0.0
        %493 = vmatprep.subr.mxu0 0.0
        %494 = vmatpush1.msra.mxu0 0.0
        %495 = vmatprep.subr.mxu0 0.0
        %496 = vmatpush1.msra.mxu0 0.0
        %497 = vmatprep.subr.mxu0 0.0
        %498 = vmatpush1.msra.mxu0 0.0
        %499 = vmatprep.subr.mxu0 0.0
        %500 = vmatpush1.msra.mxu0 0.0
        %501 = vmatprep.subr.mxu0 0.0
        %502 = vmatpush1.msra.mxu0 0.0
        %503 = vmatprep.subr.mxu0 0.0
        %504 = vmatpush1.msra.mxu0 0.0
        %505 = vmatprep.subr.mxu0 0.0
        %506 = vmatpush1.msra.mxu0 0.0
        %507 = vmatprep.subr.mxu0 0.0
        %508 = vmatpush1.msra.mxu0 0.0
        %509 = vmatprep.subr.mxu0 0.0
        %510 = vmatpush1.msra.mxu0 0.0
        %511 = vmatprep.subr.mxu0 0.0
        %512 = vmatpush1.msra.mxu0 0.0
        %513 = vmatprep.subr.mxu0 0.0
        %514 = vmatpush1.msra.mxu0 0.0
        %515 = vmatprep.subr.mxu0 0.0
        %516 = vmatpush1.msra.mxu0 0.0
        %517 = vmatprep.subr.mxu0 0.0
        %518 = vmatpush1.msra.mxu0 0.0
        %519 = vmatprep.subr.mxu0 0.0
        %520 = vmatpush1.msra.mxu0 0.0
        %521 = vmatprep.subr.mxu0 0.0
        %522 = vmatpush1.msra.mxu0 0.0
        %523 = vmatprep.subr.mxu0 0.0
        %524 = vmatpush1.msra.mxu0 0.0
        %525 = vmatprep.subr.mxu0 0.0
        %526 = vmatpush1.msra.mxu0 0.0
        %527 = vmatprep.subr.mxu0 0.0
        %528 = vmatpush1.msra.mxu0 0.0
        %529 = vmatprep.subr.mxu0 0.0
        %530 = vmatpush1.msra.mxu0 0.0
        %531 = vmatprep.subr.mxu0 0.0
        %532 = vmatpush1.msra.mxu0 0.0
        %533 = vmatprep.subr.mxu0 0.0
        %534 = vmatpush1.msra.mxu0 0.0
        %535 = vmatprep.mubr.f32.mxu0 0.0
        %536 = vmatmul.mubr.f32.gmra.mrb[0].mxu0 %v403
        %v537 = vpop.f32.mrb[0].mxu0
        %v538 = vadd.f32 0.0, %v537
        %v539 = vpop.f32.mrb[0].mxu0
        %540 = vmatprep.mubr.f32.mxu0 0.0
        %541 = vmatmul.mubr.f32.gmra.mrb[0].mxu0 %v405
        %v542 = vpop.f32.mrb[0].mxu0
        %v543 = vadd.f32 0.0, %v542
        %v544 = vpop.f32.mrb[0].mxu0
        %545 = vmatprep.mubr.f32.mxu0 0.0
        %546 = vmatmul.mubr.f32.gmra.mrb[0].mxu0 %v407
        %v547 = vpop.f32.mrb[0].mxu0
        %v548 = vadd.f32 0.0, %v547
        %v549 = vpop.f32.mrb[0].mxu0
        %550 = vmatprep.mubr.f32.mxu0 0.0
        %551 = vmatmul.mubr.f32.gmra.mrb[0].mxu0 %v409
        %v552 = vpop.f32.mrb[0].mxu0
        %v553 = vadd.f32 0.0, %v552
        %v554 = vpop.f32.mrb[0].mxu0
        %555 = vmatprep.mubr.f32.mxu0 0.0
        %556 = vmatmul.mubr.f32.gmra.mrb[0].mxu0 %v411
        %v557 = vpop.f32.mrb[0].mxu0
        %v558 = vadd.f32 0.0, %v557
        %v559 = vpop.f32.mrb[0].mxu0
        %560 = vmatprep.mubr.f32.mxu0 0.0
        %561 = vmatmul.mubr.f32.gmra.mrb[0].mxu0 %v413
        %v562 = vpop.f32.mrb[0].mxu0
        %v563 = vadd.f32 0.0, %v562
        %v564 = vpop.f32.mrb[0].mxu0
        %565 = vmatprep.mubr.f32.mxu0 0.0
        %566 = vmatmul.mubr.f32.gmra.mrb[0].mxu0 %v415
        %v567 = vpop.f32.mrb[0].mxu0
        %v568 = vadd.f32 0.0, %v567
        %v569 = vpop.f32.mrb[0].mxu0
        %570 = vmatprep.mubr.f32.mxu0 0.0
        %571 = vmatmul.mubr.f32.gmra.mrb[0].mxu0 %v417
        %v572 = vpop.f32.mrb[0].mxu0
        %v573 = vadd.f32 0.0, %v572
        %v574 = vpop.f32.mrb[0].mxu0
        %575 = vmatprep.mubr.f32.mxu0 0.0
        %576 = vmatmul.mubr.f32.gmra.mrb[0].mxu0 %v419
        %v577 = vpop.f32.mrb[0].mxu0
        %v578 = vadd.f32 0.0, %v577
        %v579 = vpop.f32.mrb[0].mxu0
        %580 = vmatprep.mubr.f32.mxu0 0.0
        %581 = vmatmul.mubr.f32.gmra.mrb[0].mxu0 %v421
        %v582 = vpop.f32.mrb[0].mxu0
        %v583 = vadd.f32 0.0, %v582
        %v584 = vpop.f32.mrb[0].mxu0
        %585 = vmatprep.mubr.f32.mxu0 0.0
        %586 = vmatmul.mubr.f32.gmra.mrb[0].mxu0 %v423
        %v587 = vpop.f32.mrb[0].mxu0
        %v588 = vadd.f32 0.0, %v587
        %v589 = vpop.f32.mrb[0].mxu0
        %590 = vmatprep.mubr.f32.mxu0 0.0
        %591 = vmatmul.mubr.f32.gmra.mrb[0].mxu0 %v425
        %v592 = vpop.f32.mrb[0].mxu0
        %v593 = vadd.f32 0.0, %v592
        %v594 = vpop.f32.mrb[0].mxu0
        %595 = vmatprep.mubr.f32.mxu0 0.0
        %596 = vmatmul.mubr.f32.gmra.mrb[0].mxu0 %v427
        %v597 = vpop.f32.mrb[0].mxu0
        %v598 = vadd.f32 0.0, %v597
        %v599 = vpop.f32.mrb[0].mxu0
        %600 = vmatprep.mubr.f32.mxu0 0.0
        %601 = vmatmul.mubr.f32.gmra.mrb[0].mxu0 %v429
        %v602 = vpop.f32.mrb[0].mxu0
        %v603 = vadd.f32 0.0, %v602
        %v604 = vpop.f32.mrb[0].mxu0
        %605 = vmatprep.mubr.f32.mxu0 0.0
        %606 = vmatmul.mubr.f32.gmra.mrb[0].mxu0 %v431
        %v607 = vpop.f32.mrb[0].mxu0
        %v608 = vadd.f32 0.0, %v607
        %v609 = vpop.f32.mrb[0].mxu0
        %610 = vmatprep.mubr.f32.mxu0 0.0
        %611 = vmatmul.mubr.f32.gmra.mrb[0].mxu0 %v433
        %v612 = vpop.f32.mrb[0].mxu0
        %v613 = vadd.f32 0.0, %v612
        %v614 = vpop.f32.mrb[0].mxu0
        %615 = vmatprep.mubr.f32.mxu0 0.0
        %616 = vmatmul.mubr.f32.gmra.mrb[0].mxu0 %v435
        %v617 = vpop.f32.mrb[0].mxu0
        %v618 = vadd.f32 0.0, %v617
        %v619 = vpop.f32.mrb[0].mxu0
        %620 = vmatprep.mubr.f32.mxu0 0.0
        %621 = vmatmul.mubr.f32.gmra.mrb[0].mxu0 %v437
        %v622 = vpop.f32.mrb[0].mxu0
        %v623 = vadd.f32 0.0, %v622
        %v624 = vpop.f32.mrb[0].mxu0
        %625 = vmatprep.mubr.f32.mxu0 0.0
        %626 = vmatmul.mubr.f32.gmra.mrb[0].mxu0 %v439
        %v627 = vpop.f32.mrb[0].mxu0
        %v628 = vadd.f32 0.0, %v627
        %v629 = vpop.f32.mrb[0].mxu0
        %630 = vmatprep.mubr.f32.mxu0 0.0
        %631 = vmatmul.mubr.f32.gmra.mrb[0].mxu0 %v441
        %v632 = vpop.f32.mrb[0].mxu0
        %v633 = vadd.f32 0.0, %v632
        %v634 = vpop.f32.mrb[0].mxu0
        %635 = vmatprep.mubr.f32.mxu0 0.0
        %636 = vmatmul.mubr.f32.gmra.mrb[0].mxu0 %v443
        %v637 = vpop.f32.mrb[0].mxu0
        %v638 = vadd.f32 0.0, %v637
        %v639 = vpop.f32.mrb[0].mxu0
        %640 = vmatprep.mubr.f32.mxu0 0.0
        %641 = vmatmul.mubr.f32.gmra.mrb[0].mxu0 %v445
        %v642 = vpop.f32.mrb[0].mxu0
        %v643 = vadd.f32 0.0, %v642
        %v644 = vpop.f32.mrb[0].mxu0
        %645 = vmatprep.mubr.f32.mxu0 0.0
        %646 = vmatmul.mubr.f32.gmra.mrb[0].mxu0 %v447
        %v647 = vpop.f32.mrb[0].mxu0
        %v648 = vadd.f32 0.0, %v647
        %v649 = vpop.f32.mrb[0].mxu0
        %650 = vmatprep.mubr.f32.mxu0 0.0
        %651 = vmatmul.mubr.f32.gmra.mrb[0].mxu0 %v449
        %v652 = vpop.f32.mrb[0].mxu0
        %v653 = vadd.f32 0.0, %v652
        %v654 = vpop.f32.mrb[0].mxu0
        %655 = vmatprep.mubr.f32.mxu0 0.0
        %656 = vmatmul.mubr.f32.gmra.mrb[0].mxu0 %v451
        %v657 = vpop.f32.mrb[0].mxu0
        %v658 = vadd.f32 0.0, %v657
        %v659 = vpop.f32.mrb[0].mxu0
        %660 = vmatprep.mubr.f32.mxu0 0.0
        %661 = vmatmul.mubr.f32.gmra.mrb[0].mxu0 %v453
        %v662 = vpop.f32.mrb[0].mxu0
        %v663 = vadd.f32 0.0, %v662
        %v664 = vpop.f32.mrb[0].mxu0
        %665 = vmatprep.mubr.f32.mxu0 0.0
        %666 = vmatmul.mubr.f32.gmra.mrb[0].mxu0 %v455
        %v667 = vpop.f32.mrb[0].mxu0
        %v668 = vadd.f32 0.0, %v667
        %v669 = vpop.f32.mrb[0].mxu0
        %670 = vmatprep.mubr.f32.mxu0 0.0
        %671 = vmatmul.mubr.f32.gmra.mrb[0].mxu0 %v457
        %v672 = vpop.f32.mrb[0].mxu0
        %v673 = vadd.f32 0.0, %v672
        %v674 = vpop.f32.mrb[0].mxu0
        %675 = vmatprep.mubr.f32.mxu0 0.0
        %676 = vmatmul.mubr.f32.gmra.mrb[0].mxu0 %v459
        %v677 = vpop.f32.mrb[0].mxu0
        %v678 = vadd.f32 0.0, %v677
        %v679 = vpop.f32.mrb[0].mxu0
        %680 = vmatprep.mubr.f32.mxu0 0.0
        %681 = vmatmul.mubr.f32.gmra.mrb[0].mxu0 %v461
        %v682 = vpop.f32.mrb[0].mxu0
        %v683 = vadd.f32 0.0, %v682
        %v684 = vpop.f32.mrb[0].mxu0
        %685 = vmatprep.mubr.f32.mxu0 0.0
        %686 = vmatmul.mubr.f32.gmra.mrb[0].mxu0 %v463
        %v687 = vpop.f32.mrb[0].mxu0
        %v688 = vadd.f32 0.0, %v687
        %v689 = vpop.f32.mrb[0].mxu0
        %690 = vmatprep.mubr.f32.mxu0 0.0
        %691 = vmatmul.mubr.f32.gmra.mrb[0].mxu0 %v465
        %v692 = vpop.f32.mrb[0].mxu0
        %v693 = vadd.f32 0.0, %v692
        %v694 = vpop.f32.mrb[0].mxu0
        %695 = vdwg.mxu0
        %v696 = vsel %vm402, %v216, 0
        %v698 = vsel %vm402, %v217, 0
        %v700 = vsel %vm402, %v219, 0
        %v702 = vsel %vm402, %v220, 0
        %v704 = vsel %vm402, %v222, 0
        %v706 = vsel %vm402, %v223, 0
        %v708 = vsel %vm402, %v225, 0
        %v710 = vsel %vm402, %v226, 0
        %v712 = vsel %vm402, %v228, 0
        %v714 = vsel %vm402, %v229, 0
        %v716 = vsel %vm402, %v231, 0
        %v718 = vsel %vm402, %v232, 0
        %v720 = vsel %vm402, %v234, 0
        %v722 = vsel %vm402, %v235, 0
        %v724 = vsel %vm402, %v237, 0
        %v726 = vsel %vm402, %v238, 0
        %v728 = vsel %vm402, %v240, 0
        %v730 = vsel %vm402, %v241, 0
        %v732 = vsel %vm402, %v243, 0
        %v734 = vsel %vm402, %v244, 0
        %v736 = vsel %vm402, %v246, 0
        %v738 = vsel %vm402, %v247, 0
        %v740 = vsel %vm402, %v249, 0
        %v742 = vsel %vm402, %v250, 0
        %v744 = vsel %vm402, %v252, 0
        %v746 = vsel %vm402, %v253, 0
        %v748 = vsel %vm402, %v255, 0
        %v750 = vsel %vm402, %v256, 0
        %v752 = vsel %vm402, %v258, 0
        %v754 = vsel %vm402, %v259, 0
        %v756 = vsel %vm402, %v261, 0
        %v758 = vsel %vm402, %v262, 0
        %v761 = vsel %vm467, %v270, 0
        %763 = vmatprep.subr.mxu0 0.0
        %764 = vmatpush1.msra.mxu0 %v761
        %765 = vmatprep.subr.mxu0 0.0
        %766 = vmatpush1.msra.mxu0 0.0
        %767 = vmatprep.subr.mxu0 0.0
        %768 = vmatpush1.msra.mxu0 0.0
        %769 = vmatprep.subr.mxu0 0.0
        %770 = vmatpush1.msra.mxu0 0.0
        %771 = vmatprep.subr.mxu0 0.0
        %772 = vmatpush1.msra.mxu0 0.0
        %773 = vmatprep.subr.mxu0 0.0
        %774 = vmatpush1.msra.mxu0 0.0
        %775 = vmatprep.subr.mxu0 0.0
        %776 = vmatpush1.msra.mxu0 0.0
        %777 = vmatprep.subr.mxu0 0.0
        %778 = vmatpush1.msra.mxu0 0.0
        %779 = vmatprep.subr.mxu0 0.0
        %780 = vmatpush1.msra.mxu0 0.0
        %781 = vmatprep.subr.mxu0 0.0
        %782 = vmatpush1.msra.mxu0 0.0
        %783 = vmatprep.subr.mxu0 0.0
        %784 = vmatpush1.msra.mxu0 0.0
        %785 = vmatprep.subr.mxu0 0.0
        %786 = vmatpush1.msra.mxu0 0.0
        %787 = vmatprep.subr.mxu0 0.0
        %788 = vmatpush1.msra.mxu0 0.0
        %789 = vmatprep.subr.mxu0 0.0
        %790 = vmatpush1.msra.mxu0 0.0
        %791 = vmatprep.subr.mxu0 0.0
        %792 = vmatpush1.msra.mxu0 0.0
        %793 = vmatprep.subr.mxu0 0.0
        %794 = vmatpush1.msra.mxu0 0.0
        %795 = vmatprep.subr.mxu0 0.0
        %796 = vmatpush1.msra.mxu0 0.0
        %797 = vmatprep.subr.mxu0 0.0
        %798 = vmatpush1.msra.mxu0 0.0
        %799 = vmatprep.subr.mxu0 0.0
        %800 = vmatpush1.msra.mxu0 0.0
        %801 = vmatprep.subr.mxu0 0.0
        %802 = vmatpush1.msra.mxu0 0.0
        %803 = vmatprep.subr.mxu0 0.0
        %804 = vmatpush1.msra.mxu0 0.0
        %805 = vmatprep.subr.mxu0 0.0
        %806 = vmatpush1.msra.mxu0 0.0
        %807 = vmatprep.subr.mxu0 0.0
        %808 = vmatpush1.msra.mxu0 0.0
        %809 = vmatprep.subr.mxu0 0.0
        %810 = vmatpush1.msra.mxu0 0.0
        %811 = vmatprep.subr.mxu0 0.0
        %812 = vmatpush1.msra.mxu0 0.0
        %813 = vmatprep.subr.mxu0 0.0
        %814 = vmatpush1.msra.mxu0 0.0
        %815 = vmatprep.subr.mxu0 0.0
        %816 = vmatpush1.msra.mxu0 0.0
        %817 = vmatprep.subr.mxu0 0.0
        %818 = vmatpush1.msra.mxu0 0.0
        %819 = vmatprep.subr.mxu0 0.0
        %820 = vmatpush1.msra.mxu0 0.0
        %821 = vmatprep.subr.mxu0 0.0
        %822 = vmatpush1.msra.mxu0 0.0
        %823 = vmatprep.subr.mxu0 0.0
        %824 = vmatpush1.msra.mxu0 0.0
        %825 = vmatprep.subr.mxu0 0.0
        %826 = vmatpush1.msra.mxu0 0.0
        %827 = vmatprep.mubr.f32.mxu0 0.0
        %828 = vmatmul.mubr.f32.gmra.mrb[0].mxu0 %v696
        %v829 = vpop.f32.mrb[0].mxu0
        %v830 = vadd.f32 %v538, %v829
        %v831 = vpop.f32.mrb[0].mxu0
        %832 = vmatprep.mubr.f32.mxu0 0.0
        %833 = vmatmul.mubr.f32.gmra.mrb[0].mxu0 %v698
        %v834 = vpop.f32.mrb[0].mxu0
        %v835 = vadd.f32 %v543, %v834
        %v836 = vpop.f32.mrb[0].mxu0
        %837 = vmatprep.mubr.f32.mxu0 0.0
        %838 = vmatmul.mubr.f32.gmra.mrb[0].mxu0 %v700
        %v839 = vpop.f32.mrb[0].mxu0
        %v840 = vadd.f32 %v548, %v839
        %v841 = vpop.f32.mrb[0].mxu0
        %842 = vmatprep.mubr.f32.mxu0 0.0
        %843 = vmatmul.mubr.f32.gmra.mrb[0].mxu0 %v702
        %v844 = vpop.f32.mrb[0].mxu0
        %v845 = vadd.f32 %v553, %v844
        %v846 = vpop.f32.mrb[0].mxu0
        %847 = vmatprep.mubr.f32.mxu0 0.0
        %848 = vmatmul.mubr.f32.gmra.mrb[0].mxu0 %v704
        %v849 = vpop.f32.mrb[0].mxu0
        %v850 = vadd.f32 %v558, %v849
        %v851 = vpop.f32.mrb[0].mxu0
        %852 = vmatprep.mubr.f32.mxu0 0.0
        %853 = vmatmul.mubr.f32.gmra.mrb[0].mxu0 %v706
        %v854 = vpop.f32.mrb[0].mxu0
        %v855 = vadd.f32 %v563, %v854
        %v856 = vpop.f32.mrb[0].mxu0
        %857 = vmatprep.mubr.f32.mxu0 0.0
        %858 = vmatmul.mubr.f32.gmra.mrb[0].mxu0 %v708
        %v859 = vpop.f32.mrb[0].mxu0
        %v860 = vadd.f32 %v568, %v859
        %v861 = vpop.f32.mrb[0].mxu0
        %862 = vmatprep.mubr.f32.mxu0 0.0
        %863 = vmatmul.mubr.f32.gmra.mrb[0].mxu0 %v710
        %v864 = vpop.f32.mrb[0].mxu0
        %v865 = vadd.f32 %v573, %v864
        %v866 = vpop.f32.mrb[0].mxu0
        %867 = vmatprep.mubr.f32.mxu0 0.0
        %868 = vmatmul.mubr.f32.gmra.mrb[0].mxu0 %v712
        %v869 = vpop.f32.mrb[0].mxu0
        %v870 = vadd.f32 %v578, %v869
        %v871 = vpop.f32.mrb[0].mxu0
        %872 = vmatprep.mubr.f32.mxu0 0.0
        %873 = vmatmul.mubr.f32.gmra.mrb[0].mxu0 %v714
        %v874 = vpop.f32.mrb[0].mxu0
        %v875 = vadd.f32 %v583, %v874
        %v876 = vpop.f32.mrb[0].mxu0
        %877 = vmatprep.mubr.f32.mxu0 0.0
        %878 = vmatmul.mubr.f32.gmra.mrb[0].mxu0 %v716
        %v879 = vpop.f32.mrb[0].mxu0
        %v880 = vadd.f32 %v588, %v879
        %v881 = vpop.f32.mrb[0].mxu0
        %882 = vmatprep.mubr.f32.mxu0 0.0
        %883 = vmatmul.mubr.f32.gmra.mrb[0].mxu0 %v718
        %v884 = vpop.f32.mrb[0].mxu0
        %v885 = vadd.f32 %v593, %v884
        %v886 = vpop.f32.mrb[0].mxu0
        %887 = vmatprep.mubr.f32.mxu0 0.0
        %888 = vmatmul.mubr.f32.gmra.mrb[0].mxu0 %v720
        %v889 = vpop.f32.mrb[0].mxu0
        %v890 = vadd.f32 %v598, %v889
        %v891 = vpop.f32.mrb[0].mxu0
        %892 = vmatprep.mubr.f32.mxu0 0.0
        %893 = vmatmul.mubr.f32.gmra.mrb[0].mxu0 %v722
        %v894 = vpop.f32.mrb[0].mxu0
        %v895 = vadd.f32 %v603, %v894
        %v896 = vpop.f32.mrb[0].mxu0
        %897 = vmatprep.mubr.f32.mxu0 0.0
        %898 = vmatmul.mubr.f32.gmra.mrb[0].mxu0 %v724
        %v899 = vpop.f32.mrb[0].mxu0
        %v900 = vadd.f32 %v608, %v899
        %v901 = vpop.f32.mrb[0].mxu0
        %902 = vmatprep.mubr.f32.mxu0 0.0
        %903 = vmatmul.mubr.f32.gmra.mrb[0].mxu0 %v726
        %v904 = vpop.f32.mrb[0].mxu0
        %v905 = vadd.f32 %v613, %v904
        %v906 = vpop.f32.mrb[0].mxu0
        %907 = vmatprep.mubr.f32.mxu0 0.0
        %908 = vmatmul.mubr.f32.gmra.mrb[0].mxu0 %v728
        %v909 = vpop.f32.mrb[0].mxu0
        %v910 = vadd.f32 %v618, %v909
        %v911 = vpop.f32.mrb[0].mxu0
        %912 = vmatprep.mubr.f32.mxu0 0.0
        %913 = vmatmul.mubr.f32.gmra.mrb[0].mxu0 %v730
        %v914 = vpop.f32.mrb[0].mxu0
        %v915 = vadd.f32 %v623, %v914
        %v916 = vpop.f32.mrb[0].mxu0
        %917 = vmatprep.mubr.f32.mxu0 0.0
        %918 = vmatmul.mubr.f32.gmra.mrb[0].mxu0 %v732
        %v919 = vpop.f32.mrb[0].mxu0
        %v920 = vadd.f32 %v628, %v919
        %v921 = vpop.f32.mrb[0].mxu0
        %922 = vmatprep.mubr.f32.mxu0 0.0
        %923 = vmatmul.mubr.f32.gmra.mrb[0].mxu0 %v734
        %v924 = vpop.f32.mrb[0].mxu0
        %v925 = vadd.f32 %v633, %v924
        %v926 = vpop.f32.mrb[0].mxu0
        %927 = vmatprep.mubr.f32.mxu0 0.0
        %928 = vmatmul.mubr.f32.gmra.mrb[0].mxu0 %v736
        %v929 = vpop.f32.mrb[0].mxu0
        %v930 = vadd.f32 %v638, %v929
        %v931 = vpop.f32.mrb[0].mxu0
        %932 = vmatprep.mubr.f32.mxu0 0.0
        %933 = vmatmul.mubr.f32.gmra.mrb[0].mxu0 %v738
        %v934 = vpop.f32.mrb[0].mxu0
        %v935 = vadd.f32 %v643, %v934
        %v936 = vpop.f32.mrb[0].mxu0
        %937 = vmatprep.mubr.f32.mxu0 0.0
        %938 = vmatmul.mubr.f32.gmra.mrb[0].mxu0 %v740
        %v939 = vpop.f32.mrb[0].mxu0
        %v940 = vadd.f32 %v648, %v939
        %v941 = vpop.f32.mrb[0].mxu0
        %942 = vmatprep.mubr.f32.mxu0 0.0
        %943 = vmatmul.mubr.f32.gmra.mrb[0].mxu0 %v742
        %v944 = vpop.f32.mrb[0].mxu0
        %v945 = vadd.f32 %v653, %v944
        %v946 = vpop.f32.mrb[0].mxu0
        %947 = vmatprep.mubr.f32.mxu0 0.0
        %948 = vmatmul.mubr.f32.gmra.mrb[0].mxu0 %v744
        %v949 = vpop.f32.mrb[0].mxu0
        %v950 = vadd.f32 %v658, %v949
        %v951 = vpop.f32.mrb[0].mxu0
        %952 = vmatprep.mubr.f32.mxu0 0.0
        %953 = vmatmul.mubr.f32.gmra.mrb[0].mxu0 %v746
        %v954 = vpop.f32.mrb[0].mxu0
        %v955 = vadd.f32 %v663, %v954
        %v956 = vpop.f32.mrb[0].mxu0
        %957 = vmatprep.mubr.f32.mxu0 0.0
        %958 = vmatmul.mubr.f32.gmra.mrb[0].mxu0 %v748
        %v959 = vpop.f32.mrb[0].mxu0
        %v960 = vadd.f32 %v668, %v959
        %v961 = vpop.f32.mrb[0].mxu0
        %962 = vmatprep.mubr.f32.mxu0 0.0
        %963 = vmatmul.mubr.f32.gmra.mrb[0].mxu0 %v750
        %v964 = vpop.f32.mrb[0].mxu0
        %v965 = vadd.f32 %v673, %v964
        %v966 = vpop.f32.mrb[0].mxu0
        %967 = vmatprep.mubr.f32.mxu0 0.0
        %968 = vmatmul.mubr.f32.gmra.mrb[0].mxu0 %v752
        %v969 = vpop.f32.mrb[0].mxu0
        %v970 = vadd.f32 %v678, %v969
        %v971 = vpop.f32.mrb[0].mxu0
        %972 = vmatprep.mubr.f32.mxu0 0.0
        %973 = vmatmul.mubr.f32.gmra.mrb[0].mxu0 %v754
        %v974 = vpop.f32.mrb[0].mxu0
        %v975 = vadd.f32 %v683, %v974
        %v976 = vpop.f32.mrb[0].mxu0
        %977 = vmatprep.mubr.f32.mxu0 0.0
        %978 = vmatmul.mubr.f32.gmra.mrb[0].mxu0 %v756
        %v979 = vpop.f32.mrb[0].mxu0
        %v980 = vadd.f32 %v688, %v979
        %v981 = vpop.f32.mrb[0].mxu0
        %982 = vmatprep.mubr.f32.mxu0 0.0
        %983 = vmatmul.mubr.f32.gmra.mrb[0].mxu0 %v758
        %v984 = vpop.f32.mrb[0].mxu0
        %v985 = vadd.f32 %v693, %v984
        %v986 = vpop.f32.mrb[0].mxu0
        %987 = vdwg.mxu0
        %vm988 = vcmask 1045504
        %v989 = vrot.slane %v216, 2
        %v990 = vrot.slane %v217, 2
        %v991 = vsel %vm988, %v989, %v990
        %v992 = vrot.slane %v218, 2
        %v993 = vsel %vm988, %v990, %v992
        %v994 = vrot.slane %v219, 2
        %v995 = vrot.slane %v220, 2
        %v996 = vsel %vm988, %v994, %v995
        %v997 = vrot.slane %v221, 2
        %v998 = vsel %vm988, %v995, %v997
        %v999 = vrot.slane %v222, 2
        %v1000 = vrot.slane %v223, 2
        %v1001 = vsel %vm988, %v999, %v1000
        %v1002 = vrot.slane %v224, 2
        %v1003 = vsel %vm988, %v1000, %v1002
        %v1004 = vrot.slane %v225, 2
        %v1005 = vrot.slane %v226, 2
        %v1006 = vsel %vm988, %v1004, %v1005
        %v1007 = vrot.slane %v227, 2
        %v1008 = vsel %vm988, %v1005, %v1007
        %v1009 = vrot.slane %v228, 2
        %v1010 = vrot.slane %v229, 2
        %v1011 = vsel %vm988, %v1009, %v1010
        %v1012 = vrot.slane %v230, 2
        %v1013 = vsel %vm988, %v1010, %v1012
        %v1014 = vrot.slane %v231, 2
        %v1015 = vrot.slane %v232, 2
        %v1016 = vsel %vm988, %v1014, %v1015
        %v1017 = vrot.slane %v233, 2
        %v1018 = vsel %vm988, %v1015, %v1017
        %v1019 = vrot.slane %v234, 2
        %v1020 = vrot.slane %v235, 2
        %v1021 = vsel %vm988, %v1019, %v1020
        %v1022 = vrot.slane %v236, 2
        %v1023 = vsel %vm988, %v1020, %v1022
        %v1024 = vrot.slane %v237, 2
        %v1025 = vrot.slane %v238, 2
        %v1026 = vsel %vm988, %v1024, %v1025
        %v1027 = vrot.slane %v239, 2
        %v1028 = vsel %vm988, %v1025, %v1027
        %v1029 = vrot.slane %v240, 2
        %v1030 = vrot.slane %v241, 2
        %v1031 = vsel %vm988, %v1029, %v1030
        %v1032 = vrot.slane %v242, 2
        %v1033 = vsel %vm988, %v1030, %v1032
        %v1034 = vrot.slane %v243, 2
        %v1035 = vrot.slane %v244, 2
        %v1036 = vsel %vm988, %v1034, %v1035
        %v1037 = vrot.slane %v245, 2
        %v1038 = vsel %vm988, %v1035, %v1037
        %v1039 = vrot.slane %v246, 2
        %v1040 = vrot.slane %v247, 2
        %v1041 = vsel %vm988, %v1039, %v1040
        %v1042 = vrot.slane %v248, 2
        %v1043 = vsel %vm988, %v1040, %v1042
        %v1044 = vrot.slane %v249, 2
        %v1045 = vrot.slane %v250, 2
        %v1046 = vsel %vm988, %v1044, %v1045
        %v1047 = vrot.slane %v251, 2
        %v1048 = vsel %vm988, %v1045, %v1047
        %v1049 = vrot.slane %v252, 2
        %v1050 = vrot.slane %v253, 2
        %v1051 = vsel %vm988, %v1049, %v1050
        %v1052 = vrot.slane %v254, 2
        %v1053 = vsel %vm988, %v1050, %v1052
        %v1054 = vrot.slane %v255, 2
        %v1055 = vrot.slane %v256, 2
        %v1056 = vsel %vm988, %v1054, %v1055
        %v1057 = vrot.slane %v257, 2
        %v1058 = vsel %vm988, %v1055, %v1057
        %v1059 = vrot.slane %v258, 2
        %v1060 = vrot.slane %v259, 2
        %v1061 = vsel %vm988, %v1059, %v1060
        %v1062 = vrot.slane %v260, 2
        %v1063 = vsel %vm988, %v1060, %v1062
        %v1064 = vrot.slane %v261, 2
        %v1065 = vrot.slane %v262, 2
        %v1066 = vsel %vm988, %v1064, %v1065
        %v1067 = vrot.slane %v263, 2
        %v1068 = vsel %vm988, %v1065, %v1067
        %s1069 = scalar_lea.vmem [#allocation5], 8
        %v1070 = vld [vmem:[%s1069] sm:$0xf]
        %v1071 = vsel %vm402, %v991, 0
        %v1073 = vsel %vm402, %v993, 0
        %v1075 = vsel %vm402, %v996, 0
        %v1077 = vsel %vm402, %v998, 0
        %v1079 = vsel %vm402, %v1001, 0
        %v1081 = vsel %vm402, %v1003, 0
        %v1083 = vsel %vm402, %v1006, 0
        %v1085 = vsel %vm402, %v1008, 0
        %v1087 = vsel %vm402, %v1011, 0
        %v1089 = vsel %vm402, %v1013, 0
        %v1091 = vsel %vm402, %v1016, 0
        %v1093 = vsel %vm402, %v1018, 0
        %v1095 = vsel %vm402, %v1021, 0
        %v1097 = vsel %vm402, %v1023, 0
        %v1099 = vsel %vm402, %v1026, 0
        %v1101 = vsel %vm402, %v1028, 0
        %v1103 = vsel %vm402, %v1031, 0
        %v1105 = vsel %vm402, %v1033, 0
        %v1107 = vsel %vm402, %v1036, 0
        %v1109 = vsel %vm402, %v1038, 0
        %v1111 = vsel %vm402, %v1041, 0
        %v1113 = vsel %vm402, %v1043, 0
        %v1115 = vsel %vm402, %v1046, 0
        %v1117 = vsel %vm402, %v1048, 0
        %v1119 = vsel %vm402, %v1051, 0
        %v1121 = vsel %vm402, %v1053, 0
        %v1123 = vsel %vm402, %v1056, 0
        %v1125 = vsel %vm402, %v1058, 0
        %v1127 = vsel %vm402, %v1061, 0
        %v1129 = vsel %vm402, %v1063, 0
        %v1131 = vsel %vm402, %v1066, 0
        %v1133 = vsel %vm402, %v1068, 0
        %v1136 = vsel %vm467, %v1070, 0
        %1138 = vmatprep.subr.mxu0 0.0
        %1139 = vmatpush1.msra.mxu0 %v1136
        %1140 = vmatprep.subr.mxu0 0.0
        %1141 = vmatpush1.msra.mxu0 0.0
        %1142 = vmatprep.subr.mxu0 0.0
        %1143 = vmatpush1.msra.mxu0 0.0
        %1144 = vmatprep.subr.mxu0 0.0
        %1145 = vmatpush1.msra.mxu0 0.0
        %1146 = vmatprep.subr.mxu0 0.0
        %1147 = vmatpush1.msra.mxu0 0.0
        %1148 = vmatprep.subr.mxu0 0.0
        %1149 = vmatpush1.msra.mxu0 0.0
        %1150 = vmatprep.subr.mxu0 0.0
        %1151 = vmatpush1.msra.mxu0 0.0
        %1152 = vmatprep.subr.mxu0 0.0
        %1153 = vmatpush1.msra.mxu0 0.0
        %1154 = vmatprep.subr.mxu0 0.0
        %1155 = vmatpush1.msra.mxu0 0.0
        %1156 = vmatprep.subr.mxu0 0.0
        %1157 = vmatpush1.msra.mxu0 0.0
        %1158 = vmatprep.subr.mxu0 0.0
        %1159 = vmatpush1.msra.mxu0 0.0
        %1160 = vmatprep.subr.mxu0 0.0
        %1161 = vmatpush1.msra.mxu0 0.0
        %1162 = vmatprep.subr.mxu0 0.0
        %1163 = vmatpush1.msra.mxu0 0.0
        %1164 = vmatprep.subr.mxu0 0.0
        %1165 = vmatpush1.msra.mxu0 0.0
        %1166 = vmatprep.subr.mxu0 0.0
        %1167 = vmatpush1.msra.mxu0 0.0
        %1168 = vmatprep.subr.mxu0 0.0
        %1169 = vmatpush1.msra.mxu0 0.0
        %1170 = vmatprep.subr.mxu0 0.0
        %1171 = vmatpush1.msra.mxu0 0.0
        %1172 = vmatprep.subr.mxu0 0.0
        %1173 = vmatpush1.msra.mxu0 0.0
        %1174 = vmatprep.subr.mxu0 0.0
        %1175 = vmatpush1.msra.mxu0 0.0
        %1176 = vmatprep.subr.mxu0 0.0
        %1177 = vmatpush1.msra.mxu0 0.0
        %1178 = vmatprep.subr.mxu0 0.0
        %1179 = vmatpush1.msra.mxu0 0.0
        %1180 = vmatprep.subr.mxu0 0.0
        %1181 = vmatpush1.msra.mxu0 0.0
        %1182 = vmatprep.subr.mxu0 0.0
        %1183 = vmatpush1.msra.mxu0 0.0
        %1184 = vmatprep.subr.mxu0 0.0
        %1185 = vmatpush1.msra.mxu0 0.0
        %1186 = vmatprep.subr.mxu0 0.0
        %1187 = vmatpush1.msra.mxu0 0.0
        %1188 = vmatprep.subr.mxu0 0.0
        %1189 = vmatpush1.msra.mxu0 0.0
        %1190 = vmatprep.subr.mxu0 0.0
        %1191 = vmatpush1.msra.mxu0 0.0
        %1192 = vmatprep.subr.mxu0 0.0
        %1193 = vmatpush1.msra.mxu0 0.0
        %1194 = vmatprep.subr.mxu0 0.0
        %1195 = vmatpush1.msra.mxu0 0.0
        %1196 = vmatprep.subr.mxu0 0.0
        %1197 = vmatpush1.msra.mxu0 0.0
        %1198 = vmatprep.subr.mxu0 0.0
        %1199 = vmatpush1.msra.mxu0 0.0
        %1200 = vmatprep.subr.mxu0 0.0
        %1201 = vmatpush1.msra.mxu0 0.0
        %1202 = vmatprep.mubr.f32.mxu0 0.0
        %1203 = vmatmul.mubr.f32.gmra.mrb[0].mxu0 %v1071
        %v1204 = vpop.f32.mrb[0].mxu0
        %v1205 = vadd.f32 0.0, %v1204
        %v1206 = vpop.f32.mrb[0].mxu0
        %1207 = vmatprep.mubr.f32.mxu0 0.0
        %1208 = vmatmul.mubr.f32.gmra.mrb[0].mxu0 %v1073
        %v1209 = vpop.f32.mrb[0].mxu0
        %v1210 = vadd.f32 0.0, %v1209
        %v1211 = vpop.f32.mrb[0].mxu0
        %1212 = vmatprep.mubr.f32.mxu0 0.0
        %1213 = vmatmul.mubr.f32.gmra.mrb[0].mxu0 %v1075
        %v1214 = vpop.f32.mrb[0].mxu0
        %v1215 = vadd.f32 0.0, %v1214
        %v1216 = vpop.f32.mrb[0].mxu0
        %1217 = vmatprep.mubr.f32.mxu0 0.0
        %1218 = vmatmul.mubr.f32.gmra.mrb[0].mxu0 %v1077
        %v1219 = vpop.f32.mrb[0].mxu0
        %v1220 = vadd.f32 0.0, %v1219
        %v1221 = vpop.f32.mrb[0].mxu0
        %1222 = vmatprep.mubr.f32.mxu0 0.0
        %1223 = vmatmul.mubr.f32.gmra.mrb[0].mxu0 %v1079
        %v1224 = vpop.f32.mrb[0].mxu0
        %v1225 = vadd.f32 0.0, %v1224
        %v1226 = vpop.f32.mrb[0].mxu0
        %1227 = vmatprep.mubr.f32.mxu0 0.0
        %1228 = vmatmul.mubr.f32.gmra.mrb[0].mxu0 %v1081
        %v1229 = vpop.f32.mrb[0].mxu0
        %v1230 = vadd.f32 0.0, %v1229
        %v1231 = vpop.f32.mrb[0].mxu0
        %1232 = vmatprep.mubr.f32.mxu0 0.0
        %1233 = vmatmul.mubr.f32.gmra.mrb[0].mxu0 %v1083
        %v1234 = vpop.f32.mrb[0].mxu0
        %v1235 = vadd.f32 0.0, %v1234
        %v1236 = vpop.f32.mrb[0].mxu0
        %1237 = vmatprep.mubr.f32.mxu0 0.0
        %1238 = vmatmul.mubr.f32.gmra.mrb[0].mxu0 %v1085
        %v1239 = vpop.f32.mrb[0].mxu0
        %v1240 = vadd.f32 0.0, %v1239
        %v1241 = vpop.f32.mrb[0].mxu0
        %1242 = vmatprep.mubr.f32.mxu0 0.0
        %1243 = vmatmul.mubr.f32.gmra.mrb[0].mxu0 %v1087
        %v1244 = vpop.f32.mrb[0].mxu0
        %v1245 = vadd.f32 0.0, %v1244
        %v1246 = vpop.f32.mrb[0].mxu0
        %1247 = vmatprep.mubr.f32.mxu0 0.0
        %1248 = vmatmul.mubr.f32.gmra.mrb[0].mxu0 %v1089
        %v1249 = vpop.f32.mrb[0].mxu0
        %v1250 = vadd.f32 0.0, %v1249
        %v1251 = vpop.f32.mrb[0].mxu0
        %1252 = vmatprep.mubr.f32.mxu0 0.0
        %1253 = vmatmul.mubr.f32.gmra.mrb[0].mxu0 %v1091
        %v1254 = vpop.f32.mrb[0].mxu0
        %v1255 = vadd.f32 0.0, %v1254
        %v1256 = vpop.f32.mrb[0].mxu0
        %1257 = vmatprep.mubr.f32.mxu0 0.0
        %1258 = vmatmul.mubr.f32.gmra.mrb[0].mxu0 %v1093
        %v1259 = vpop.f32.mrb[0].mxu0
        %v1260 = vadd.f32 0.0, %v1259
        %v1261 = vpop.f32.mrb[0].mxu0
        %1262 = vmatprep.mubr.f32.mxu0 0.0
        %1263 = vmatmul.mubr.f32.gmra.mrb[0].mxu0 %v1095
        %v1264 = vpop.f32.mrb[0].mxu0
        %v1265 = vadd.f32 0.0, %v1264
        %v1266 = vpop.f32.mrb[0].mxu0
        %1267 = vmatprep.mubr.f32.mxu0 0.0
        %1268 = vmatmul.mubr.f32.gmra.mrb[0].mxu0 %v1097
        %v1269 = vpop.f32.mrb[0].mxu0
        %v1270 = vadd.f32 0.0, %v1269
        %v1271 = vpop.f32.mrb[0].mxu0
        %1272 = vmatprep.mubr.f32.mxu0 0.0
        %1273 = vmatmul.mubr.f32.gmra.mrb[0].mxu0 %v1099
        %v1274 = vpop.f32.mrb[0].mxu0
        %v1275 = vadd.f32 0.0, %v1274
        %v1276 = vpop.f32.mrb[0].mxu0
        %1277 = vmatprep.mubr.f32.mxu0 0.0
        %1278 = vmatmul.mubr.f32.gmra.mrb[0].mxu0 %v1101
        %v1279 = vpop.f32.mrb[0].mxu0
        %v1280 = vadd.f32 0.0, %v1279
        %v1281 = vpop.f32.mrb[0].mxu0
        %1282 = vmatprep.mubr.f32.mxu0 0.0
        %1283 = vmatmul.mubr.f32.gmra.mrb[0].mxu0 %v1103
        %v1284 = vpop.f32.mrb[0].mxu0
        %v1285 = vadd.f32 0.0, %v1284
        %v1286 = vpop.f32.mrb[0].mxu0
        %1287 = vmatprep.mubr.f32.mxu0 0.0
        %1288 = vmatmul.mubr.f32.gmra.mrb[0].mxu0 %v1105
        %v1289 = vpop.f32.mrb[0].mxu0
        %v1290 = vadd.f32 0.0, %v1289
        %v1291 = vpop.f32.mrb[0].mxu0
        %1292 = vmatprep.mubr.f32.mxu0 0.0
        %1293 = vmatmul.mubr.f32.gmra.mrb[0].mxu0 %v1107
        %v1294 = vpop.f32.mrb[0].mxu0
        %v1295 = vadd.f32 0.0, %v1294
        %v1296 = vpop.f32.mrb[0].mxu0
        %1297 = vmatprep.mubr.f32.mxu0 0.0
        %1298 = vmatmul.mubr.f32.gmra.mrb[0].mxu0 %v1109
        %v1299 = vpop.f32.mrb[0].mxu0
        %v1300 = vadd.f32 0.0, %v1299
        %v1301 = vpop.f32.mrb[0].mxu0
        %1302 = vmatprep.mubr.f32.mxu0 0.0
        %1303 = vmatmul.mubr.f32.gmra.mrb[0].mxu0 %v1111
        %v1304 = vpop.f32.mrb[0].mxu0
        %v1305 = vadd.f32 0.0, %v1304
        %v1306 = vpop.f32.mrb[0].mxu0
        %1307 = vmatprep.mubr.f32.mxu0 0.0
        %1308 = vmatmul.mubr.f32.gmra.mrb[0].mxu0 %v1113
        %v1309 = vpop.f32.mrb[0].mxu0
        %v1310 = vadd.f32 0.0, %v1309
        %v1311 = vpop.f32.mrb[0].mxu0
        %1312 = vmatprep.mubr.f32.mxu0 0.0
        %1313 = vmatmul.mubr.f32.gmra.mrb[0].mxu0 %v1115
        %v1314 = vpop.f32.mrb[0].mxu0
        %v1315 = vadd.f32 0.0, %v1314
        %v1316 = vpop.f32.mrb[0].mxu0
        %1317 = vmatprep.mubr.f32.mxu0 0.0
        %1318 = vmatmul.mubr.f32.gmra.mrb[0].mxu0 %v1117
        %v1319 = vpop.f32.mrb[0].mxu0
        %v1320 = vadd.f32 0.0, %v1319
        %v1321 = vpop.f32.mrb[0].mxu0
        %1322 = vmatprep.mubr.f32.mxu0 0.0
        %1323 = vmatmul.mubr.f32.gmra.mrb[0].mxu0 %v1119
        %v1324 = vpop.f32.mrb[0].mxu0
        %v1325 = vadd.f32 0.0, %v1324
        %v1326 = vpop.f32.mrb[0].mxu0
        %1327 = vmatprep.mubr.f32.mxu0 0.0
        %1328 = vmatmul.mubr.f32.gmra.mrb[0].mxu0 %v1121
        %v1329 = vpop.f32.mrb[0].mxu0
        %v1330 = vadd.f32 0.0, %v1329
        %v1331 = vpop.f32.mrb[0].mxu0
        %1332 = vmatprep.mubr.f32.mxu0 0.0
        %1333 = vmatmul.mubr.f32.gmra.mrb[0].mxu0 %v1123
        %v1334 = vpop.f32.mrb[0].mxu0
        %v1335 = vadd.f32 0.0, %v1334
        %v1336 = vpop.f32.mrb[0].mxu0
        %1337 = vmatprep.mubr.f32.mxu0 0.0
        %1338 = vmatmul.mubr.f32.gmra.mrb[0].mxu0 %v1125
        %v1339 = vpop.f32.mrb[0].mxu0
        %v1340 = vadd.f32 0.0, %v1339
        %v1341 = vpop.f32.mrb[0].mxu0
        %1342 = vmatprep.mubr.f32.mxu0 0.0
        %1343 = vmatmul.mubr.f32.gmra.mrb[0].mxu0 %v1127
        %v1344 = vpop.f32.mrb[0].mxu0
        %v1345 = vadd.f32 0.0, %v1344
        %v1346 = vpop.f32.mrb[0].mxu0
        %1347 = vmatprep.mubr.f32.mxu0 0.0
        %1348 = vmatmul.mubr.f32.gmra.mrb[0].mxu0 %v1129
        %v1349 = vpop.f32.mrb[0].mxu0
        %v1350 = vadd.f32 0.0, %v1349
        %v1351 = vpop.f32.mrb[0].mxu0
        %1352 = vmatprep.mubr.f32.mxu0 0.0
        %1353 = vmatmul.mubr.f32.gmra.mrb[0].mxu0 %v1131
        %v1354 = vpop.f32.mrb[0].mxu0
        %v1355 = vadd.f32 0.0, %v1354
        %v1356 = vpop.f32.mrb[0].mxu0
        %1357 = vmatprep.mubr.f32.mxu0 0.0
        %1358 = vmatmul.mubr.f32.gmra.mrb[0].mxu0 %v1133
        %v1359 = vpop.f32.mrb[0].mxu0
        %v1360 = vadd.f32 0.0, %v1359
        %v1361 = vpop.f32.mrb[0].mxu0
        %1362 = vdwg.mxu0
        %v1363 = vadd.f32 %v830, %v1205
        %v1364 = vadd.f32 %v835, %v1210
        %v1365 = vadd.f32 %v840, %v1215
        %v1366 = vadd.f32 %v845, %v1220
        %v1367 = vadd.f32 %v850, %v1225
        %v1368 = vadd.f32 %v855, %v1230
        %v1369 = vadd.f32 %v860, %v1235
        %v1370 = vadd.f32 %v865, %v1240
        %v1371 = vadd.f32 %v870, %v1245
        %v1372 = vadd.f32 %v875, %v1250
        %v1373 = vadd.f32 %v880, %v1255
        %v1374 = vadd.f32 %v885, %v1260
        %v1375 = vadd.f32 %v890, %v1265
        %v1376 = vadd.f32 %v895, %v1270
        %v1377 = vadd.f32 %v900, %v1275
        %v1378 = vadd.f32 %v905, %v1280
        %v1379 = vadd.f32 %v910, %v1285
        %v1380 = vadd.f32 %v915, %v1290
        %v1381 = vadd.f32 %v920, %v1295
        %v1382 = vadd.f32 %v925, %v1300
        %v1383 = vadd.f32 %v930, %v1305
        %v1384 = vadd.f32 %v935, %v1310
        %v1385 = vadd.f32 %v940, %v1315
        %v1386 = vadd.f32 %v945, %v1320
        %v1387 = vadd.f32 %v950, %v1325
        %v1388 = vadd.f32 %v955, %v1330
        %v1389 = vadd.f32 %v960, %v1335
        %v1390 = vadd.f32 %v965, %v1340
        %v1391 = vadd.f32 %v970, %v1345
        %v1392 = vadd.f32 %v975, %v1350
        %v1393 = vadd.f32 %v980, %v1355
        %v1394 = vadd.f32 %v985, %v1360
        %s1395 = scalar_lea.vmem [#allocation5], 12
        %v1396 = vld [vmem:[%s1395] sm:$0xf]
        %v1398 = vsel %vm402, %v264, 0
        %v1401 = vsel %vm402, %v265, 0
        %v1404 = vsel %vm467, %v1396, 0
        %1406 = vmatprep.subr.mxu0 0.0
        %1407 = vmatpush1.msra.mxu0 %v1404
        %1408 = vmatprep.subr.mxu0 0.0
        %1409 = vmatpush1.msra.mxu0 0.0
        %1410 = vmatprep.subr.mxu0 0.0
        %1411 = vmatpush1.msra.mxu0 0.0
        %1412 = vmatprep.subr.mxu0 0.0
        %1413 = vmatpush1.msra.mxu0 0.0
        %1414 = vmatprep.subr.mxu0 0.0
        %1415 = vmatpush1.msra.mxu0 0.0
        %1416 = vmatprep.subr.mxu0 0.0
        %1417 = vmatpush1.msra.mxu0 0.0
        %1418 = vmatprep.subr.mxu0 0.0
        %1419 = vmatpush1.msra.mxu0 0.0
        %1420 = vmatprep.subr.mxu0 0.0
        %1421 = vmatpush1.msra.mxu0 0.0
        %1422 = vmatprep.subr.mxu0 0.0
        %1423 = vmatpush1.msra.mxu0 0.0
        %1424 = vmatprep.subr.mxu0 0.0
        %1425 = vmatpush1.msra.mxu0 0.0
        %1426 = vmatprep.subr.mxu0 0.0
        %1427 = vmatpush1.msra.mxu0 0.0
        %1428 = vmatprep.subr.mxu0 0.0
        %1429 = vmatpush1.msra.mxu0 0.0
        %1430 = vmatprep.subr.mxu0 0.0
        %1431 = vmatpush1.msra.mxu0 0.0
        %1432 = vmatprep.subr.mxu0 0.0
        %1433 = vmatpush1.msra.mxu0 0.0
        %1434 = vmatprep.subr.mxu0 0.0
        %1435 = vmatpush1.msra.mxu0 0.0
        %1436 = vmatprep.subr.mxu0 0.0
        %1437 = vmatpush1.msra.mxu0 0.0
        %1438 = vmatprep.subr.mxu0 0.0
        %1439 = vmatpush1.msra.mxu0 0.0
        %1440 = vmatprep.subr.mxu0 0.0
        %1441 = vmatpush1.msra.mxu0 0.0
        %1442 = vmatprep.subr.mxu0 0.0
        %1443 = vmatpush1.msra.mxu0 0.0
        %1444 = vmatprep.subr.mxu0 0.0
        %1445 = vmatpush1.msra.mxu0 0.0
        %1446 = vmatprep.subr.mxu0 0.0
        %1447 = vmatpush1.msra.mxu0 0.0
        %1448 = vmatprep.subr.mxu0 0.0
        %1449 = vmatpush1.msra.mxu0 0.0
        %1450 = vmatprep.subr.mxu0 0.0
        %1451 = vmatpush1.msra.mxu0 0.0
        %1452 = vmatprep.subr.mxu0 0.0
        %1453 = vmatpush1.msra.mxu0 0.0
        %1454 = vmatprep.subr.mxu0 0.0
        %1455 = vmatpush1.msra.mxu0 0.0
        %1456 = vmatprep.subr.mxu0 0.0
        %1457 = vmatpush1.msra.mxu0 0.0
        %1458 = vmatprep.subr.mxu0 0.0
        %1459 = vmatpush1.msra.mxu0 0.0
        %1460 = vmatprep.subr.mxu0 0.0
        %1461 = vmatpush1.msra.mxu0 0.0
        %1462 = vmatprep.subr.mxu0 0.0
        %1463 = vmatpush1.msra.mxu0 0.0
        %1464 = vmatprep.subr.mxu0 0.0
        %1465 = vmatpush1.msra.mxu0 0.0
        %1466 = vmatprep.subr.mxu0 0.0
        %1467 = vmatpush1.msra.mxu0 0.0
        %1468 = vmatprep.subr.mxu0 0.0
        %1469 = vmatpush1.msra.mxu0 0.0
        %1470 = vmatprep.mubr.f32.mxu0 0.0
        %1471 = vmatmul.mubr.f32.gmra.mrb[0].mxu0 %v700
        %v1472 = vpop.f32.mrb[0].mxu0
        %v1473 = vadd.f32 0.0, %v1472
        %v1474 = vpop.f32.mrb[0].mxu0
        %1475 = vmatprep.mubr.f32.mxu0 0.0
        %1476 = vmatmul.mubr.f32.gmra.mrb[0].mxu0 %v702
        %v1477 = vpop.f32.mrb[0].mxu0
        %v1478 = vadd.f32 0.0, %v1477
        %v1479 = vpop.f32.mrb[0].mxu0
        %1480 = vmatprep.mubr.f32.mxu0 0.0
        %1481 = vmatmul.mubr.f32.gmra.mrb[0].mxu0 %v704
        %v1482 = vpop.f32.mrb[0].mxu0
        %v1483 = vadd.f32 0.0, %v1482
        %v1484 = vpop.f32.mrb[0].mxu0
        %1485 = vmatprep.mubr.f32.mxu0 0.0
        %1486 = vmatmul.mubr.f32.gmra.mrb[0].mxu0 %v706
        %v1487 = vpop.f32.mrb[0].mxu0
        %v1488 = vadd.f32 0.0, %v1487
        %v1489 = vpop.f32.mrb[0].mxu0
        %1490 = vmatprep.mubr.f32.mxu0 0.0
        %1491 = vmatmul.mubr.f32.gmra.mrb[0].mxu0 %v708
        %v1492 = vpop.f32.mrb[0].mxu0
        %v1493 = vadd.f32 0.0, %v1492
        %v1494 = vpop.f32.mrb[0].mxu0
        %1495 = vmatprep.mubr.f32.mxu0 0.0
        %1496 = vmatmul.mubr.f32.gmra.mrb[0].mxu0 %v710
        %v1497 = vpop.f32.mrb[0].mxu0
        %v1498 = vadd.f32 0.0, %v1497
        %v1499 = vpop.f32.mrb[0].mxu0
        %1500 = vmatprep.mubr.f32.mxu0 0.0
        %1501 = vmatmul.mubr.f32.gmra.mrb[0].mxu0 %v712
        %v1502 = vpop.f32.mrb[0].mxu0
        %v1503 = vadd.f32 0.0, %v1502
        %v1504 = vpop.f32.mrb[0].mxu0
        %1505 = vmatprep.mubr.f32.mxu0 0.0
        %1506 = vmatmul.mubr.f32.gmra.mrb[0].mxu0 %v714
        %v1507 = vpop.f32.mrb[0].mxu0
        %v1508 = vadd.f32 0.0, %v1507
        %v1509 = vpop.f32.mrb[0].mxu0
        %1510 = vmatprep.mubr.f32.mxu0 0.0
        %1511 = vmatmul.mubr.f32.gmra.mrb[0].mxu0 %v716
        %v1512 = vpop.f32.mrb[0].mxu0
        %v1513 = vadd.f32 0.0, %v1512
        %v1514 = vpop.f32.mrb[0].mxu0
        %1515 = vmatprep.mubr.f32.mxu0 0.0
        %1516 = vmatmul.mubr.f32.gmra.mrb[0].mxu0 %v718
        %v1517 = vpop.f32.mrb[0].mxu0
        %v1518 = vadd.f32 0.0, %v1517
        %v1519 = vpop.f32.mrb[0].mxu0
        %1520 = vmatprep.mubr.f32.mxu0 0.0
        %1521 = vmatmul.mubr.f32.gmra.mrb[0].mxu0 %v720
        %v1522 = vpop.f32.mrb[0].mxu0
        %v1523 = vadd.f32 0.0, %v1522
        %v1524 = vpop.f32.mrb[0].mxu0
        %1525 = vmatprep.mubr.f32.mxu0 0.0
        %1526 = vmatmul.mubr.f32.gmra.mrb[0].mxu0 %v722
        %v1527 = vpop.f32.mrb[0].mxu0
        %v1528 = vadd.f32 0.0, %v1527
        %v1529 = vpop.f32.mrb[0].mxu0
        %1530 = vmatprep.mubr.f32.mxu0 0.0
        %1531 = vmatmul.mubr.f32.gmra.mrb[0].mxu0 %v724
        %v1532 = vpop.f32.mrb[0].mxu0
        %v1533 = vadd.f32 0.0, %v1532
        %v1534 = vpop.f32.mrb[0].mxu0
        %1535 = vmatprep.mubr.f32.mxu0 0.0
        %1536 = vmatmul.mubr.f32.gmra.mrb[0].mxu0 %v726
        %v1537 = vpop.f32.mrb[0].mxu0
        %v1538 = vadd.f32 0.0, %v1537
        %v1539 = vpop.f32.mrb[0].mxu0
        %1540 = vmatprep.mubr.f32.mxu0 0.0
        %1541 = vmatmul.mubr.f32.gmra.mrb[0].mxu0 %v728
        %v1542 = vpop.f32.mrb[0].mxu0
        %v1543 = vadd.f32 0.0, %v1542
        %v1544 = vpop.f32.mrb[0].mxu0
        %1545 = vmatprep.mubr.f32.mxu0 0.0
        %1546 = vmatmul.mubr.f32.gmra.mrb[0].mxu0 %v730
        %v1547 = vpop.f32.mrb[0].mxu0
        %v1548 = vadd.f32 0.0, %v1547
        %v1549 = vpop.f32.mrb[0].mxu0
        %1550 = vmatprep.mubr.f32.mxu0 0.0
        %1551 = vmatmul.mubr.f32.gmra.mrb[0].mxu0 %v732
        %v1552 = vpop.f32.mrb[0].mxu0
        %v1553 = vadd.f32 0.0, %v1552
        %v1554 = vpop.f32.mrb[0].mxu0
        %1555 = vmatprep.mubr.f32.mxu0 0.0
        %1556 = vmatmul.mubr.f32.gmra.mrb[0].mxu0 %v734
        %v1557 = vpop.f32.mrb[0].mxu0
        %v1558 = vadd.f32 0.0, %v1557
        %v1559 = vpop.f32.mrb[0].mxu0
        %1560 = vmatprep.mubr.f32.mxu0 0.0
        %1561 = vmatmul.mubr.f32.gmra.mrb[0].mxu0 %v736
        %v1562 = vpop.f32.mrb[0].mxu0
        %v1563 = vadd.f32 0.0, %v1562
        %v1564 = vpop.f32.mrb[0].mxu0
        %1565 = vmatprep.mubr.f32.mxu0 0.0
        %1566 = vmatmul.mubr.f32.gmra.mrb[0].mxu0 %v738
        %v1567 = vpop.f32.mrb[0].mxu0
        %v1568 = vadd.f32 0.0, %v1567
        %v1569 = vpop.f32.mrb[0].mxu0
        %1570 = vmatprep.mubr.f32.mxu0 0.0
        %1571 = vmatmul.mubr.f32.gmra.mrb[0].mxu0 %v740
        %v1572 = vpop.f32.mrb[0].mxu0
        %v1573 = vadd.f32 0.0, %v1572
        %v1574 = vpop.f32.mrb[0].mxu0
        %1575 = vmatprep.mubr.f32.mxu0 0.0
        %1576 = vmatmul.mubr.f32.gmra.mrb[0].mxu0 %v742
        %v1577 = vpop.f32.mrb[0].mxu0
        %v1578 = vadd.f32 0.0, %v1577
        %v1579 = vpop.f32.mrb[0].mxu0
        %1580 = vmatprep.mubr.f32.mxu0 0.0
        %1581 = vmatmul.mubr.f32.gmra.mrb[0].mxu0 %v744
        %v1582 = vpop.f32.mrb[0].mxu0
        %v1583 = vadd.f32 0.0, %v1582
        %v1584 = vpop.f32.mrb[0].mxu0
        %1585 = vmatprep.mubr.f32.mxu0 0.0
        %1586 = vmatmul.mubr.f32.gmra.mrb[0].mxu0 %v746
        %v1587 = vpop.f32.mrb[0].mxu0
        %v1588 = vadd.f32 0.0, %v1587
        %v1589 = vpop.f32.mrb[0].mxu0
        %1590 = vmatprep.mubr.f32.mxu0 0.0
        %1591 = vmatmul.mubr.f32.gmra.mrb[0].mxu0 %v748
        %v1592 = vpop.f32.mrb[0].mxu0
        %v1593 = vadd.f32 0.0, %v1592
        %v1594 = vpop.f32.mrb[0].mxu0
        %1595 = vmatprep.mubr.f32.mxu0 0.0
        %1596 = vmatmul.mubr.f32.gmra.mrb[0].mxu0 %v750
        %v1597 = vpop.f32.mrb[0].mxu0
        %v1598 = vadd.f32 0.0, %v1597
        %v1599 = vpop.f32.mrb[0].mxu0
        %1600 = vmatprep.mubr.f32.mxu0 0.0
        %1601 = vmatmul.mubr.f32.gmra.mrb[0].mxu0 %v752
        %v1602 = vpop.f32.mrb[0].mxu0
        %v1603 = vadd.f32 0.0, %v1602
        %v1604 = vpop.f32.mrb[0].mxu0
        %1605 = vmatprep.mubr.f32.mxu0 0.0
        %1606 = vmatmul.mubr.f32.gmra.mrb[0].mxu0 %v754
        %v1607 = vpop.f32.mrb[0].mxu0
        %v1608 = vadd.f32 0.0, %v1607
        %v1609 = vpop.f32.mrb[0].mxu0
        %1610 = vmatprep.mubr.f32.mxu0 0.0
        %1611 = vmatmul.mubr.f32.gmra.mrb[0].mxu0 %v756
        %v1612 = vpop.f32.mrb[0].mxu0
        %v1613 = vadd.f32 0.0, %v1612
        %v1614 = vpop.f32.mrb[0].mxu0
        %1615 = vmatprep.mubr.f32.mxu0 0.0
        %1616 = vmatmul.mubr.f32.gmra.mrb[0].mxu0 %v758
        %v1617 = vpop.f32.mrb[0].mxu0
        %v1618 = vadd.f32 0.0, %v1617
        %v1619 = vpop.f32.mrb[0].mxu0
        %1620 = vmatprep.mubr.f32.mxu0 0.0
        %1621 = vmatmul.mubr.f32.gmra.mrb[0].mxu0 %v1398
        %v1622 = vpop.f32.mrb[0].mxu0
        %v1623 = vadd.f32 0.0, %v1622
        %v1624 = vpop.f32.mrb[0].mxu0
        %1625 = vmatprep.mubr.f32.mxu0 0.0
        %1626 = vmatmul.mubr.f32.gmra.mrb[0].mxu0 %v1401
        %v1627 = vpop.f32.mrb[0].mxu0
        %v1628 = vadd.f32 0.0, %v1627
        %v1629 = vpop.f32.mrb[0].mxu0
        %1630 = vdwg.mxu0
        %v1631 = vadd.f32 %v1363, %v1473
        %v1632 = vadd.f32 %v1364, %v1478
        %v1633 = vadd.f32 %v1365, %v1483
        %v1634 = vadd.f32 %v1366, %v1488
        %v1635 = vadd.f32 %v1367, %v1493
        %v1636 = vadd.f32 %v1368, %v1498
        %v1637 = vadd.f32 %v1369, %v1503
        %v1638 = vadd.f32 %v1370, %v1508
        %v1639 = vadd.f32 %v1371, %v1513
        %v1640 = vadd.f32 %v1372, %v1518
        %v1641 = vadd.f32 %v1373, %v1523
        %v1642 = vadd.f32 %v1374, %v1528
        %v1643 = vadd.f32 %v1375, %v1533
        %v1644 = vadd.f32 %v1376, %v1538
        %v1645 = vadd.f32 %v1377, %v1543
        %v1646 = vadd.f32 %v1378, %v1548
        %v1647 = vadd.f32 %v1379, %v1553
        %v1648 = vadd.f32 %v1380, %v1558
        %v1649 = vadd.f32 %v1381, %v1563
        %v1650 = vadd.f32 %v1382, %v1568
        %v1651 = vadd.f32 %v1383, %v1573
        %v1652 = vadd.f32 %v1384, %v1578
        %v1653 = vadd.f32 %v1385, %v1583
        %v1654 = vadd.f32 %v1386, %v1588
        %v1655 = vadd.f32 %v1387, %v1593
        %v1656 = vadd.f32 %v1388, %v1598
        %v1657 = vadd.f32 %v1389, %v1603
        %v1658 = vadd.f32 %v1390, %v1608
        %v1659 = vadd.f32 %v1391, %v1613
        %v1660 = vadd.f32 %v1392, %v1618
        %v1661 = vadd.f32 %v1393, %v1623
        %v1662 = vadd.f32 %v1394, %v1628
        %v1664 = vrot.slane %v264, 1
        %v1665 = vrot.slane %v265, 1
        %v1666 = vsel %vm319, %v1664, %v1665
        %v1667 = vrot.slane %v266, 1
        %v1668 = vsel %vm319, %v1665, %v1667
        %s1669 = scalar_lea.vmem [#allocation5], 16
        %v1670 = vld [vmem:[%s1669] sm:$0xf]
        %v1671 = vsel %vm402, %v1666, 0
        %v1673 = vsel %vm402, %v1668, 0
        %v1676 = vsel %vm467, %v1670, 0
        %1678 = vmatprep.subr.mxu0 0.0
        %1679 = vmatpush1.msra.mxu0 %v1676
        %1680 = vmatprep.subr.mxu0 0.0
        %1681 = vmatpush1.msra.mxu0 0.0
        %1682 = vmatprep.subr.mxu0 0.0
        %1683 = vmatpush1.msra.mxu0 0.0
        %1684 = vmatprep.subr.mxu0 0.0
        %1685 = vmatpush1.msra.mxu0 0.0
        %1686 = vmatprep.subr.mxu0 0.0
        %1687 = vmatpush1.msra.mxu0 0.0
        %1688 = vmatprep.subr.mxu0 0.0
        %1689 = vmatpush1.msra.mxu0 0.0
        %1690 = vmatprep.subr.mxu0 0.0
        %1691 = vmatpush1.msra.mxu0 0.0
        %1692 = vmatprep.subr.mxu0 0.0
        %1693 = vmatpush1.msra.mxu0 0.0
        %1694 = vmatprep.subr.mxu0 0.0
        %1695 = vmatpush1.msra.mxu0 0.0
        %1696 = vmatprep.subr.mxu0 0.0
        %1697 = vmatpush1.msra.mxu0 0.0
        %1698 = vmatprep.subr.mxu0 0.0
        %1699 = vmatpush1.msra.mxu0 0.0
        %1700 = vmatprep.subr.mxu0 0.0
        %1701 = vmatpush1.msra.mxu0 0.0
        %1702 = vmatprep.subr.mxu0 0.0
        %1703 = vmatpush1.msra.mxu0 0.0
        %1704 = vmatprep.subr.mxu0 0.0
        %1705 = vmatpush1.msra.mxu0 0.0
        %1706 = vmatprep.subr.mxu0 0.0
        %1707 = vmatpush1.msra.mxu0 0.0
        %1708 = vmatprep.subr.mxu0 0.0
        %1709 = vmatpush1.msra.mxu0 0.0
        %1710 = vmatprep.subr.mxu0 0.0
        %1711 = vmatpush1.msra.mxu0 0.0
        %1712 = vmatprep.subr.mxu0 0.0
        %1713 = vmatpush1.msra.mxu0 0.0
        %1714 = vmatprep.subr.mxu0 0.0
        %1715 = vmatpush1.msra.mxu0 0.0
        %1716 = vmatprep.subr.mxu0 0.0
        %1717 = vmatpush1.msra.mxu0 0.0
        %1718 = vmatprep.subr.mxu0 0.0
        %1719 = vmatpush1.msra.mxu0 0.0
        %1720 = vmatprep.subr.mxu0 0.0
        %1721 = vmatpush1.msra.mxu0 0.0
        %1722 = vmatprep.subr.mxu0 0.0
        %1723 = vmatpush1.msra.mxu0 0.0
        %1724 = vmatprep.subr.mxu0 0.0
        %1725 = vmatpush1.msra.mxu0 0.0
        %1726 = vmatprep.subr.mxu0 0.0
        %1727 = vmatpush1.msra.mxu0 0.0
        %1728 = vmatprep.subr.mxu0 0.0
        %1729 = vmatpush1.msra.mxu0 0.0
        %1730 = vmatprep.subr.mxu0 0.0
        %1731 = vmatpush1.msra.mxu0 0.0
        %1732 = vmatprep.subr.mxu0 0.0
        %1733 = vmatpush1.msra.mxu0 0.0
        %1734 = vmatprep.subr.mxu0 0.0
        %1735 = vmatpush1.msra.mxu0 0.0
        %1736 = vmatprep.subr.mxu0 0.0
        %1737 = vmatpush1.msra.mxu0 0.0
        %1738 = vmatprep.subr.mxu0 0.0
        %1739 = vmatpush1.msra.mxu0 0.0
        %1740 = vmatprep.subr.mxu0 0.0
        %1741 = vmatpush1.msra.mxu0 0.0
        %1742 = vmatprep.mubr.f32.mxu0 0.0
        %1743 = vmatmul.mubr.f32.gmra.mrb[0].mxu0 %v407
        %v1744 = vpop.f32.mrb[0].mxu0
        %v1745 = vadd.f32 0.0, %v1744
        %v1746 = vpop.f32.mrb[0].mxu0
        %1747 = vmatprep.mubr.f32.mxu0 0.0
        %1748 = vmatmul.mubr.f32.gmra.mrb[0].mxu0 %v409
        %v1749 = vpop.f32.mrb[0].mxu0
        %v1750 = vadd.f32 0.0, %v1749
        %v1751 = vpop.f32.mrb[0].mxu0
        %1752 = vmatprep.mubr.f32.mxu0 0.0
        %1753 = vmatmul.mubr.f32.gmra.mrb[0].mxu0 %v411
        %v1754 = vpop.f32.mrb[0].mxu0
        %v1755 = vadd.f32 0.0, %v1754
        %v1756 = vpop.f32.mrb[0].mxu0
        %1757 = vmatprep.mubr.f32.mxu0 0.0
        %1758 = vmatmul.mubr.f32.gmra.mrb[0].mxu0 %v413
        %v1759 = vpop.f32.mrb[0].mxu0
        %v1760 = vadd.f32 0.0, %v1759
        %v1761 = vpop.f32.mrb[0].mxu0
        %1762 = vmatprep.mubr.f32.mxu0 0.0
        %1763 = vmatmul.mubr.f32.gmra.mrb[0].mxu0 %v415
        %v1764 = vpop.f32.mrb[0].mxu0
        %v1765 = vadd.f32 0.0, %v1764
        %v1766 = vpop.f32.mrb[0].mxu0
        %1767 = vmatprep.mubr.f32.mxu0 0.0
        %1768 = vmatmul.mubr.f32.gmra.mrb[0].mxu0 %v417
        %v1769 = vpop.f32.mrb[0].mxu0
        %v1770 = vadd.f32 0.0, %v1769
        %v1771 = vpop.f32.mrb[0].mxu0
        %1772 = vmatprep.mubr.f32.mxu0 0.0
        %1773 = vmatmul.mubr.f32.gmra.mrb[0].mxu0 %v419
        %v1774 = vpop.f32.mrb[0].mxu0
        %v1775 = vadd.f32 0.0, %v1774
        %v1776 = vpop.f32.mrb[0].mxu0
        %1777 = vmatprep.mubr.f32.mxu0 0.0
        %1778 = vmatmul.mubr.f32.gmra.mrb[0].mxu0 %v421
        %v1779 = vpop.f32.mrb[0].mxu0
        %v1780 = vadd.f32 0.0, %v1779
        %v1781 = vpop.f32.mrb[0].mxu0
        %1782 = vmatprep.mubr.f32.mxu0 0.0
        %1783 = vmatmul.mubr.f32.gmra.mrb[0].mxu0 %v423
        %v1784 = vpop.f32.mrb[0].mxu0
        %v1785 = vadd.f32 0.0, %v1784
        %v1786 = vpop.f32.mrb[0].mxu0
        %1787 = vmatprep.mubr.f32.mxu0 0.0
        %1788 = vmatmul.mubr.f32.gmra.mrb[0].mxu0 %v425
        %v1789 = vpop.f32.mrb[0].mxu0
        %v1790 = vadd.f32 0.0, %v1789
        %v1791 = vpop.f32.mrb[0].mxu0
        %1792 = vmatprep.mubr.f32.mxu0 0.0
        %1793 = vmatmul.mubr.f32.gmra.mrb[0].mxu0 %v427
        %v1794 = vpop.f32.mrb[0].mxu0
        %v1795 = vadd.f32 0.0, %v1794
        %v1796 = vpop.f32.mrb[0].mxu0
        %1797 = vmatprep.mubr.f32.mxu0 0.0
        %1798 = vmatmul.mubr.f32.gmra.mrb[0].mxu0 %v429
        %v1799 = vpop.f32.mrb[0].mxu0
        %v1800 = vadd.f32 0.0, %v1799
        %v1801 = vpop.f32.mrb[0].mxu0
        %1802 = vmatprep.mubr.f32.mxu0 0.0
        %1803 = vmatmul.mubr.f32.gmra.mrb[0].mxu0 %v431
        %v1804 = vpop.f32.mrb[0].mxu0
        %v1805 = vadd.f32 0.0, %v1804
        %v1806 = vpop.f32.mrb[0].mxu0
        %1807 = vmatprep.mubr.f32.mxu0 0.0
        %1808 = vmatmul.mubr.f32.gmra.mrb[0].mxu0 %v433
        %v1809 = vpop.f32.mrb[0].mxu0
        %v1810 = vadd.f32 0.0, %v1809
        %v1811 = vpop.f32.mrb[0].mxu0
        %1812 = vmatprep.mubr.f32.mxu0 0.0
        %1813 = vmatmul.mubr.f32.gmra.mrb[0].mxu0 %v435
        %v1814 = vpop.f32.mrb[0].mxu0
        %v1815 = vadd.f32 0.0, %v1814
        %v1816 = vpop.f32.mrb[0].mxu0
        %1817 = vmatprep.mubr.f32.mxu0 0.0
        %1818 = vmatmul.mubr.f32.gmra.mrb[0].mxu0 %v437
        %v1819 = vpop.f32.mrb[0].mxu0
        %v1820 = vadd.f32 0.0, %v1819
        %v1821 = vpop.f32.mrb[0].mxu0
        %1822 = vmatprep.mubr.f32.mxu0 0.0
        %1823 = vmatmul.mubr.f32.gmra.mrb[0].mxu0 %v439
        %v1824 = vpop.f32.mrb[0].mxu0
        %v1825 = vadd.f32 0.0, %v1824
        %v1826 = vpop.f32.mrb[0].mxu0
        %1827 = vmatprep.mubr.f32.mxu0 0.0
        %1828 = vmatmul.mubr.f32.gmra.mrb[0].mxu0 %v441
        %v1829 = vpop.f32.mrb[0].mxu0
        %v1830 = vadd.f32 0.0, %v1829
        %v1831 = vpop.f32.mrb[0].mxu0
        %1832 = vmatprep.mubr.f32.mxu0 0.0
        %1833 = vmatmul.mubr.f32.gmra.mrb[0].mxu0 %v443
        %v1834 = vpop.f32.mrb[0].mxu0
        %v1835 = vadd.f32 0.0, %v1834
        %v1836 = vpop.f32.mrb[0].mxu0
        %1837 = vmatprep.mubr.f32.mxu0 0.0
        %1838 = vmatmul.mubr.f32.gmra.mrb[0].mxu0 %v445
        %v1839 = vpop.f32.mrb[0].mxu0
        %v1840 = vadd.f32 0.0, %v1839
        %v1841 = vpop.f32.mrb[0].mxu0
        %1842 = vmatprep.mubr.f32.mxu0 0.0
        %1843 = vmatmul.mubr.f32.gmra.mrb[0].mxu0 %v447
        %v1844 = vpop.f32.mrb[0].mxu0
        %v1845 = vadd.f32 0.0, %v1844
        %v1846 = vpop.f32.mrb[0].mxu0
        %1847 = vmatprep.mubr.f32.mxu0 0.0
        %1848 = vmatmul.mubr.f32.gmra.mrb[0].mxu0 %v449
        %v1849 = vpop.f32.mrb[0].mxu0
        %v1850 = vadd.f32 0.0, %v1849
        %v1851 = vpop.f32.mrb[0].mxu0
        %1852 = vmatprep.mubr.f32.mxu0 0.0
        %1853 = vmatmul.mubr.f32.gmra.mrb[0].mxu0 %v451
        %v1854 = vpop.f32.mrb[0].mxu0
        %v1855 = vadd.f32 0.0, %v1854
        %v1856 = vpop.f32.mrb[0].mxu0
        %1857 = vmatprep.mubr.f32.mxu0 0.0
        %1858 = vmatmul.mubr.f32.gmra.mrb[0].mxu0 %v453
        %v1859 = vpop.f32.mrb[0].mxu0
        %v1860 = vadd.f32 0.0, %v1859
        %v1861 = vpop.f32.mrb[0].mxu0
        %1862 = vmatprep.mubr.f32.mxu0 0.0
        %1863 = vmatmul.mubr.f32.gmra.mrb[0].mxu0 %v455
        %v1864 = vpop.f32.mrb[0].mxu0
        %v1865 = vadd.f32 0.0, %v1864
        %v1866 = vpop.f32.mrb[0].mxu0
        %1867 = vmatprep.mubr.f32.mxu0 0.0
        %1868 = vmatmul.mubr.f32.gmra.mrb[0].mxu0 %v457
        %v1869 = vpop.f32.mrb[0].mxu0
        %v1870 = vadd.f32 0.0, %v1869
        %v1871 = vpop.f32.mrb[0].mxu0
        %1872 = vmatprep.mubr.f32.mxu0 0.0
        %1873 = vmatmul.mubr.f32.gmra.mrb[0].mxu0 %v459
        %v1874 = vpop.f32.mrb[0].mxu0
        %v1875 = vadd.f32 0.0, %v1874
        %v1876 = vpop.f32.mrb[0].mxu0
        %1877 = vmatprep.mubr.f32.mxu0 0.0
        %1878 = vmatmul.mubr.f32.gmra.mrb[0].mxu0 %v461
        %v1879 = vpop.f32.mrb[0].mxu0
        %v1880 = vadd.f32 0.0, %v1879
        %v1881 = vpop.f32.mrb[0].mxu0
        %1882 = vmatprep.mubr.f32.mxu0 0.0
        %1883 = vmatmul.mubr.f32.gmra.mrb[0].mxu0 %v463
        %v1884 = vpop.f32.mrb[0].mxu0
        %v1885 = vadd.f32 0.0, %v1884
        %v1886 = vpop.f32.mrb[0].mxu0
        %1887 = vmatprep.mubr.f32.mxu0 0.0
        %1888 = vmatmul.mubr.f32.gmra.mrb[0].mxu0 %v465
        %v1889 = vpop.f32.mrb[0].mxu0
        %v1890 = vadd.f32 0.0, %v1889
        %v1891 = vpop.f32.mrb[0].mxu0
        %1892 = vmatprep.mubr.f32.mxu0 0.0
        %1893 = vmatmul.mubr.f32.gmra.mrb[0].mxu0 %v1671
        %v1894 = vpop.f32.mrb[0].mxu0
        %v1895 = vadd.f32 0.0, %v1894
        %v1896 = vpop.f32.mrb[0].mxu0
        %1897 = vmatprep.mubr.f32.mxu0 0.0
        %1898 = vmatmul.mubr.f32.gmra.mrb[0].mxu0 %v1673
        %v1899 = vpop.f32.mrb[0].mxu0
        %v1900 = vadd.f32 0.0, %v1899
        %v1901 = vpop.f32.mrb[0].mxu0
        %1902 = vdwg.mxu0
        %v1903 = vadd.f32 %v1631, %v1745
        %v1904 = vadd.f32 %v1632, %v1750
        %v1905 = vadd.f32 %v1633, %v1755
        %v1906 = vadd.f32 %v1634, %v1760
        %v1907 = vadd.f32 %v1635, %v1765
        %v1908 = vadd.f32 %v1636, %v1770
        %v1909 = vadd.f32 %v1637, %v1775
        %v1910 = vadd.f32 %v1638, %v1780
        %v1911 = vadd.f32 %v1639, %v1785
        %v1912 = vadd.f32 %v1640, %v1790
        %v1913 = vadd.f32 %v1641, %v1795
        %v1914 = vadd.f32 %v1642, %v1800
        %v1915 = vadd.f32 %v1643, %v1805
        %v1916 = vadd.f32 %v1644, %v1810
        %v1917 = vadd.f32 %v1645, %v1815
        %v1918 = vadd.f32 %v1646, %v1820
        %v1919 = vadd.f32 %v1647, %v1825
        %v1920 = vadd.f32 %v1648, %v1830
        %v1921 = vadd.f32 %v1649, %v1835
        %v1922 = vadd.f32 %v1650, %v1840
        %v1923 = vadd.f32 %v1651, %v1845
        %v1924 = vadd.f32 %v1652, %v1850
        %v1925 = vadd.f32 %v1653, %v1855
        %v1926 = vadd.f32 %v1654, %v1860
        %v1927 = vadd.f32 %v1655, %v1865
        %v1928 = vadd.f32 %v1656, %v1870
        %v1929 = vadd.f32 %v1657, %v1875
        %v1930 = vadd.f32 %v1658, %v1880
        %v1931 = vadd.f32 %v1659, %v1885
        %v1932 = vadd.f32 %v1660, %v1890
        %v1933 = vadd.f32 %v1661, %v1895
        %v1934 = vadd.f32 %v1662, %v1900
        %v1935 = vrot.slane %v264, 2
        %v1936 = vrot.slane %v265, 2
        %v1937 = vsel %vm988, %v1935, %v1936
        %v1938 = vrot.slane %v266, 2
        %v1939 = vsel %vm988, %v1936, %v1938
        %s1940 = scalar_lea.vmem [#allocation5], 20
        %v1941 = vld [vmem:[%s1940] sm:$0xf]
        %v1942 = vsel %vm402, %v1937, 0
        %v1944 = vsel %vm402, %v1939, 0
        %v1947 = vsel %vm467, %v1941, 0
        %1949 = vmatprep.subr.mxu0 0.0
        %1950 = vmatpush1.msra.mxu0 %v1947
        %1951 = vmatprep.subr.mxu0 0.0
        %1952 = vmatpush1.msra.mxu0 0.0
        %1953 = vmatprep.subr.mxu0 0.0
        %1954 = vmatpush1.msra.mxu0 0.0
        %1955 = vmatprep.subr.mxu0 0.0
        %1956 = vmatpush1.msra.mxu0 0.0
        %1957 = vmatprep.subr.mxu0 0.0
        %1958 = vmatpush1.msra.mxu0 0.0
        %1959 = vmatprep.subr.mxu0 0.0
        %1960 = vmatpush1.msra.mxu0 0.0
        %1961 = vmatprep.subr.mxu0 0.0
        %1962 = vmatpush1.msra.mxu0 0.0
        %1963 = vmatprep.subr.mxu0 0.0
        %1964 = vmatpush1.msra.mxu0 0.0
        %1965 = vmatprep.subr.mxu0 0.0
        %1966 = vmatpush1.msra.mxu0 0.0
        %1967 = vmatprep.subr.mxu0 0.0
        %1968 = vmatpush1.msra.mxu0 0.0
        %1969 = vmatprep.subr.mxu0 0.0
        %1970 = vmatpush1.msra.mxu0 0.0
        %1971 = vmatprep.subr.mxu0 0.0
        %1972 = vmatpush1.msra.mxu0 0.0
        %1973 = vmatprep.subr.mxu0 0.0
        %1974 = vmatpush1.msra.mxu0 0.0
        %1975 = vmatprep.subr.mxu0 0.0
        %1976 = vmatpush1.msra.mxu0 0.0
        %1977 = vmatprep.subr.mxu0 0.0
        %1978 = vmatpush1.msra.mxu0 0.0
        %1979 = vmatprep.subr.mxu0 0.0
        %1980 = vmatpush1.msra.mxu0 0.0
        %1981 = vmatprep.subr.mxu0 0.0
        %1982 = vmatpush1.msra.mxu0 0.0
        %1983 = vmatprep.subr.mxu0 0.0
        %1984 = vmatpush1.msra.mxu0 0.0
        %1985 = vmatprep.subr.mxu0 0.0
        %1986 = vmatpush1.msra.mxu0 0.0
        %1987 = vmatprep.subr.mxu0 0.0
        %1988 = vmatpush1.msra.mxu0 0.0
        %1989 = vmatprep.subr.mxu0 0.0
        %1990 = vmatpush1.msra.mxu0 0.0
        %1991 = vmatprep.subr.mxu0 0.0
        %1992 = vmatpush1.msra.mxu0 0.0
        %1993 = vmatprep.subr.mxu0 0.0
        %1994 = vmatpush1.msra.mxu0 0.0
        %1995 = vmatprep.subr.mxu0 0.0
        %1996 = vmatpush1.msra.mxu0 0.0
        %1997 = vmatprep.subr.mxu0 0.0
        %1998 = vmatpush1.msra.mxu0 0.0
        %1999 = vmatprep.subr.mxu0 0.0
        %2000 = vmatpush1.msra.mxu0 0.0
        %2001 = vmatprep.subr.mxu0 0.0
        %2002 = vmatpush1.msra.mxu0 0.0
        %2003 = vmatprep.subr.mxu0 0.0
        %2004 = vmatpush1.msra.mxu0 0.0
        %2005 = vmatprep.subr.mxu0 0.0
        %2006 = vmatpush1.msra.mxu0 0.0
        %2007 = vmatprep.subr.mxu0 0.0
        %2008 = vmatpush1.msra.mxu0 0.0
        %2009 = vmatprep.subr.mxu0 0.0
        %2010 = vmatpush1.msra.mxu0 0.0
        %2011 = vmatprep.subr.mxu0 0.0
        %2012 = vmatpush1.msra.mxu0 0.0
        %2013 = vmatprep.mubr.f32.mxu0 0.0
        %2014 = vmatmul.mubr.f32.gmra.mrb[0].mxu0 %v1075
        %v2015 = vpop.f32.mrb[0].mxu0
        %v2016 = vadd.f32 0.0, %v2015
        %v2017 = vpop.f32.mrb[0].mxu0
        %2018 = vmatprep.mubr.f32.mxu0 0.0
        %2019 = vmatmul.mubr.f32.gmra.mrb[0].mxu0 %v1077
        %v2020 = vpop.f32.mrb[0].mxu0
        %v2021 = vadd.f32 0.0, %v2020
        %v2022 = vpop.f32.mrb[0].mxu0
        %2023 = vmatprep.mubr.f32.mxu0 0.0
        %2024 = vmatmul.mubr.f32.gmra.mrb[0].mxu0 %v1079
        %v2025 = vpop.f32.mrb[0].mxu0
        %v2026 = vadd.f32 0.0, %v2025
        %v2027 = vpop.f32.mrb[0].mxu0
        %2028 = vmatprep.mubr.f32.mxu0 0.0
        %2029 = vmatmul.mubr.f32.gmra.mrb[0].mxu0 %v1081
        %v2030 = vpop.f32.mrb[0].mxu0
        %v2031 = vadd.f32 0.0, %v2030
        %v2032 = vpop.f32.mrb[0].mxu0
        %2033 = vmatprep.mubr.f32.mxu0 0.0
        %2034 = vmatmul.mubr.f32.gmra.mrb[0].mxu0 %v1083
        %v2035 = vpop.f32.mrb[0].mxu0
        %v2036 = vadd.f32 0.0, %v2035
        %v2037 = vpop.f32.mrb[0].mxu0
        %2038 = vmatprep.mubr.f32.mxu0 0.0
        %2039 = vmatmul.mubr.f32.gmra.mrb[0].mxu0 %v1085
        %v2040 = vpop.f32.mrb[0].mxu0
        %v2041 = vadd.f32 0.0, %v2040
        %v2042 = vpop.f32.mrb[0].mxu0
        %2043 = vmatprep.mubr.f32.mxu0 0.0
        %2044 = vmatmul.mubr.f32.gmra.mrb[0].mxu0 %v1087
        %v2045 = vpop.f32.mrb[0].mxu0
        %v2046 = vadd.f32 0.0, %v2045
        %v2047 = vpop.f32.mrb[0].mxu0
        %2048 = vmatprep.mubr.f32.mxu0 0.0
        %2049 = vmatmul.mubr.f32.gmra.mrb[0].mxu0 %v1089
        %v2050 = vpop.f32.mrb[0].mxu0
        %v2051 = vadd.f32 0.0, %v2050
        %v2052 = vpop.f32.mrb[0].mxu0
        %2053 = vmatprep.mubr.f32.mxu0 0.0
        %2054 = vmatmul.mubr.f32.gmra.mrb[0].mxu0 %v1091
        %v2055 = vpop.f32.mrb[0].mxu0
        %v2056 = vadd.f32 0.0, %v2055
        %v2057 = vpop.f32.mrb[0].mxu0
        %2058 = vmatprep.mubr.f32.mxu0 0.0
        %2059 = vmatmul.mubr.f32.gmra.mrb[0].mxu0 %v1093
        %v2060 = vpop.f32.mrb[0].mxu0
        %v2061 = vadd.f32 0.0, %v2060
        %v2062 = vpop.f32.mrb[0].mxu0
        %2063 = vmatprep.mubr.f32.mxu0 0.0
        %2064 = vmatmul.mubr.f32.gmra.mrb[0].mxu0 %v1095
        %v2065 = vpop.f32.mrb[0].mxu0
        %v2066 = vadd.f32 0.0, %v2065
        %v2067 = vpop.f32.mrb[0].mxu0
        %2068 = vmatprep.mubr.f32.mxu0 0.0
        %2069 = vmatmul.mubr.f32.gmra.mrb[0].mxu0 %v1097
        %v2070 = vpop.f32.mrb[0].mxu0
        %v2071 = vadd.f32 0.0, %v2070
        %v2072 = vpop.f32.mrb[0].mxu0
        %2073 = vmatprep.mubr.f32.mxu0 0.0
        %2074 = vmatmul.mubr.f32.gmra.mrb[0].mxu0 %v1099
        %v2075 = vpop.f32.mrb[0].mxu0
        %v2076 = vadd.f32 0.0, %v2075
        %v2077 = vpop.f32.mrb[0].mxu0
        %2078 = vmatprep.mubr.f32.mxu0 0.0
        %2079 = vmatmul.mubr.f32.gmra.mrb[0].mxu0 %v1101
        %v2080 = vpop.f32.mrb[0].mxu0
        %v2081 = vadd.f32 0.0, %v2080
        %v2082 = vpop.f32.mrb[0].mxu0
        %2083 = vmatprep.mubr.f32.mxu0 0.0
        %2084 = vmatmul.mubr.f32.gmra.mrb[0].mxu0 %v1103
        %v2085 = vpop.f32.mrb[0].mxu0
        %v2086 = vadd.f32 0.0, %v2085
        %v2087 = vpop.f32.mrb[0].mxu0
        %2088 = vmatprep.mubr.f32.mxu0 0.0
        %2089 = vmatmul.mubr.f32.gmra.mrb[0].mxu0 %v1105
        %v2090 = vpop.f32.mrb[0].mxu0
        %v2091 = vadd.f32 0.0, %v2090
        %v2092 = vpop.f32.mrb[0].mxu0
        %2093 = vmatprep.mubr.f32.mxu0 0.0
        %2094 = vmatmul.mubr.f32.gmra.mrb[0].mxu0 %v1107
        %v2095 = vpop.f32.mrb[0].mxu0
        %v2096 = vadd.f32 0.0, %v2095
        %v2097 = vpop.f32.mrb[0].mxu0
        %2098 = vmatprep.mubr.f32.mxu0 0.0
        %2099 = vmatmul.mubr.f32.gmra.mrb[0].mxu0 %v1109
        %v2100 = vpop.f32.mrb[0].mxu0
        %v2101 = vadd.f32 0.0, %v2100
        %v2102 = vpop.f32.mrb[0].mxu0
        %2103 = vmatprep.mubr.f32.mxu0 0.0
        %2104 = vmatmul.mubr.f32.gmra.mrb[0].mxu0 %v1111
        %v2105 = vpop.f32.mrb[0].mxu0
        %v2106 = vadd.f32 0.0, %v2105
        %v2107 = vpop.f32.mrb[0].mxu0
        %2108 = vmatprep.mubr.f32.mxu0 0.0
        %2109 = vmatmul.mubr.f32.gmra.mrb[0].mxu0 %v1113
        %v2110 = vpop.f32.mrb[0].mxu0
        %v2111 = vadd.f32 0.0, %v2110
        %v2112 = vpop.f32.mrb[0].mxu0
        %2113 = vmatprep.mubr.f32.mxu0 0.0
        %2114 = vmatmul.mubr.f32.gmra.mrb[0].mxu0 %v1115
        %v2115 = vpop.f32.mrb[0].mxu0
        %v2116 = vadd.f32 0.0, %v2115
        %v2117 = vpop.f32.mrb[0].mxu0
        %2118 = vmatprep.mubr.f32.mxu0 0.0
        %2119 = vmatmul.mubr.f32.gmra.mrb[0].mxu0 %v1117
        %v2120 = vpop.f32.mrb[0].mxu0
        %v2121 = vadd.f32 0.0, %v2120
        %v2122 = vpop.f32.mrb[0].mxu0
        %2123 = vmatprep.mubr.f32.mxu0 0.0
        %2124 = vmatmul.mubr.f32.gmra.mrb[0].mxu0 %v1119
        %v2125 = vpop.f32.mrb[0].mxu0
        %v2126 = vadd.f32 0.0, %v2125
        %v2127 = vpop.f32.mrb[0].mxu0
        %2128 = vmatprep.mubr.f32.mxu0 0.0
        %2129 = vmatmul.mubr.f32.gmra.mrb[0].mxu0 %v1121
        %v2130 = vpop.f32.mrb[0].mxu0
        %v2131 = vadd.f32 0.0, %v2130
        %v2132 = vpop.f32.mrb[0].mxu0
        %2133 = vmatprep.mubr.f32.mxu0 0.0
        %2134 = vmatmul.mubr.f32.gmra.mrb[0].mxu0 %v1123
        %v2135 = vpop.f32.mrb[0].mxu0
        %v2136 = vadd.f32 0.0, %v2135
        %v2137 = vpop.f32.mrb[0].mxu0
        %2138 = vmatprep.mubr.f32.mxu0 0.0
        %2139 = vmatmul.mubr.f32.gmra.mrb[0].mxu0 %v1125
        %v2140 = vpop.f32.mrb[0].mxu0
        %v2141 = vadd.f32 0.0, %v2140
        %v2142 = vpop.f32.mrb[0].mxu0
        %2143 = vmatprep.mubr.f32.mxu0 0.0
        %2144 = vmatmul.mubr.f32.gmra.mrb[0].mxu0 %v1127
        %v2145 = vpop.f32.mrb[0].mxu0
        %v2146 = vadd.f32 0.0, %v2145
        %v2147 = vpop.f32.mrb[0].mxu0
        %2148 = vmatprep.mubr.f32.mxu0 0.0
        %2149 = vmatmul.mubr.f32.gmra.mrb[0].mxu0 %v1129
        %v2150 = vpop.f32.mrb[0].mxu0
        %v2151 = vadd.f32 0.0, %v2150
        %v2152 = vpop.f32.mrb[0].mxu0
        %2153 = vmatprep.mubr.f32.mxu0 0.0
        %2154 = vmatmul.mubr.f32.gmra.mrb[0].mxu0 %v1131
        %v2155 = vpop.f32.mrb[0].mxu0
        %v2156 = vadd.f32 0.0, %v2155
        %v2157 = vpop.f32.mrb[0].mxu0
        %2158 = vmatprep.mubr.f32.mxu0 0.0
        %2159 = vmatmul.mubr.f32.gmra.mrb[0].mxu0 %v1133
        %v2160 = vpop.f32.mrb[0].mxu0
        %v2161 = vadd.f32 0.0, %v2160
        %v2162 = vpop.f32.mrb[0].mxu0
        %2163 = vmatprep.mubr.f32.mxu0 0.0
        %2164 = vmatmul.mubr.f32.gmra.mrb[0].mxu0 %v1942
        %v2165 = vpop.f32.mrb[0].mxu0
        %v2166 = vadd.f32 0.0, %v2165
        %v2167 = vpop.f32.mrb[0].mxu0
        %2168 = vmatprep.mubr.f32.mxu0 0.0
        %2169 = vmatmul.mubr.f32.gmra.mrb[0].mxu0 %v1944
        %v2170 = vpop.f32.mrb[0].mxu0
        %v2171 = vadd.f32 0.0, %v2170
        %v2172 = vpop.f32.mrb[0].mxu0
        %2173 = vdwg.mxu0
        %v2174 = vadd.f32 %v1903, %v2016
        %v2175 = vadd.f32 %v1904, %v2021
        %v2176 = vadd.f32 %v1905, %v2026
        %v2177 = vadd.f32 %v1906, %v2031
        %v2178 = vadd.f32 %v1907, %v2036
        %v2179 = vadd.f32 %v1908, %v2041
        %v2180 = vadd.f32 %v1909, %v2046
        %v2181 = vadd.f32 %v1910, %v2051
        %v2182 = vadd.f32 %v1911, %v2056
        %v2183 = vadd.f32 %v1912, %v2061
        %v2184 = vadd.f32 %v1913, %v2066
        %v2185 = vadd.f32 %v1914, %v2071
        %v2186 = vadd.f32 %v1915, %v2076
        %v2187 = vadd.f32 %v1916, %v2081
        %v2188 = vadd.f32 %v1917, %v2086
        %v2189 = vadd.f32 %v1918, %v2091
        %v2190 = vadd.f32 %v1919, %v2096
        %v2191 = vadd.f32 %v1920, %v2101
        %v2192 = vadd.f32 %v1921, %v2106
        %v2193 = vadd.f32 %v1922, %v2111
        %v2194 = vadd.f32 %v1923, %v2116
        %v2195 = vadd.f32 %v1924, %v2121
        %v2196 = vadd.f32 %v1925, %v2126
        %v2197 = vadd.f32 %v1926, %v2131
        %v2198 = vadd.f32 %v1927, %v2136
        %v2199 = vadd.f32 %v1928, %v2141
        %v2200 = vadd.f32 %v1929, %v2146
        %v2201 = vadd.f32 %v1930, %v2151
        %v2202 = vadd.f32 %v1931, %v2156
        %v2203 = vadd.f32 %v1932, %v2161
        %v2204 = vadd.f32 %v1933, %v2166
        %v2205 = vadd.f32 %v1934, %v2171
        %s2206 = scalar_lea.vmem [#allocation5], 24
        %v2207 = vld [vmem:[%s2206] sm:$0xf]
        %v2209 = vsel %vm402, %v267, 0
        %v2212 = vsel %vm402, %v268, 0
        %v2215 = vsel %vm467, %v2207, 0
        %2217 = vmatprep.subr.mxu0 0.0
        %2218 = vmatpush1.msra.mxu0 %v2215
        %2219 = vmatprep.subr.mxu0 0.0
        %2220 = vmatpush1.msra.mxu0 0.0
        %2221 = vmatprep.subr.mxu0 0.0
        %2222 = vmatpush1.msra.mxu0 0.0
        %2223 = vmatprep.subr.mxu0 0.0
        %2224 = vmatpush1.msra.mxu0 0.0
        %2225 = vmatprep.subr.mxu0 0.0
        %2226 = vmatpush1.msra.mxu0 0.0
        %2227 = vmatprep.subr.mxu0 0.0
        %2228 = vmatpush1.msra.mxu0 0.0
        %2229 = vmatprep.subr.mxu0 0.0
        %2230 = vmatpush1.msra.mxu0 0.0
        %2231 = vmatprep.subr.mxu0 0.0
        %2232 = vmatpush1.msra.mxu0 0.0
        %2233 = vmatprep.subr.mxu0 0.0
        %2234 = vmatpush1.msra.mxu0 0.0
        %2235 = vmatprep.subr.mxu0 0.0
        %2236 = vmatpush1.msra.mxu0 0.0
        %2237 = vmatprep.subr.mxu0 0.0
        %2238 = vmatpush1.msra.mxu0 0.0
        %2239 = vmatprep.subr.mxu0 0.0
        %2240 = vmatpush1.msra.mxu0 0.0
        %2241 = vmatprep.subr.mxu0 0.0
        %2242 = vmatpush1.msra.mxu0 0.0
        %2243 = vmatprep.subr.mxu0 0.0
        %2244 = vmatpush1.msra.mxu0 0.0
        %2245 = vmatprep.subr.mxu0 0.0
        %2246 = vmatpush1.msra.mxu0 0.0
        %2247 = vmatprep.subr.mxu0 0.0
        %2248 = vmatpush1.msra.mxu0 0.0
        %2249 = vmatprep.subr.mxu0 0.0
        %2250 = vmatpush1.msra.mxu0 0.0
        %2251 = vmatprep.subr.mxu0 0.0
        %2252 = vmatpush1.msra.mxu0 0.0
        %2253 = vmatprep.subr.mxu0 0.0
        %2254 = vmatpush1.msra.mxu0 0.0
        %2255 = vmatprep.subr.mxu0 0.0
        %2256 = vmatpush1.msra.mxu0 0.0
        %2257 = vmatprep.subr.mxu0 0.0
        %2258 = vmatpush1.msra.mxu0 0.0
        %2259 = vmatprep.subr.mxu0 0.0
        %2260 = vmatpush1.msra.mxu0 0.0
        %2261 = vmatprep.subr.mxu0 0.0
        %2262 = vmatpush1.msra.mxu0 0.0
        %2263 = vmatprep.subr.mxu0 0.0
        %2264 = vmatpush1.msra.mxu0 0.0
        %2265 = vmatprep.subr.mxu0 0.0
        %2266 = vmatpush1.msra.mxu0 0.0
        %2267 = vmatprep.subr.mxu0 0.0
        %2268 = vmatpush1.msra.mxu0 0.0
        %2269 = vmatprep.subr.mxu0 0.0
        %2270 = vmatpush1.msra.mxu0 0.0
        %2271 = vmatprep.subr.mxu0 0.0
        %2272 = vmatpush1.msra.mxu0 0.0
        %2273 = vmatprep.subr.mxu0 0.0
        %2274 = vmatpush1.msra.mxu0 0.0
        %2275 = vmatprep.subr.mxu0 0.0
        %2276 = vmatpush1.msra.mxu0 0.0
        %2277 = vmatprep.subr.mxu0 0.0
        %2278 = vmatpush1.msra.mxu0 0.0
        %2279 = vmatprep.subr.mxu0 0.0
        %2280 = vmatpush1.msra.mxu0 0.0
        %2281 = vmatprep.mubr.f32.mxu0 0.0
        %2282 = vmatmul.mubr.f32.gmra.mrb[0].mxu0 %v704
        %v2283 = vpop.f32.mrb[0].mxu0
        %v2284 = vadd.f32 0.0, %v2283
        %v2285 = vpop.f32.mrb[0].mxu0
        %2286 = vmatprep.mubr.f32.mxu0 0.0
        %2287 = vmatmul.mubr.f32.gmra.mrb[0].mxu0 %v706
        %v2288 = vpop.f32.mrb[0].mxu0
        %v2289 = vadd.f32 0.0, %v2288
        %v2290 = vpop.f32.mrb[0].mxu0
        %2291 = vmatprep.mubr.f32.mxu0 0.0
        %2292 = vmatmul.mubr.f32.gmra.mrb[0].mxu0 %v708
        %v2293 = vpop.f32.mrb[0].mxu0
        %v2294 = vadd.f32 0.0, %v2293
        %v2295 = vpop.f32.mrb[0].mxu0
        %2296 = vmatprep.mubr.f32.mxu0 0.0
        %2297 = vmatmul.mubr.f32.gmra.mrb[0].mxu0 %v710
        %v2298 = vpop.f32.mrb[0].mxu0
        %v2299 = vadd.f32 0.0, %v2298
        %v2300 = vpop.f32.mrb[0].mxu0
        %2301 = vmatprep.mubr.f32.mxu0 0.0
        %2302 = vmatmul.mubr.f32.gmra.mrb[0].mxu0 %v712
        %v2303 = vpop.f32.mrb[0].mxu0
        %v2304 = vadd.f32 0.0, %v2303
        %v2305 = vpop.f32.mrb[0].mxu0
        %2306 = vmatprep.mubr.f32.mxu0 0.0
        %2307 = vmatmul.mubr.f32.gmra.mrb[0].mxu0 %v714
        %v2308 = vpop.f32.mrb[0].mxu0
        %v2309 = vadd.f32 0.0, %v2308
        %v2310 = vpop.f32.mrb[0].mxu0
        %2311 = vmatprep.mubr.f32.mxu0 0.0
        %2312 = vmatmul.mubr.f32.gmra.mrb[0].mxu0 %v716
        %v2313 = vpop.f32.mrb[0].mxu0
        %v2314 = vadd.f32 0.0, %v2313
        %v2315 = vpop.f32.mrb[0].mxu0
        %2316 = vmatprep.mubr.f32.mxu0 0.0
        %2317 = vmatmul.mubr.f32.gmra.mrb[0].mxu0 %v718
        %v2318 = vpop.f32.mrb[0].mxu0
        %v2319 = vadd.f32 0.0, %v2318
        %v2320 = vpop.f32.mrb[0].mxu0
        %2321 = vmatprep.mubr.f32.mxu0 0.0
        %2322 = vmatmul.mubr.f32.gmra.mrb[0].mxu0 %v720
        %v2323 = vpop.f32.mrb[0].mxu0
        %v2324 = vadd.f32 0.0, %v2323
        %v2325 = vpop.f32.mrb[0].mxu0
        %2326 = vmatprep.mubr.f32.mxu0 0.0
        %2327 = vmatmul.mubr.f32.gmra.mrb[0].mxu0 %v722
        %v2328 = vpop.f32.mrb[0].mxu0
        %v2329 = vadd.f32 0.0, %v2328
        %v2330 = vpop.f32.mrb[0].mxu0
        %2331 = vmatprep.mubr.f32.mxu0 0.0
        %2332 = vmatmul.mubr.f32.gmra.mrb[0].mxu0 %v724
        %v2333 = vpop.f32.mrb[0].mxu0
        %v2334 = vadd.f32 0.0, %v2333
        %v2335 = vpop.f32.mrb[0].mxu0
        %2336 = vmatprep.mubr.f32.mxu0 0.0
        %2337 = vmatmul.mubr.f32.gmra.mrb[0].mxu0 %v726
        %v2338 = vpop.f32.mrb[0].mxu0
        %v2339 = vadd.f32 0.0, %v2338
        %v2340 = vpop.f32.mrb[0].mxu0
        %2341 = vmatprep.mubr.f32.mxu0 0.0
        %2342 = vmatmul.mubr.f32.gmra.mrb[0].mxu0 %v728
        %v2343 = vpop.f32.mrb[0].mxu0
        %v2344 = vadd.f32 0.0, %v2343
        %v2345 = vpop.f32.mrb[0].mxu0
        %2346 = vmatprep.mubr.f32.mxu0 0.0
        %2347 = vmatmul.mubr.f32.gmra.mrb[0].mxu0 %v730
        %v2348 = vpop.f32.mrb[0].mxu0
        %v2349 = vadd.f32 0.0, %v2348
        %v2350 = vpop.f32.mrb[0].mxu0
        %2351 = vmatprep.mubr.f32.mxu0 0.0
        %2352 = vmatmul.mubr.f32.gmra.mrb[0].mxu0 %v732
        %v2353 = vpop.f32.mrb[0].mxu0
        %v2354 = vadd.f32 0.0, %v2353
        %v2355 = vpop.f32.mrb[0].mxu0
        %2356 = vmatprep.mubr.f32.mxu0 0.0
        %2357 = vmatmul.mubr.f32.gmra.mrb[0].mxu0 %v734
        %v2358 = vpop.f32.mrb[0].mxu0
        %v2359 = vadd.f32 0.0, %v2358
        %v2360 = vpop.f32.mrb[0].mxu0
        %2361 = vmatprep.mubr.f32.mxu0 0.0
        %2362 = vmatmul.mubr.f32.gmra.mrb[0].mxu0 %v736
        %v2363 = vpop.f32.mrb[0].mxu0
        %v2364 = vadd.f32 0.0, %v2363
        %v2365 = vpop.f32.mrb[0].mxu0
        %2366 = vmatprep.mubr.f32.mxu0 0.0
        %2367 = vmatmul.mubr.f32.gmra.mrb[0].mxu0 %v738
        %v2368 = vpop.f32.mrb[0].mxu0
        %v2369 = vadd.f32 0.0, %v2368
        %v2370 = vpop.f32.mrb[0].mxu0
        %2371 = vmatprep.mubr.f32.mxu0 0.0
        %2372 = vmatmul.mubr.f32.gmra.mrb[0].mxu0 %v740
        %v2373 = vpop.f32.mrb[0].mxu0
        %v2374 = vadd.f32 0.0, %v2373
        %v2375 = vpop.f32.mrb[0].mxu0
        %2376 = vmatprep.mubr.f32.mxu0 0.0
        %2377 = vmatmul.mubr.f32.gmra.mrb[0].mxu0 %v742
        %v2378 = vpop.f32.mrb[0].mxu0
        %v2379 = vadd.f32 0.0, %v2378
        %v2380 = vpop.f32.mrb[0].mxu0
        %2381 = vmatprep.mubr.f32.mxu0 0.0
        %2382 = vmatmul.mubr.f32.gmra.mrb[0].mxu0 %v744
        %v2383 = vpop.f32.mrb[0].mxu0
        %v2384 = vadd.f32 0.0, %v2383
        %v2385 = vpop.f32.mrb[0].mxu0
        %2386 = vmatprep.mubr.f32.mxu0 0.0
        %2387 = vmatmul.mubr.f32.gmra.mrb[0].mxu0 %v746
        %v2388 = vpop.f32.mrb[0].mxu0
        %v2389 = vadd.f32 0.0, %v2388
        %v2390 = vpop.f32.mrb[0].mxu0
        %2391 = vmatprep.mubr.f32.mxu0 0.0
        %2392 = vmatmul.mubr.f32.gmra.mrb[0].mxu0 %v748
        %v2393 = vpop.f32.mrb[0].mxu0
        %v2394 = vadd.f32 0.0, %v2393
        %v2395 = vpop.f32.mrb[0].mxu0
        %2396 = vmatprep.mubr.f32.mxu0 0.0
        %2397 = vmatmul.mubr.f32.gmra.mrb[0].mxu0 %v750
        %v2398 = vpop.f32.mrb[0].mxu0
        %v2399 = vadd.f32 0.0, %v2398
        %v2400 = vpop.f32.mrb[0].mxu0
        %2401 = vmatprep.mubr.f32.mxu0 0.0
        %2402 = vmatmul.mubr.f32.gmra.mrb[0].mxu0 %v752
        %v2403 = vpop.f32.mrb[0].mxu0
        %v2404 = vadd.f32 0.0, %v2403
        %v2405 = vpop.f32.mrb[0].mxu0
        %2406 = vmatprep.mubr.f32.mxu0 0.0
        %2407 = vmatmul.mubr.f32.gmra.mrb[0].mxu0 %v754
        %v2408 = vpop.f32.mrb[0].mxu0
        %v2409 = vadd.f32 0.0, %v2408
        %v2410 = vpop.f32.mrb[0].mxu0
        %2411 = vmatprep.mubr.f32.mxu0 0.0
        %2412 = vmatmul.mubr.f32.gmra.mrb[0].mxu0 %v756
        %v2413 = vpop.f32.mrb[0].mxu0
        %v2414 = vadd.f32 0.0, %v2413
        %v2415 = vpop.f32.mrb[0].mxu0
        %2416 = vmatprep.mubr.f32.mxu0 0.0
        %2417 = vmatmul.mubr.f32.gmra.mrb[0].mxu0 %v758
        %v2418 = vpop.f32.mrb[0].mxu0
        %v2419 = vadd.f32 0.0, %v2418
        %v2420 = vpop.f32.mrb[0].mxu0
        %2421 = vmatprep.mubr.f32.mxu0 0.0
        %2422 = vmatmul.mubr.f32.gmra.mrb[0].mxu0 %v1398
        %v2423 = vpop.f32.mrb[0].mxu0
        %v2424 = vadd.f32 0.0, %v2423
        %v2425 = vpop.f32.mrb[0].mxu0
        %2426 = vmatprep.mubr.f32.mxu0 0.0
        %2427 = vmatmul.mubr.f32.gmra.mrb[0].mxu0 %v1401
        %v2428 = vpop.f32.mrb[0].mxu0
        %v2429 = vadd.f32 0.0, %v2428
        %v2430 = vpop.f32.mrb[0].mxu0
        %2431 = vmatprep.mubr.f32.mxu0 0.0
        %2432 = vmatmul.mubr.f32.gmra.mrb[0].mxu0 %v2209
        %v2433 = vpop.f32.mrb[0].mxu0
        %v2434 = vadd.f32 0.0, %v2433
        %v2435 = vpop.f32.mrb[0].mxu0
        %2436 = vmatprep.mubr.f32.mxu0 0.0
        %2437 = vmatmul.mubr.f32.gmra.mrb[0].mxu0 %v2212
        %v2438 = vpop.f32.mrb[0].mxu0
        %v2439 = vadd.f32 0.0, %v2438
        %v2440 = vpop.f32.mrb[0].mxu0
        %2441 = vdwg.mxu0
        %v2442 = vadd.f32 %v2174, %v2284
        %v2443 = vadd.f32 %v2175, %v2289
        %v2444 = vadd.f32 %v2176, %v2294
        %v2445 = vadd.f32 %v2177, %v2299
        %v2446 = vadd.f32 %v2178, %v2304
        %v2447 = vadd.f32 %v2179, %v2309
        %v2448 = vadd.f32 %v2180, %v2314
        %v2449 = vadd.f32 %v2181, %v2319
        %v2450 = vadd.f32 %v2182, %v2324
        %v2451 = vadd.f32 %v2183, %v2329
        %v2452 = vadd.f32 %v2184, %v2334
        %v2453 = vadd.f32 %v2185, %v2339
        %v2454 = vadd.f32 %v2186, %v2344
        %v2455 = vadd.f32 %v2187, %v2349
        %v2456 = vadd.f32 %v2188, %v2354
        %v2457 = vadd.f32 %v2189, %v2359
        %v2458 = vadd.f32 %v2190, %v2364
        %v2459 = vadd.f32 %v2191, %v2369
        %v2460 = vadd.f32 %v2192, %v2374
        %v2461 = vadd.f32 %v2193, %v2379
        %v2462 = vadd.f32 %v2194, %v2384
        %v2463 = vadd.f32 %v2195, %v2389
        %v2464 = vadd.f32 %v2196, %v2394
        %v2465 = vadd.f32 %v2197, %v2399
        %v2466 = vadd.f32 %v2198, %v2404
        %v2467 = vadd.f32 %v2199, %v2409
        %v2468 = vadd.f32 %v2200, %v2414
        %v2469 = vadd.f32 %v2201, %v2419
        %v2470 = vadd.f32 %v2202, %v2424
        %v2471 = vadd.f32 %v2203, %v2429
        %v2472 = vadd.f32 %v2204, %v2434
        %v2473 = vadd.f32 %v2205, %v2439
        %v2475 = vrot.slane %v267, 1
        %v2476 = vrot.slane %v268, 1
        %v2477 = vsel %vm319, %v2475, %v2476
        %v2478 = vrot.slane %v269, 1
        %v2479 = vsel %vm319, %v2476, %v2478
        %s2480 = scalar_lea.vmem [#allocation5], 28
        %v2481 = vld [vmem:[%s2480] sm:$0xf]
        %v2482 = vsel %vm402, %v2477, 0
        %v2484 = vsel %vm402, %v2479, 0
        %v2487 = vsel %vm467, %v2481, 0
        %2489 = vmatprep.subr.mxu0 0.0
        %2490 = vmatpush1.msra.mxu0 %v2487
        %2491 = vmatprep.subr.mxu0 0.0
        %2492 = vmatpush1.msra.mxu0 0.0
        %2493 = vmatprep.subr.mxu0 0.0
        %2494 = vmatpush1.msra.mxu0 0.0
        %2495 = vmatprep.subr.mxu0 0.0
        %2496 = vmatpush1.msra.mxu0 0.0
        %2497 = vmatprep.subr.mxu0 0.0
        %2498 = vmatpush1.msra.mxu0 0.0
        %2499 = vmatprep.subr.mxu0 0.0
        %2500 = vmatpush1.msra.mxu0 0.0
        %2501 = vmatprep.subr.mxu0 0.0
        %2502 = vmatpush1.msra.mxu0 0.0
        %2503 = vmatprep.subr.mxu0 0.0
        %2504 = vmatpush1.msra.mxu0 0.0
        %2505 = vmatprep.subr.mxu0 0.0
        %2506 = vmatpush1.msra.mxu0 0.0
        %2507 = vmatprep.subr.mxu0 0.0
        %2508 = vmatpush1.msra.mxu0 0.0
        %2509 = vmatprep.subr.mxu0 0.0
        %2510 = vmatpush1.msra.mxu0 0.0
        %2511 = vmatprep.subr.mxu0 0.0
        %2512 = vmatpush1.msra.mxu0 0.0
        %2513 = vmatprep.subr.mxu0 0.0
        %2514 = vmatpush1.msra.mxu0 0.0
        %2515 = vmatprep.subr.mxu0 0.0
        %2516 = vmatpush1.msra.mxu0 0.0
        %2517 = vmatprep.subr.mxu0 0.0
        %2518 = vmatpush1.msra.mxu0 0.0
        %2519 = vmatprep.subr.mxu0 0.0
        %2520 = vmatpush1.msra.mxu0 0.0
        %2521 = vmatprep.subr.mxu0 0.0
        %2522 = vmatpush1.msra.mxu0 0.0
        %2523 = vmatprep.subr.mxu0 0.0
        %2524 = vmatpush1.msra.mxu0 0.0
        %2525 = vmatprep.subr.mxu0 0.0
        %2526 = vmatpush1.msra.mxu0 0.0
        %2527 = vmatprep.subr.mxu0 0.0
        %2528 = vmatpush1.msra.mxu0 0.0
        %2529 = vmatprep.subr.mxu0 0.0
        %2530 = vmatpush1.msra.mxu0 0.0
        %2531 = vmatprep.subr.mxu0 0.0
        %2532 = vmatpush1.msra.mxu0 0.0
        %2533 = vmatprep.subr.mxu0 0.0
        %2534 = vmatpush1.msra.mxu0 0.0
        %2535 = vmatprep.subr.mxu0 0.0
        %2536 = vmatpush1.msra.mxu0 0.0
        %2537 = vmatprep.subr.mxu0 0.0
        %2538 = vmatpush1.msra.mxu0 0.0
        %2539 = vmatprep.subr.mxu0 0.0
        %2540 = vmatpush1.msra.mxu0 0.0
        %2541 = vmatprep.subr.mxu0 0.0
        %2542 = vmatpush1.msra.mxu0 0.0
        %2543 = vmatprep.subr.mxu0 0.0
        %2544 = vmatpush1.msra.mxu0 0.0
        %2545 = vmatprep.subr.mxu0 0.0
        %2546 = vmatpush1.msra.mxu0 0.0
        %2547 = vmatprep.subr.mxu0 0.0
        %2548 = vmatpush1.msra.mxu0 0.0
        %2549 = vmatprep.subr.mxu0 0.0
        %2550 = vmatpush1.msra.mxu0 0.0
        %2551 = vmatprep.subr.mxu0 0.0
        %2552 = vmatpush1.msra.mxu0 0.0
        %2553 = vmatprep.mubr.f32.mxu0 0.0
        %2554 = vmatmul.mubr.f32.gmra.mrb[0].mxu0 %v411
        %v2555 = vpop.f32.mrb[0].mxu0
        %v2556 = vadd.f32 0.0, %v2555
        %v2557 = vpop.f32.mrb[0].mxu0
        %2558 = vmatprep.mubr.f32.mxu0 0.0
        %2559 = vmatmul.mubr.f32.gmra.mrb[0].mxu0 %v413
        %v2560 = vpop.f32.mrb[0].mxu0
        %v2561 = vadd.f32 0.0, %v2560
        %v2562 = vpop.f32.mrb[0].mxu0
        %2563 = vmatprep.mubr.f32.mxu0 0.0
        %2564 = vmatmul.mubr.f32.gmra.mrb[0].mxu0 %v415
        %v2565 = vpop.f32.mrb[0].mxu0
        %v2566 = vadd.f32 0.0, %v2565
        %v2567 = vpop.f32.mrb[0].mxu0
        %2568 = vmatprep.mubr.f32.mxu0 0.0
        %2569 = vmatmul.mubr.f32.gmra.mrb[0].mxu0 %v417
        %v2570 = vpop.f32.mrb[0].mxu0
        %v2571 = vadd.f32 0.0, %v2570
        %v2572 = vpop.f32.mrb[0].mxu0
        %2573 = vmatprep.mubr.f32.mxu0 0.0
        %2574 = vmatmul.mubr.f32.gmra.mrb[0].mxu0 %v419
        %v2575 = vpop.f32.mrb[0].mxu0
        %v2576 = vadd.f32 0.0, %v2575
        %v2577 = vpop.f32.mrb[0].mxu0
        %2578 = vmatprep.mubr.f32.mxu0 0.0
        %2579 = vmatmul.mubr.f32.gmra.mrb[0].mxu0 %v421
        %v2580 = vpop.f32.mrb[0].mxu0
        %v2581 = vadd.f32 0.0, %v2580
        %v2582 = vpop.f32.mrb[0].mxu0
        %2583 = vmatprep.mubr.f32.mxu0 0.0
        %2584 = vmatmul.mubr.f32.gmra.mrb[0].mxu0 %v423
        %v2585 = vpop.f32.mrb[0].mxu0
        %v2586 = vadd.f32 0.0, %v2585
        %v2587 = vpop.f32.mrb[0].mxu0
        %2588 = vmatprep.mubr.f32.mxu0 0.0
        %2589 = vmatmul.mubr.f32.gmra.mrb[0].mxu0 %v425
        %v2590 = vpop.f32.mrb[0].mxu0
        %v2591 = vadd.f32 0.0, %v2590
        %v2592 = vpop.f32.mrb[0].mxu0
        %2593 = vmatprep.mubr.f32.mxu0 0.0
        %2594 = vmatmul.mubr.f32.gmra.mrb[0].mxu0 %v427
        %v2595 = vpop.f32.mrb[0].mxu0
        %v2596 = vadd.f32 0.0, %v2595
        %v2597 = vpop.f32.mrb[0].mxu0
        %2598 = vmatprep.mubr.f32.mxu0 0.0
        %2599 = vmatmul.mubr.f32.gmra.mrb[0].mxu0 %v429
        %v2600 = vpop.f32.mrb[0].mxu0
        %v2601 = vadd.f32 0.0, %v2600
        %v2602 = vpop.f32.mrb[0].mxu0
        %2603 = vmatprep.mubr.f32.mxu0 0.0
        %2604 = vmatmul.mubr.f32.gmra.mrb[0].mxu0 %v431
        %v2605 = vpop.f32.mrb[0].mxu0
        %v2606 = vadd.f32 0.0, %v2605
        %v2607 = vpop.f32.mrb[0].mxu0
        %2608 = vmatprep.mubr.f32.mxu0 0.0
        %2609 = vmatmul.mubr.f32.gmra.mrb[0].mxu0 %v433
        %v2610 = vpop.f32.mrb[0].mxu0
        %v2611 = vadd.f32 0.0, %v2610
        %v2612 = vpop.f32.mrb[0].mxu0
        %2613 = vmatprep.mubr.f32.mxu0 0.0
        %2614 = vmatmul.mubr.f32.gmra.mrb[0].mxu0 %v435
        %v2615 = vpop.f32.mrb[0].mxu0
        %v2616 = vadd.f32 0.0, %v2615
        %v2617 = vpop.f32.mrb[0].mxu0
        %2618 = vmatprep.mubr.f32.mxu0 0.0
        %2619 = vmatmul.mubr.f32.gmra.mrb[0].mxu0 %v437
        %v2620 = vpop.f32.mrb[0].mxu0
        %v2621 = vadd.f32 0.0, %v2620
        %v2622 = vpop.f32.mrb[0].mxu0
        %2623 = vmatprep.mubr.f32.mxu0 0.0
        %2624 = vmatmul.mubr.f32.gmra.mrb[0].mxu0 %v439
        %v2625 = vpop.f32.mrb[0].mxu0
        %v2626 = vadd.f32 0.0, %v2625
        %v2627 = vpop.f32.mrb[0].mxu0
        %2628 = vmatprep.mubr.f32.mxu0 0.0
        %2629 = vmatmul.mubr.f32.gmra.mrb[0].mxu0 %v441
        %v2630 = vpop.f32.mrb[0].mxu0
        %v2631 = vadd.f32 0.0, %v2630
        %v2632 = vpop.f32.mrb[0].mxu0
        %2633 = vmatprep.mubr.f32.mxu0 0.0
        %2634 = vmatmul.mubr.f32.gmra.mrb[0].mxu0 %v443
        %v2635 = vpop.f32.mrb[0].mxu0
        %v2636 = vadd.f32 0.0, %v2635
        %v2637 = vpop.f32.mrb[0].mxu0
        %2638 = vmatprep.mubr.f32.mxu0 0.0
        %2639 = vmatmul.mubr.f32.gmra.mrb[0].mxu0 %v445
        %v2640 = vpop.f32.mrb[0].mxu0
        %v2641 = vadd.f32 0.0, %v2640
        %v2642 = vpop.f32.mrb[0].mxu0
        %2643 = vmatprep.mubr.f32.mxu0 0.0
        %2644 = vmatmul.mubr.f32.gmra.mrb[0].mxu0 %v447
        %v2645 = vpop.f32.mrb[0].mxu0
        %v2646 = vadd.f32 0.0, %v2645
        %v2647 = vpop.f32.mrb[0].mxu0
        %2648 = vmatprep.mubr.f32.mxu0 0.0
        %2649 = vmatmul.mubr.f32.gmra.mrb[0].mxu0 %v449
        %v2650 = vpop.f32.mrb[0].mxu0
        %v2651 = vadd.f32 0.0, %v2650
        %v2652 = vpop.f32.mrb[0].mxu0
        %2653 = vmatprep.mubr.f32.mxu0 0.0
        %2654 = vmatmul.mubr.f32.gmra.mrb[0].mxu0 %v451
        %v2655 = vpop.f32.mrb[0].mxu0
        %v2656 = vadd.f32 0.0, %v2655
        %v2657 = vpop.f32.mrb[0].mxu0
        %2658 = vmatprep.mubr.f32.mxu0 0.0
        %2659 = vmatmul.mubr.f32.gmra.mrb[0].mxu0 %v453
        %v2660 = vpop.f32.mrb[0].mxu0
        %v2661 = vadd.f32 0.0, %v2660
        %v2662 = vpop.f32.mrb[0].mxu0
        %2663 = vmatprep.mubr.f32.mxu0 0.0
        %2664 = vmatmul.mubr.f32.gmra.mrb[0].mxu0 %v455
        %v2665 = vpop.f32.mrb[0].mxu0
        %v2666 = vadd.f32 0.0, %v2665
        %v2667 = vpop.f32.mrb[0].mxu0
        %2668 = vmatprep.mubr.f32.mxu0 0.0
        %2669 = vmatmul.mubr.f32.gmra.mrb[0].mxu0 %v457
        %v2670 = vpop.f32.mrb[0].mxu0
        %v2671 = vadd.f32 0.0, %v2670
        %v2672 = vpop.f32.mrb[0].mxu0
        %2673 = vmatprep.mubr.f32.mxu0 0.0
        %2674 = vmatmul.mubr.f32.gmra.mrb[0].mxu0 %v459
        %v2675 = vpop.f32.mrb[0].mxu0
        %v2676 = vadd.f32 0.0, %v2675
        %v2677 = vpop.f32.mrb[0].mxu0
        %2678 = vmatprep.mubr.f32.mxu0 0.0
        %2679 = vmatmul.mubr.f32.gmra.mrb[0].mxu0 %v461
        %v2680 = vpop.f32.mrb[0].mxu0
        %v2681 = vadd.f32 0.0, %v2680
        %v2682 = vpop.f32.mrb[0].mxu0
        %2683 = vmatprep.mubr.f32.mxu0 0.0
        %2684 = vmatmul.mubr.f32.gmra.mrb[0].mxu0 %v463
        %v2685 = vpop.f32.mrb[0].mxu0
        %v2686 = vadd.f32 0.0, %v2685
        %v2687 = vpop.f32.mrb[0].mxu0
        %2688 = vmatprep.mubr.f32.mxu0 0.0
        %2689 = vmatmul.mubr.f32.gmra.mrb[0].mxu0 %v465
        %v2690 = vpop.f32.mrb[0].mxu0
        %v2691 = vadd.f32 0.0, %v2690
        %v2692 = vpop.f32.mrb[0].mxu0
        %2693 = vmatprep.mubr.f32.mxu0 0.0
        %2694 = vmatmul.mubr.f32.gmra.mrb[0].mxu0 %v1671
        %v2695 = vpop.f32.mrb[0].mxu0
        %v2696 = vadd.f32 0.0, %v2695
        %v2697 = vpop.f32.mrb[0].mxu0
        %2698 = vmatprep.mubr.f32.mxu0 0.0
        %2699 = vmatmul.mubr.f32.gmra.mrb[0].mxu0 %v1673
        %v2700 = vpop.f32.mrb[0].mxu0
        %v2701 = vadd.f32 0.0, %v2700
        %v2702 = vpop.f32.mrb[0].mxu0
        %2703 = vmatprep.mubr.f32.mxu0 0.0
        %2704 = vmatmul.mubr.f32.gmra.mrb[0].mxu0 %v2482
        %v2705 = vpop.f32.mrb[0].mxu0
        %v2706 = vadd.f32 0.0, %v2705
        %v2707 = vpop.f32.mrb[0].mxu0
        %2708 = vmatprep.mubr.f32.mxu0 0.0
        %2709 = vmatmul.mubr.f32.gmra.mrb[0].mxu0 %v2484
        %v2710 = vpop.f32.mrb[0].mxu0
        %v2711 = vadd.f32 0.0, %v2710
        %v2712 = vpop.f32.mrb[0].mxu0
        %2713 = vdwg.mxu0
        %v2714 = vadd.f32 %v2442, %v2556
        %v2715 = vadd.f32 %v2443, %v2561
        %v2716 = vadd.f32 %v2444, %v2566
        %v2717 = vadd.f32 %v2445, %v2571
        %v2718 = vadd.f32 %v2446, %v2576
        %v2719 = vadd.f32 %v2447, %v2581
        %v2720 = vadd.f32 %v2448, %v2586
        %v2721 = vadd.f32 %v2449, %v2591
        %v2722 = vadd.f32 %v2450, %v2596
        %v2723 = vadd.f32 %v2451, %v2601
        %v2724 = vadd.f32 %v2452, %v2606
        %v2725 = vadd.f32 %v2453, %v2611
        %v2726 = vadd.f32 %v2454, %v2616
        %v2727 = vadd.f32 %v2455, %v2621
        %v2728 = vadd.f32 %v2456, %v2626
        %v2729 = vadd.f32 %v2457, %v2631
        %v2730 = vadd.f32 %v2458, %v2636
        %v2731 = vadd.f32 %v2459, %v2641
        %v2732 = vadd.f32 %v2460, %v2646
        %v2733 = vadd.f32 %v2461, %v2651
        %v2734 = vadd.f32 %v2462, %v2656
        %v2735 = vadd.f32 %v2463, %v2661
        %v2736 = vadd.f32 %v2464, %v2666
        %v2737 = vadd.f32 %v2465, %v2671
        %v2738 = vadd.f32 %v2466, %v2676
        %v2739 = vadd.f32 %v2467, %v2681
        %v2740 = vadd.f32 %v2468, %v2686
        %v2741 = vadd.f32 %v2469, %v2691
        %v2742 = vadd.f32 %v2470, %v2696
        %v2743 = vadd.f32 %v2471, %v2701
        %v2744 = vadd.f32 %v2472, %v2706
        %v2745 = vadd.f32 %v2473, %v2711
        %v2746 = vrot.slane %v267, 2
        %v2747 = vrot.slane %v268, 2
        %v2748 = vsel %vm988, %v2746, %v2747
        %v2749 = vrot.slane %v269, 2
        %v2750 = vsel %vm988, %v2747, %v2749
        %s2751 = scalar_lea.vmem [#allocation5], 32
        %v2752 = vld [vmem:[%s2751] sm:$0xf]
        %v2753 = vsel %vm402, %v2748, 0
        %v2755 = vsel %vm402, %v2750, 0
        %v2758 = vsel %vm467, %v2752, 0
        %2760 = vmatprep.subr.mxu0 0.0
        %2761 = vmatpush1.msra.mxu0 %v2758
        %2762 = vmatprep.subr.mxu0 0.0
        %2763 = vmatpush1.msra.mxu0 0.0
        %2764 = vmatprep.subr.mxu0 0.0
        %2765 = vmatpush1.msra.mxu0 0.0
        %2766 = vmatprep.subr.mxu0 0.0
        %2767 = vmatpush1.msra.mxu0 0.0
        %2768 = vmatprep.subr.mxu0 0.0
        %2769 = vmatpush1.msra.mxu0 0.0
        %2770 = vmatprep.subr.mxu0 0.0
        %2771 = vmatpush1.msra.mxu0 0.0
        %2772 = vmatprep.subr.mxu0 0.0
        %2773 = vmatpush1.msra.mxu0 0.0
        %2774 = vmatprep.subr.mxu0 0.0
        %2775 = vmatpush1.msra.mxu0 0.0
        %2776 = vmatprep.subr.mxu0 0.0
        %2777 = vmatpush1.msra.mxu0 0.0
        %2778 = vmatprep.subr.mxu0 0.0
        %2779 = vmatpush1.msra.mxu0 0.0
        %2780 = vmatprep.subr.mxu0 0.0
        %2781 = vmatpush1.msra.mxu0 0.0
        %2782 = vmatprep.subr.mxu0 0.0
        %2783 = vmatpush1.msra.mxu0 0.0
        %2784 = vmatprep.subr.mxu0 0.0
        %2785 = vmatpush1.msra.mxu0 0.0
        %2786 = vmatprep.subr.mxu0 0.0
        %2787 = vmatpush1.msra.mxu0 0.0
        %2788 = vmatprep.subr.mxu0 0.0
        %2789 = vmatpush1.msra.mxu0 0.0
        %2790 = vmatprep.subr.mxu0 0.0
        %2791 = vmatpush1.msra.mxu0 0.0
        %2792 = vmatprep.subr.mxu0 0.0
        %2793 = vmatpush1.msra.mxu0 0.0
        %2794 = vmatprep.subr.mxu0 0.0
        %2795 = vmatpush1.msra.mxu0 0.0
        %2796 = vmatprep.subr.mxu0 0.0
        %2797 = vmatpush1.msra.mxu0 0.0
        %2798 = vmatprep.subr.mxu0 0.0
        %2799 = vmatpush1.msra.mxu0 0.0
        %2800 = vmatprep.subr.mxu0 0.0
        %2801 = vmatpush1.msra.mxu0 0.0
        %2802 = vmatprep.subr.mxu0 0.0
        %2803 = vmatpush1.msra.mxu0 0.0
        %2804 = vmatprep.subr.mxu0 0.0
        %2805 = vmatpush1.msra.mxu0 0.0
        %2806 = vmatprep.subr.mxu0 0.0
        %2807 = vmatpush1.msra.mxu0 0.0
        %2808 = vmatprep.subr.mxu0 0.0
        %2809 = vmatpush1.msra.mxu0 0.0
        %2810 = vmatprep.subr.mxu0 0.0
        %2811 = vmatpush1.msra.mxu0 0.0
        %2812 = vmatprep.subr.mxu0 0.0
        %2813 = vmatpush1.msra.mxu0 0.0
        %2814 = vmatprep.subr.mxu0 0.0
        %2815 = vmatpush1.msra.mxu0 0.0
        %2816 = vmatprep.subr.mxu0 0.0
        %2817 = vmatpush1.msra.mxu0 0.0
        %2818 = vmatprep.subr.mxu0 0.0
        %2819 = vmatpush1.msra.mxu0 0.0
        %2820 = vmatprep.subr.mxu0 0.0
        %2821 = vmatpush1.msra.mxu0 0.0
        %2822 = vmatprep.subr.mxu0 0.0
        %2823 = vmatpush1.msra.mxu0 0.0
        %2824 = vmatprep.mubr.f32.mxu0 0.0
        %2825 = vmatmul.mubr.f32.gmra.mrb[0].mxu0 %v1079
        %v2826 = vpop.f32.mrb[0].mxu0
        %v2827 = vadd.f32 0.0, %v2826
        %v2828 = vpop.f32.mrb[0].mxu0
        %2829 = vmatprep.mubr.f32.mxu0 0.0
        %2830 = vmatmul.mubr.f32.gmra.mrb[0].mxu0 %v1081
        %v2831 = vpop.f32.mrb[0].mxu0
        %v2832 = vadd.f32 0.0, %v2831
        %v2833 = vpop.f32.mrb[0].mxu0
        %2834 = vmatprep.mubr.f32.mxu0 0.0
        %2835 = vmatmul.mubr.f32.gmra.mrb[0].mxu0 %v1083
        %v2836 = vpop.f32.mrb[0].mxu0
        %v2837 = vadd.f32 0.0, %v2836
        %v2838 = vpop.f32.mrb[0].mxu0
        %2839 = vmatprep.mubr.f32.mxu0 0.0
        %2840 = vmatmul.mubr.f32.gmra.mrb[0].mxu0 %v1085
        %v2841 = vpop.f32.mrb[0].mxu0
        %v2842 = vadd.f32 0.0, %v2841
        %v2843 = vpop.f32.mrb[0].mxu0
        %2844 = vmatprep.mubr.f32.mxu0 0.0
        %2845 = vmatmul.mubr.f32.gmra.mrb[0].mxu0 %v1087
        %v2846 = vpop.f32.mrb[0].mxu0
        %v2847 = vadd.f32 0.0, %v2846
        %v2848 = vpop.f32.mrb[0].mxu0
        %2849 = vmatprep.mubr.f32.mxu0 0.0
        %2850 = vmatmul.mubr.f32.gmra.mrb[0].mxu0 %v1089
        %v2851 = vpop.f32.mrb[0].mxu0
        %v2852 = vadd.f32 0.0, %v2851
        %v2853 = vpop.f32.mrb[0].mxu0
        %2854 = vmatprep.mubr.f32.mxu0 0.0
        %2855 = vmatmul.mubr.f32.gmra.mrb[0].mxu0 %v1091
        %v2856 = vpop.f32.mrb[0].mxu0
        %v2857 = vadd.f32 0.0, %v2856
        %v2858 = vpop.f32.mrb[0].mxu0
        %2859 = vmatprep.mubr.f32.mxu0 0.0
        %2860 = vmatmul.mubr.f32.gmra.mrb[0].mxu0 %v1093
        %v2861 = vpop.f32.mrb[0].mxu0
        %v2862 = vadd.f32 0.0, %v2861
        %v2863 = vpop.f32.mrb[0].mxu0
        %2864 = vmatprep.mubr.f32.mxu0 0.0
        %2865 = vmatmul.mubr.f32.gmra.mrb[0].mxu0 %v1095
        %v2866 = vpop.f32.mrb[0].mxu0
        %v2867 = vadd.f32 0.0, %v2866
        %v2868 = vpop.f32.mrb[0].mxu0
        %2869 = vmatprep.mubr.f32.mxu0 0.0
        %2870 = vmatmul.mubr.f32.gmra.mrb[0].mxu0 %v1097
        %v2871 = vpop.f32.mrb[0].mxu0
        %v2872 = vadd.f32 0.0, %v2871
        %v2873 = vpop.f32.mrb[0].mxu0
        %2874 = vmatprep.mubr.f32.mxu0 0.0
        %2875 = vmatmul.mubr.f32.gmra.mrb[0].mxu0 %v1099
        %v2876 = vpop.f32.mrb[0].mxu0
        %v2877 = vadd.f32 0.0, %v2876
        %v2878 = vpop.f32.mrb[0].mxu0
        %2879 = vmatprep.mubr.f32.mxu0 0.0
        %2880 = vmatmul.mubr.f32.gmra.mrb[0].mxu0 %v1101
        %v2881 = vpop.f32.mrb[0].mxu0
        %v2882 = vadd.f32 0.0, %v2881
        %v2883 = vpop.f32.mrb[0].mxu0
        %2884 = vmatprep.mubr.f32.mxu0 0.0
        %2885 = vmatmul.mubr.f32.gmra.mrb[0].mxu0 %v1103
        %v2886 = vpop.f32.mrb[0].mxu0
        %v2887 = vadd.f32 0.0, %v2886
        %v2888 = vpop.f32.mrb[0].mxu0
        %2889 = vmatprep.mubr.f32.mxu0 0.0
        %2890 = vmatmul.mubr.f32.gmra.mrb[0].mxu0 %v1105
        %v2891 = vpop.f32.mrb[0].mxu0
        %v2892 = vadd.f32 0.0, %v2891
        %v2893 = vpop.f32.mrb[0].mxu0
        %2894 = vmatprep.mubr.f32.mxu0 0.0
        %2895 = vmatmul.mubr.f32.gmra.mrb[0].mxu0 %v1107
        %v2896 = vpop.f32.mrb[0].mxu0
        %v2897 = vadd.f32 0.0, %v2896
        %v2898 = vpop.f32.mrb[0].mxu0
        %2899 = vmatprep.mubr.f32.mxu0 0.0
        %2900 = vmatmul.mubr.f32.gmra.mrb[0].mxu0 %v1109
        %v2901 = vpop.f32.mrb[0].mxu0
        %v2902 = vadd.f32 0.0, %v2901
        %v2903 = vpop.f32.mrb[0].mxu0
        %2904 = vmatprep.mubr.f32.mxu0 0.0
        %2905 = vmatmul.mubr.f32.gmra.mrb[0].mxu0 %v1111
        %v2906 = vpop.f32.mrb[0].mxu0
        %v2907 = vadd.f32 0.0, %v2906
        %v2908 = vpop.f32.mrb[0].mxu0
        %2909 = vmatprep.mubr.f32.mxu0 0.0
        %2910 = vmatmul.mubr.f32.gmra.mrb[0].mxu0 %v1113
        %v2911 = vpop.f32.mrb[0].mxu0
        %v2912 = vadd.f32 0.0, %v2911
        %v2913 = vpop.f32.mrb[0].mxu0
        %2914 = vmatprep.mubr.f32.mxu0 0.0
        %2915 = vmatmul.mubr.f32.gmra.mrb[0].mxu0 %v1115
        %v2916 = vpop.f32.mrb[0].mxu0
        %v2917 = vadd.f32 0.0, %v2916
        %v2918 = vpop.f32.mrb[0].mxu0
        %2919 = vmatprep.mubr.f32.mxu0 0.0
        %2920 = vmatmul.mubr.f32.gmra.mrb[0].mxu0 %v1117
        %v2921 = vpop.f32.mrb[0].mxu0
        %v2922 = vadd.f32 0.0, %v2921
        %v2923 = vpop.f32.mrb[0].mxu0
        %2924 = vmatprep.mubr.f32.mxu0 0.0
        %2925 = vmatmul.mubr.f32.gmra.mrb[0].mxu0 %v1119
        %v2926 = vpop.f32.mrb[0].mxu0
        %v2927 = vadd.f32 0.0, %v2926
        %v2928 = vpop.f32.mrb[0].mxu0
        %2929 = vmatprep.mubr.f32.mxu0 0.0
        %2930 = vmatmul.mubr.f32.gmra.mrb[0].mxu0 %v1121
        %v2931 = vpop.f32.mrb[0].mxu0
        %v2932 = vadd.f32 0.0, %v2931
        %v2933 = vpop.f32.mrb[0].mxu0
        %2934 = vmatprep.mubr.f32.mxu0 0.0
        %2935 = vmatmul.mubr.f32.gmra.mrb[0].mxu0 %v1123
        %v2936 = vpop.f32.mrb[0].mxu0
        %v2937 = vadd.f32 0.0, %v2936
        %v2938 = vpop.f32.mrb[0].mxu0
        %2939 = vmatprep.mubr.f32.mxu0 0.0
        %2940 = vmatmul.mubr.f32.gmra.mrb[0].mxu0 %v1125
        %v2941 = vpop.f32.mrb[0].mxu0
        %v2942 = vadd.f32 0.0, %v2941
        %v2943 = vpop.f32.mrb[0].mxu0
        %2944 = vmatprep.mubr.f32.mxu0 0.0
        %2945 = vmatmul.mubr.f32.gmra.mrb[0].mxu0 %v1127
        %v2946 = vpop.f32.mrb[0].mxu0
        %v2947 = vadd.f32 0.0, %v2946
        %v2948 = vpop.f32.mrb[0].mxu0
        %2949 = vmatprep.mubr.f32.mxu0 0.0
        %2950 = vmatmul.mubr.f32.gmra.mrb[0].mxu0 %v1129
        %v2951 = vpop.f32.mrb[0].mxu0
        %v2952 = vadd.f32 0.0, %v2951
        %v2953 = vpop.f32.mrb[0].mxu0
        %2954 = vmatprep.mubr.f32.mxu0 0.0
        %2955 = vmatmul.mubr.f32.gmra.mrb[0].mxu0 %v1131
        %v2956 = vpop.f32.mrb[0].mxu0
        %v2957 = vadd.f32 0.0, %v2956
        %v2958 = vpop.f32.mrb[0].mxu0
        %2959 = vmatprep.mubr.f32.mxu0 0.0
        %2960 = vmatmul.mubr.f32.gmra.mrb[0].mxu0 %v1133
        %v2961 = vpop.f32.mrb[0].mxu0
        %v2962 = vadd.f32 0.0, %v2961
        %v2963 = vpop.f32.mrb[0].mxu0
        %2964 = vmatprep.mubr.f32.mxu0 0.0
        %2965 = vmatmul.mubr.f32.gmra.mrb[0].mxu0 %v1942
        %v2966 = vpop.f32.mrb[0].mxu0
        %v2967 = vadd.f32 0.0, %v2966
        %v2968 = vpop.f32.mrb[0].mxu0
        %2969 = vmatprep.mubr.f32.mxu0 0.0
        %2970 = vmatmul.mubr.f32.gmra.mrb[0].mxu0 %v1944
        %v2971 = vpop.f32.mrb[0].mxu0
        %v2972 = vadd.f32 0.0, %v2971
        %v2973 = vpop.f32.mrb[0].mxu0
        %2974 = vmatprep.mubr.f32.mxu0 0.0
        %2975 = vmatmul.mubr.f32.gmra.mrb[0].mxu0 %v2753
        %v2976 = vpop.f32.mrb[0].mxu0
        %v2977 = vadd.f32 0.0, %v2976
        %v2978 = vpop.f32.mrb[0].mxu0
        %2979 = vmatprep.mubr.f32.mxu0 0.0
        %2980 = vmatmul.mubr.f32.gmra.mrb[0].mxu0 %v2755
        %v2981 = vpop.f32.mrb[0].mxu0
        %v2982 = vadd.f32 0.0, %v2981
        %v2983 = vpop.f32.mrb[0].mxu0
        %2984 = vdwg.mxu0
        %v2985 = vadd.f32 %v2714, %v2827
        %v2986 = vadd.f32 %v2715, %v2832
        %v2987 = vadd.f32 %v2716, %v2837
        %v2988 = vadd.f32 %v2717, %v2842
        %v2989 = vadd.f32 %v2718, %v2847
        %v2990 = vadd.f32 %v2719, %v2852
        %v2991 = vadd.f32 %v2720, %v2857
        %v2992 = vadd.f32 %v2721, %v2862
        %v2993 = vadd.f32 %v2722, %v2867
        %v2994 = vadd.f32 %v2723, %v2872
        %v2995 = vadd.f32 %v2724, %v2877
        %v2996 = vadd.f32 %v2725, %v2882
        %v2997 = vadd.f32 %v2726, %v2887
        %v2998 = vadd.f32 %v2727, %v2892
        %v2999 = vadd.f32 %v2728, %v2897
        %v3000 = vadd.f32 %v2729, %v2902
        %v3001 = vadd.f32 %v2730, %v2907
        %v3002 = vadd.f32 %v2731, %v2912
        %v3003 = vadd.f32 %v2732, %v2917
        %v3004 = vadd.f32 %v2733, %v2922
        %v3005 = vadd.f32 %v2734, %v2927
        %v3006 = vadd.f32 %v2735, %v2932
        %v3007 = vadd.f32 %v2736, %v2937
        %v3008 = vadd.f32 %v2737, %v2942
        %v3009 = vadd.f32 %v2738, %v2947
        %v3010 = vadd.f32 %v2739, %v2952
        %v3011 = vadd.f32 %v2740, %v2957
        %v3012 = vadd.f32 %v2741, %v2962
        %v3013 = vadd.f32 %v2742, %v2967
        %v3014 = vadd.f32 %v2743, %v2972
        %v3015 = vadd.f32 %v2744, %v2977
        %v3016 = vadd.f32 %v2745, %v2982
        %v3017 = vld [vmem:[#allocation7] sm:$0x1]
        %v3019 = vlaneseq
        %v3020 = vshrl.u32 %v3019, 7
        %v3021 = vsub.s32 0, %v3020
        %v3022 = vrot.slane %v3017, %v3021
        %v3024 = vadd.f32 %v2985, %v3022
        %v3025 = vadd.f32 %v2986, %v3022
        %v3026 = vadd.f32 %v2987, %v3022
        %v3027 = vadd.f32 %v2988, %v3022
        %v3028 = vadd.f32 %v2989, %v3022
        %v3029 = vadd.f32 %v2990, %v3022
        %v3030 = vadd.f32 %v2991, %v3022
        %v3031 = vadd.f32 %v2992, %v3022
        %v3032 = vadd.f32 %v2993, %v3022
        %v3033 = vadd.f32 %v2994, %v3022
        %v3034 = vadd.f32 %v2995, %v3022
        %v3035 = vadd.f32 %v2996, %v3022
        %v3036 = vadd.f32 %v2997, %v3022
        %v3037 = vadd.f32 %v2998, %v3022
        %v3038 = vadd.f32 %v2999, %v3022
        %v3039 = vadd.f32 %v3000, %v3022
        %v3040 = vadd.f32 %v3001, %v3022
        %v3041 = vadd.f32 %v3002, %v3022
        %v3042 = vadd.f32 %v3003, %v3022
        %v3043 = vadd.f32 %v3004, %v3022
        %v3044 = vadd.f32 %v3005, %v3022
        %v3045 = vadd.f32 %v3006, %v3022
        %v3046 = vadd.f32 %v3007, %v3022
        %v3047 = vadd.f32 %v3008, %v3022
        %v3048 = vadd.f32 %v3009, %v3022
        %v3049 = vadd.f32 %v3010, %v3022
        %v3050 = vadd.f32 %v3011, %v3022
        %v3051 = vadd.f32 %v3012, %v3022
        %v3052 = vadd.f32 %v3013, %v3022
        %v3053 = vadd.f32 %v3014, %v3022
        %v3054 = vadd.f32 %v3015, %v3022
        %v3055 = vadd.f32 %v3016, %v3022
        %3056 = vst [vmem:[%s215] sm:$0xff] %v3024
        %3057 = vst [vmem:[%s215 + $0x8] sm:$0xff] %v3025
        %3058 = vst [vmem:[%s215 + $0x10] sm:$0xff] %v3026
        %3059 = vst [vmem:[%s215 + $0x18] sm:$0xff] %v3027
        %3060 = vst [vmem:[%s215 + $0x20] sm:$0xff] %v3028
        %3061 = vst [vmem:[%s215 + $0x28] sm:$0xff] %v3029
        %3062 = vst [vmem:[%s215 + $0x30] sm:$0xff] %v3030
        %3063 = vst [vmem:[%s215 + $0x38] sm:$0xff] %v3031
        %3064 = vst [vmem:[%s215 + $0x40] sm:$0xff] %v3032
        %3065 = vst [vmem:[%s215 + $0x48] sm:$0xff] %v3033
        %3066 = vst [vmem:[%s215 + $0x50] sm:$0xff] %v3034
        %3067 = vst [vmem:[%s215 + $0x58] sm:$0xff] %v3035
        %3068 = vst [vmem:[%s215 + $0x60] sm:$0xff] %v3036
        %3069 = vst [vmem:[%s215 + $0x68] sm:$0xff] %v3037
        %3070 = vst [vmem:[%s215 + $0x70] sm:$0xff] %v3038
        %3071 = vst [vmem:[%s215 + $0x78] sm:$0xff] %v3039
        %3072 = vst [vmem:[%s215 + $0x80] sm:$0xff] %v3040
        %3073 = vst [vmem:[%s215 + $0x88] sm:$0xff] %v3041
        %3074 = vst [vmem:[%s215 + $0x90] sm:$0xff] %v3042
        %3075 = vst [vmem:[%s215 + $0x98] sm:$0xff] %v3043
        %3076 = vst [vmem:[%s215 + $0xa0] sm:$0xff] %v3044
        %3077 = vst [vmem:[%s215 + $0xa8] sm:$0xff] %v3045
        %3078 = vst [vmem:[%s215 + $0xb0] sm:$0xff] %v3046
        %3079 = vst [vmem:[%s215 + $0xb8] sm:$0xff] %v3047
        %3080 = vst [vmem:[%s215 + $0xc0] sm:$0xff] %v3048
        %3081 = vst [vmem:[%s215 + $0xc8] sm:$0xff] %v3049
        %3082 = vst [vmem:[%s215 + $0xd0] sm:$0xff] %v3050
        %3083 = vst [vmem:[%s215 + $0xd8] sm:$0xff] %v3051
        %3084 = vst [vmem:[%s215 + $0xe0] sm:$0xff] %v3052
        %3085 = vst [vmem:[%s215 + $0xe8] sm:$0xff] %v3053
        %3086 = vst [vmem:[%s215 + $0xf0] sm:$0xff] %v3054
        %3087 = vst [vmem:[%s215 + $0xf8] sm:$0xff] %v3055
        %s3088 = sand.u32 %s97, 1
        %s3089 = scalar_lea.sflag [#allocation4], %s3088
        %s3090 = sand.u32 %s97, 1
        %s3091 = smul.addr %s3090, 256
        %s3092 = scalar_lea.vmem [#allocation8], %s3091
        // Predicated region
        $region45: #{asyconv_forward_nchw.1} parent=31 // pred_check
          %p3093 = pneg %p107
        $region46: #{asyconv_forward_nchw.1} parent=31 // pred_check_branch
          %3095 = sbr.rel (%p3093) target = $region48
        $region47: #{asyconv_forward_nchw.1} parent=31 // pred_region
          %s3097 = ssub.s32 4096, 4096
          %3098 = vsyncadd %s3089, %s3097
          %s3099 = smul.addr %s21, 32
          %s3100 = smul.addr %s3099, 128
          %s3101 = scalar_lea.hbm %s3, %s3100
          %s3102 = sshll.u32 %s3092, 4
          %s3103 = int_to_ptr.vmem [resolvable:$true] %s3102
          %3108 = dma.vmem_to_hbm [thread:$0]  %s3103, 4096, %s3101, %s3089, 128, 128, 8
        $region48: #{asyconv_forward_nchw.1} parent=31 // pred_fallthru
          _
      $region32: #{asyconv_forward_nchw.1} parent=5 // pred_fallthru
        _
      %p3109 = scmp.le.s32.totalorder 2, %s16
      // Predicated region
      $region49: #{asyconv_forward_nchw.1} parent=5 // pred_check
        %p3110 = pneg %p3109
      $region50: #{asyconv_forward_nchw.1} parent=5 // pred_check_branch
        %3112 = sbr.rel (%p3110) target = $region52
      $region51: #{asyconv_forward_nchw.1} parent=5 // pred_region
        %s3113 = ssub.s32 %s16, 2
        // Predicated region
        $region53: #{asyconv_forward_nchw.1} parent=51 // pred_check
          %p3114 = pneg %p113
        $region54: #{asyconv_forward_nchw.1} parent=51 // pred_check_branch
          %3116 = sbr.rel (%p3114) target = $region56
        $region55: #{asyconv_forward_nchw.1} parent=51 // pred_region
          %s3117 = sand.u32 %s98, 1
          %s3118 = scalar_lea.sflag [#allocation4], %s3117
          %s3119 = sand.u32 %s98, 1
          %s3120 = smul.addr %s3119, 256
          %s3121 = scalar_lea.vmem [#allocation8], %s3120
          %3122 = dma.done %s3118, 4096
        $region56: #{asyconv_forward_nchw.1} parent=51 // pred_fallthru
          _
      $region52: #{asyconv_forward_nchw.1} parent=5 // pred_fallthru
        _
    $region6: #{asyconv_forward_nchw.1} parent=1 // loop_footer
      %s20 = sadd.s32 1, %s16
    $region7: #{asyconv_forward_nchw.1} parent=1 // loop_footer_branch
      %15 = sbr.rel target = $region3
    $region8: #{asyconv_forward_nchw.1} parent=1 // loop_exit
      _
    %3123 = vsyncpa [#allocation3], 1
    %s3124 = scalar_lea.sflag [#allocation3], 1
    %3125 = vsyncpa %s3124, 1
    %3126 = vsyncpa [#allocation6], 1
    %3127 = vsyncpa [#allocation4], 1
    %s3128 = scalar_lea.sflag [#allocation4], 1
    %3129 = vsyncpa %s3128, 1

</llo_original>
